<compile_context>
chip_gen: v6e
topology: v6e:2x2x1
jax: 0.10.0
libtpu: 0.0.40
codegen_flags: <defaults>
</compile_context>

<pallas_src>
import functools

import jax
import jax.numpy as jnp
from jax import lax
from jax.experimental import pallas as pl
from jax.experimental.pallas import tpu as pltpu


# ---------------------------------------------------------------------------
# Fused kernel: conv1(1x1)+ReLU -> conv2(3x3,p=1)+ReLU -> global avg pool -> fc
#
#   xp: (bt, H+2, W+2, Cin+1)  zero-padded input canvas; last channel is the
#                              interior indicator (1 inside, 0 on the halo)
#   w1: (Cin+1, C1)            1x1 conv weights with the bias as the last row
#   w2: (9*C1, C2)             3x3 conv weights flattened as [(3*dy+dx)*C1+cin]
#   b2: (1, C2)
#   wf: (C2, NCP)              fc weight zero-padded to NCP = 128-multiple lanes
#   bf: (1, NCP)
#   o : (bt, NCP)              lane-dense padded logits
# ---------------------------------------------------------------------------
def fused_cnn_kernel(xp_ref, w1_ref, w2_ref, b2_ref, wf_ref, bf_ref, o_ref):
    bt, Hp, Wp, Ca = xp_ref.shape
    H, W = Hp - 2, Wp - 2
    C1 = w1_ref.shape[1]
    C2 = w2_ref.shape[1]

    # ---- conv1 (1x1) + bias + ReLU as VPU FMAs on the padded canvas --------
    # The indicator channel (xp[..., Ca-1]) is 1 in the interior and 0 on the
    # halo, and its weight row is the conv1 bias, so the halo ring of y1p is
    # exactly 0 (matching zero-padding of relu(conv1(x)) in PyTorch).
    xp = xp_ref[...]                                    # (bt, H+2, W+2, Ca)
    w1 = w1_ref[...]                                    # (Ca, C1)
    y1p = xp[..., 0:1] * w1[0:1, :]
    for c in range(1, Ca):
        y1p = y1p + xp[..., c:c + 1] * w1[c:c + 1, :]
    y1p = jnp.maximum(y1p, 0.0)                         # (bt, H+2, W+2, C1)

    # ---- conv2 (3x3, pad=1) + bias + ReLU as ONE im2col matmul (K=9*C1) ----
    cols = [y1p[:, dy:dy + H, dx:dx + W, :]
            for dy in range(3) for dx in range(3)]      # 9 x (bt, H, W, C1)
    patches = jnp.concatenate(cols, axis=-1)            # (bt, H, W, 9*C1)
    patches = patches.reshape(bt * H * W, 9 * C1)
    y2 = jnp.dot(patches, w2_ref[...], preferred_element_type=jnp.float32)
    y2 = jnp.maximum(y2 + b2_ref[...], 0.0)             # (bt*H*W, C2)

    # ---- global average pool + fc (epilogue; y2 never leaves VMEM) ---------
    pooled = jnp.sum(y2.reshape(bt, H * W, C2), axis=1) * (1.0 / (H * W))
    o_ref[...] = (
        jnp.dot(pooled, wf_ref[...], preferred_element_type=jnp.float32)
        + bf_ref[...]
    )


def _pick_batch_tile(B, H, W, Ca, C1, C2):
    """Batch elements per grid step.

    Must keep the (bt, 128) output block legal (bt == B or bt % 8 == 0) and
    keep the per-step VMEM working set to a few MiB so the kernel is portable
    across v5e / v6e / v7x VMEM budgets.
    """
    if B % 8 != 0:
        return B

    def lanes(c):
        return ((c + 127) // 128) * 128

    def subl(s):
        return ((s + 7) // 8) * 8

    per_b = 4 * (
        (H + 2) * subl(W + 2) * lanes(Ca)      # padded/augmented input block
        + (H + 2) * (W + 2) * lanes(C1)        # conv1 activations (padded)
        + H * W * lanes(9 * C1)                # im2col patches
        + H * W * lanes(C2)                    # conv2 activations
    )
    budget = 6 * 1024 * 1024
    bt = 8
    while B % (bt * 2) == 0 and (bt * 2) * per_b <= budget and bt < 64:
        bt *= 2
    return bt


def init_params(key, num_classes=10):
    k1, k2, k3, k4, k5, k6 = jax.random.split(key, 6)
    return {
        # conv1: PyTorch weight (32, 3, 1, 1) -> stored as (3, 32)
        "w1": jax.random.normal(k1, (3, 32), jnp.float32) * 0.1,
        "b1": jax.random.normal(k2, (1, 32), jnp.float32) * 0.1,
        # conv2: PyTorch weight (64, 32, 3, 3) -> stored as (9, 32, 64),
        #        index [3*dy+dx, cin, cout]
        "w2": jax.random.normal(k3, (9, 32, 64), jnp.float32) * 0.05,
        "b2": jax.random.normal(k4, (1, 64), jnp.float32) * 0.05,
        # fc: PyTorch weight (num_classes, 64) -> stored as (64, num_classes)
        "wf": jax.random.normal(k5, (64, num_classes), jnp.float32) * 0.1,
        "bf": jax.random.normal(k6, (1, num_classes), jnp.float32) * 0.1,
    }


@functools.partial(jax.jit, static_argnames=("num_classes",))
def cnn_forward(x_nchw, params, num_classes=10):
    # Boundary glue: NCHW -> NHWC, zero-pad the (tiny) 3-channel input for the
    # conv2 halo, and append the interior-indicator channel that carries the
    # conv1 bias.  All heavy activations stay inside the fused kernel.
    x = jnp.transpose(x_nchw, (0, 2, 3, 1)).astype(jnp.float32)   # (B, H, W, 3)
    B, H, W, Cin = x.shape
    C1 = params["w1"].shape[1]
    C2 = params["w2"].shape[2]
    Ca = Cin + 1

    ones = jnp.ones((B, H, W, 1), jnp.float32)
    x_aug = jnp.concatenate([x, ones], axis=-1)                   # (B, H, W, 4)
    x_aug = jnp.pad(x_aug, ((0, 0), (1, 1), (1, 1), (0, 0)))      # (B, H+2, W+2, 4)

    # Weight preprocessing (cheap, done once per call under jit).
    w1_aug = jnp.concatenate([params["w1"], params["b1"]], axis=0)    # (4, C1)
    w2_flat = params["w2"].reshape(9 * C1, C2)                        # (288, C2)
    ncp = ((num_classes + 127) // 128) * 128                          # lane-dense
    wf_pad = jnp.zeros((C2, ncp), jnp.float32).at[:, :num_classes].set(params["wf"])
    bf_pad = jnp.zeros((1, ncp), jnp.float32).at[:, :num_classes].set(params["bf"])

    bt = _pick_batch_tile(B, H, W, Ca, C1, C2)
    grid = (B // bt,)

    logits_pad = pl.pallas_call(
        fused_cnn_kernel,
        out_shape=jax.ShapeDtypeStruct((B, ncp), jnp.float32),
        grid=grid,
        in_specs=[
            pl.BlockSpec((bt, H + 2, W + 2, Ca), lambda b: (b, 0, 0, 0)),
            pl.BlockSpec((Ca, C1), lambda b: (0, 0)),
            pl.BlockSpec((9 * C1, C2), lambda b: (0, 0)),
            pl.BlockSpec((1, C2), lambda b: (0, 0)),
            pl.BlockSpec((C2, ncp), lambda b: (0, 0)),
            pl.BlockSpec((1, ncp), lambda b: (0, 0)),
        ],
        out_specs=pl.BlockSpec((bt, ncp), lambda b: (b, 0)),
        compiler_params=pltpu.CompilerParams(
            dimension_semantics=("parallel",),
            vmem_limit_bytes=32 * 1024 * 1024,
        ),
    )(x_aug, w1_aug, w2_flat, params["b2"], wf_pad, bf_pad)

    return logits_pad[:, :num_classes]


# ---------------------------------------------------------------------------
# Pure-JAX reference (for correctness checking only).
# ---------------------------------------------------------------------------
def reference_forward(x_nchw, params, num_classes=10):
    hi = lax.Precision.HIGHEST
    x = jnp.transpose(x_nchw, (0, 2, 3, 1)).astype(jnp.float32)
    y1 = jax.nn.relu(
        jnp.einsum("bhwc,cd->bhwd", x, params["w1"], precision=hi)
        + params["b1"][0]
    )
    C1, C2 = params["w2"].shape[1], params["w2"].shape[2]
    k2 = params["w2"].reshape(3, 3, C1, C2)                       # HWIO
    y2 = lax.conv_general_dilated(
        y1, k2, window_strides=(1, 1), padding="SAME",
        dimension_numbers=("NHWC", "HWIO", "NHWC"), precision=hi)
    y2 = jax.nn.relu(y2 + params["b2"][0])
    pooled = jnp.mean(y2, axis=(1, 2))
    return jnp.dot(pooled, params["wf"], precision=hi) + params["bf"][0]


if __name__ == "__main__":
    key = jax.random.PRNGKey(0)
    k_x, k_p = jax.random.split(key)

    B, C, Hs, Ws = 2, 3, 16, 16
    num_classes = 10

    x = jax.random.normal(k_x, (B, C, Hs, Ws), jnp.float32)   # NCHW like PyTorch
    params = init_params(k_p, num_classes=num_classes)

    out = cnn_forward(x, params, num_classes=num_classes)
    out = jax.block_until_ready(out)

    assert out.shape == (B, num_classes), out.shape
    assert bool(jnp.all(jnp.isfinite(out)))

    ref = reference_forward(x, params, num_classes=num_classes)
    assert jnp.allclose(out, ref, rtol=2e-3, atol=2e-3), (
        "max abs err = %g" % float(jnp.max(jnp.abs(out - ref))))

    print("KERNEL_OK")
</pallas_src>

<mosaic_0001>
module attributes {stable_mosaic.version = 11 : i64} {
  func.func @fused_cnn_kernel(%arg0: i32, %arg1: memref<2x18x18x4xf32, #tpu.memory_space<vmem>>, %arg2: memref<4x32xf32, #tpu.memory_space<vmem>>, %arg3: memref<288x64xf32, #tpu.memory_space<vmem>>, %arg4: memref<1x64xf32, #tpu.memory_space<vmem>>, %arg5: memref<64x128xf32, #tpu.memory_space<vmem>>, %arg6: memref<1x128xf32, #tpu.memory_space<vmem>>, %arg7: memref<2x128xf32, #tpu.memory_space<vmem>>) attributes {dimension_semantics = [#tpu.dimension_semantics<parallel>], iteration_bounds = array<i64: 1>, scalar_prefetch = 0 : i64, scratch_operands = 0 : i64, tpu.core_type = #tpu.core_type<tc>, window_params = [{transform_indices = @transform_0, window_bounds = array<i64: 2, 18, 18, 4>}, {pipeline_mode = #tpu.pipeline_mode<synchronous>, transform_indices = @transform_1, window_bounds = array<i64: 4, 32>}, {pipeline_mode = #tpu.pipeline_mode<synchronous>, transform_indices = @transform_2, window_bounds = array<i64: 288, 64>}, {pipeline_mode = #tpu.pipeline_mode<synchronous>, transform_indices = @transform_3, window_bounds = array<i64: 1, 64>}, {pipeline_mode = #tpu.pipeline_mode<synchronous>, transform_indices = @transform_4, window_bounds = array<i64: 64, 128>}, {pipeline_mode = #tpu.pipeline_mode<synchronous>, transform_indices = @transform_5, window_bounds = array<i64: 1, 128>}, {transform_indices = @transform_6, window_bounds = array<i64: 2, 128>}]} {
    %c0 = arith.constant 0 : index
    %c0_0 = arith.constant 0 : index
    %c0_1 = arith.constant 0 : index
    %c0_2 = arith.constant 0 : index
    %0 = vector.load %arg1[%c0, %c0_0, %c0_1, %c0_2] : memref<2x18x18x4xf32, #tpu.memory_space<vmem>>, vector<2x18x18x4xf32>
    %c0_3 = arith.constant 0 : index
    %c0_4 = arith.constant 0 : index
    %1 = vector.load %arg2[%c0_3, %c0_4] : memref<4x32xf32, #tpu.memory_space<vmem>>, vector<4x32xf32>
    %2 = vector.extract_strided_slice %0 {offsets = [0, 0, 0, 0], sizes = [2, 18, 18, 1], strides = [1, 1, 1, 1]} : vector<2x18x18x4xf32> to vector<2x18x18x1xf32>
    %3 = vector.extract_strided_slice %1 {offsets = [0, 0], sizes = [1, 32], strides = [1, 1]} : vector<4x32xf32> to vector<1x32xf32>
    %4 = vector.shape_cast %3 : vector<1x32xf32> to vector<1x1x1x32xf32>
    %5 = vector.broadcast %2 : vector<2x18x18x1xf32> to vector<2x18x18x32xf32>
    %6 = vector.broadcast %4 : vector<1x1x1x32xf32> to vector<2x18x18x32xf32>
    %7 = arith.mulf %5, %6 : vector<2x18x18x32xf32>
    %8 = vector.extract_strided_slice %0 {offsets = [0, 0, 0, 1], sizes = [2, 18, 18, 1], strides = [1, 1, 1, 1]} : vector<2x18x18x4xf32> to vector<2x18x18x1xf32>
    %9 = vector.extract_strided_slice %1 {offsets = [1, 0], sizes = [1, 32], strides = [1, 1]} : vector<4x32xf32> to vector<1x32xf32>
    %10 = vector.shape_cast %9 : vector<1x32xf32> to vector<1x1x1x32xf32>
    %11 = vector.broadcast %8 : vector<2x18x18x1xf32> to vector<2x18x18x32xf32>
    %12 = vector.broadcast %10 : vector<1x1x1x32xf32> to vector<2x18x18x32xf32>
    %13 = arith.mulf %11, %12 : vector<2x18x18x32xf32>
    %14 = arith.addf %7, %13 : vector<2x18x18x32xf32>
    %15 = vector.extract_strided_slice %0 {offsets = [0, 0, 0, 2], sizes = [2, 18, 18, 1], strides = [1, 1, 1, 1]} : vector<2x18x18x4xf32> to vector<2x18x18x1xf32>
    %16 = vector.extract_strided_slice %1 {offsets = [2, 0], sizes = [1, 32], strides = [1, 1]} : vector<4x32xf32> to vector<1x32xf32>
    %17 = vector.shape_cast %16 : vector<1x32xf32> to vector<1x1x1x32xf32>
    %18 = vector.broadcast %15 : vector<2x18x18x1xf32> to vector<2x18x18x32xf32>
    %19 = vector.broadcast %17 : vector<1x1x1x32xf32> to vector<2x18x18x32xf32>
    %20 = arith.mulf %18, %19 : vector<2x18x18x32xf32>
    %21 = arith.addf %14, %20 : vector<2x18x18x32xf32>
    %22 = vector.extract_strided_slice %0 {offsets = [0, 0, 0, 3], sizes = [2, 18, 18, 1], strides = [1, 1, 1, 1]} : vector<2x18x18x4xf32> to vector<2x18x18x1xf32>
    %23 = vector.extract_strided_slice %1 {offsets = [3, 0], sizes = [1, 32], strides = [1, 1]} : vector<4x32xf32> to vector<1x32xf32>
    %24 = vector.shape_cast %23 : vector<1x32xf32> to vector<1x1x1x32xf32>
    %25 = vector.broadcast %22 : vector<2x18x18x1xf32> to vector<2x18x18x32xf32>
    %26 = vector.broadcast %24 : vector<1x1x1x32xf32> to vector<2x18x18x32xf32>
    %27 = arith.mulf %25, %26 : vector<2x18x18x32xf32>
    %28 = arith.addf %21, %27 : vector<2x18x18x32xf32>
    %cst = arith.constant 0.000000e+00 : f32
    %29 = vector.broadcast %cst : f32 to vector<2x18x18x32xf32>
    %30 = arith.maximumf %28, %29 : vector<2x18x18x32xf32>
    %31 = vector.extract_strided_slice %30 {offsets = [0, 0, 0, 0], sizes = [2, 16, 16, 32], strides = [1, 1, 1, 1]} : vector<2x18x18x32xf32> to vector<2x16x16x32xf32>
    %32 = vector.extract_strided_slice %30 {offsets = [0, 0, 1, 0], sizes = [2, 16, 16, 32], strides = [1, 1, 1, 1]} : vector<2x18x18x32xf32> to vector<2x16x16x32xf32>
    %33 = vector.extract_strided_slice %30 {offsets = [0, 0, 2, 0], sizes = [2, 16, 16, 32], strides = [1, 1, 1, 1]} : vector<2x18x18x32xf32> to vector<2x16x16x32xf32>
    %34 = vector.extract_strided_slice %30 {offsets = [0, 1, 0, 0], sizes = [2, 16, 16, 32], strides = [1, 1, 1, 1]} : vector<2x18x18x32xf32> to vector<2x16x16x32xf32>
    %35 = vector.extract_strided_slice %30 {offsets = [0, 1, 1, 0], sizes = [2, 16, 16, 32], strides = [1, 1, 1, 1]} : vector<2x18x18x32xf32> to vector<2x16x16x32xf32>
    %36 = vector.extract_strided_slice %30 {offsets = [0, 1, 2, 0], sizes = [2, 16, 16, 32], strides = [1, 1, 1, 1]} : vector<2x18x18x32xf32> to vector<2x16x16x32xf32>
    %37 = vector.extract_strided_slice %30 {offsets = [0, 2, 0, 0], sizes = [2, 16, 16, 32], strides = [1, 1, 1, 1]} : vector<2x18x18x32xf32> to vector<2x16x16x32xf32>
    %38 = vector.extract_strided_slice %30 {offsets = [0, 2, 1, 0], sizes = [2, 16, 16, 32], strides = [1, 1, 1, 1]} : vector<2x18x18x32xf32> to vector<2x16x16x32xf32>
    %39 = vector.extract_strided_slice %30 {offsets = [0, 2, 2, 0], sizes = [2, 16, 16, 32], strides = [1, 1, 1, 1]} : vector<2x18x18x32xf32> to vector<2x16x16x32xf32>
    %40 = tpu.concatenate %31, %32, %33, %34, %35, %36, %37, %38, %39 in 3 : vector<2x16x16x32xf32>, vector<2x16x16x32xf32>, vector<2x16x16x32xf32>, vector<2x16x16x32xf32>, vector<2x16x16x32xf32>, vector<2x16x16x32xf32>, vector<2x16x16x32xf32>, vector<2x16x16x32xf32>, vector<2x16x16x32xf32> -> vector<2x16x16x288xf32>
    %41 = vector.shape_cast %40 : vector<2x16x16x288xf32> to vector<512x288xf32>
    %c0_5 = arith.constant 0 : index
    %c0_6 = arith.constant 0 : index
    %42 = vector.load %arg3[%c0_5, %c0_6] : memref<288x64xf32, #tpu.memory_space<vmem>>, vector<288x64xf32>
    %cst_7 = arith.constant dense<0.000000e+00> : vector<512x64xf32>
    %43 = tpu.matmul %41, %42, %cst_7 {dimension_numbers = #tpu.dot_dimension_numbers<[1], [0], [0], [1], [0, 0, 1, 1], [], []>} : vector<512x288xf32>, vector<288x64xf32>, vector<512x64xf32> -> vector<512x64xf32>
    %c0_8 = arith.constant 0 : index
    %c0_9 = arith.constant 0 : index
    %44 = vector.load %arg4[%c0_8, %c0_9] : memref<1x64xf32, #tpu.memory_space<vmem>>, vector<1x64xf32>
    %45 = vector.broadcast %44 : vector<1x64xf32> to vector<512x64xf32>
    %46 = arith.addf %43, %45 : vector<512x64xf32>
    %cst_10 = arith.constant 0.000000e+00 : f32
    %47 = vector.broadcast %cst_10 : f32 to vector<512x64xf32>
    %48 = arith.maximumf %46, %47 : vector<512x64xf32>
    %49 = vector.shape_cast %48 : vector<512x64xf32> to vector<2x256x64xf32>
    %cst_11 = arith.constant dense<0.000000e+00> : vector<2x64xf32>
    %50 = vector.multi_reduction <add>, %49, %cst_11 [1] : vector<2x256x64xf32> to vector<2x64xf32>
    %cst_12 = arith.constant 3.906250e-03 : f32
    %51 = vector.broadcast %cst_12 : f32 to vector<2x64xf32>
    %52 = arith.mulf %50, %51 : vector<2x64xf32>
    %c0_13 = arith.constant 0 : index
    %c0_14 = arith.constant 0 : index
    %53 = vector.load %arg5[%c0_13, %c0_14] : memref<64x128xf32, #tpu.memory_space<vmem>>, vector<64x128xf32>
    %cst_15 = arith.constant dense<0.000000e+00> : vector<2x128xf32>
    %54 = tpu.matmul %52, %53, %cst_15 {dimension_numbers = #tpu.dot_dimension_numbers<[1], [0], [0], [1], [0, 0, 1, 1], [], []>} : vector<2x64xf32>, vector<64x128xf32>, vector<2x128xf32> -> vector<2x128xf32>
    %c0_16 = arith.constant 0 : index
    %c0_17 = arith.constant 0 : index
    %55 = vector.load %arg6[%c0_16, %c0_17] : memref<1x128xf32, #tpu.memory_space<vmem>>, vector<1x128xf32>
    %56 = vector.broadcast %55 : vector<1x128xf32> to vector<2x128xf32>
    %57 = arith.addf %54, %56 : vector<2x128xf32>
    %c0_18 = arith.constant 0 : index
    %c0_19 = arith.constant 0 : index
    %58 = vector.load %arg7[%c0_18, %c0_19] : memref<2x128xf32, #tpu.memory_space<vmem>>, vector<2x128xf32>
    tpu.vector_store %arg7[%c0_18, %c0_19], %57 {strides = array<i32>} : memref<2x128xf32, #tpu.memory_space<vmem>>, vector<2x128xf32>,
    return
  }
  func.func @transform_0(%arg0: i32) -> (i32, i32, i32, i32) {
    %c0_i32 = arith.constant 0 : i32
    %c0_i32_0 = arith.constant 0 : i32
    %c0_i32_1 = arith.constant 0 : i32
    %c0_i32_2 = arith.constant 0 : i32
    return %arg0, %c0_i32, %c0_i32_0, %c0_i32_1 : i32, i32, i32, i32
  }
  func.func @transform_1(%arg0: i32) -> (i32, i32) {
    %c0_i32 = arith.constant 0 : i32
    %c0_i32_0 = arith.constant 0 : i32
    %c0_i32_1 = arith.constant 0 : i32
    return %c0_i32, %c0_i32_0 : i32, i32
  }
  func.func @transform_2(%arg0: i32) -> (i32, i32) {
    %c0_i32 = arith.constant 0 : i32
    %c0_i32_0 = arith.constant 0 : i32
    %c0_i32_1 = arith.constant 0 : i32
    return %c0_i32, %c0_i32_0 : i32, i32
  }
  func.func @transform_3(%arg0: i32) -> (i32, i32) {
    %c0_i32 = arith.constant 0 : i32
    %c0_i32_0 = arith.constant 0 : i32
    %c0_i32_1 = arith.constant 0 : i32
    return %c0_i32, %c0_i32_0 : i32, i32
  }
  func.func @transform_4(%arg0: i32) -> (i32, i32) {
    %c0_i32 = arith.constant 0 : i32
    %c0_i32_0 = arith.constant 0 : i32
    %c0_i32_1 = arith.constant 0 : i32
    return %c0_i32, %c0_i32_0 : i32, i32
  }
  func.func @transform_5(%arg0: i32) -> (i32, i32) {
    %c0_i32 = arith.constant 0 : i32
    %c0_i32_0 = arith.constant 0 : i32
    %c0_i32_1 = arith.constant 0 : i32
    return %c0_i32, %c0_i32_0 : i32, i32
  }
  func.func @transform_6(%arg0: i32) -> (i32, i32) {
    %c0_i32 = arith.constant 0 : i32
    %c0_i32_0 = arith.constant 0 : i32
    return %arg0, %c0_i32 : i32, i32
  }
}

</mosaic_0001>

<llo_original>
// kernel: cnn_forward.1
$region0: #{cnn_forward.1}
  #allocation0 [shape = 'u32[]', space=smem, size = 0x4, offset = 0x4, fixed_abs, tag = 'smem constant byte address 0x4 - core index']
  #allocation1 [shape = 'u32[144,128]{1,0:T(1,128)}', space=vmem, size = 0x12000, scoped, tag = 'internal scratch']
  %s0 = inlined_call_operand.vmem [shape: f32[2,18,18,4], index: 0, kind: input, shape index: {}]
  %s1 = inlined_call_operand.vmem [shape: f32[4,32], index: 1, kind: input, shape index: {}]
  %s2 = inlined_call_operand.vmem [shape: f32[288,64], index: 2, kind: input, shape index: {}]
  %s3 = inlined_call_operand.vmem [shape: f32[1,64], index: 3, kind: input, shape index: {}]
  %s4 = inlined_call_operand.vmem [shape: f32[64,128], index: 4, kind: input, shape index: {}]
  %s5 = inlined_call_operand.vmem [shape: f32[1,128], index: 5, kind: input, shape index: {}]
  %s6 = inlined_call_operand.hbm [shape: f32[2,128], index: 6, kind: output, shape index: {}]
  %s7 = sld [smem:[#allocation0]]
  $region34: #{cnn_forward.1} parent=0
    _
  %s9 = ssub.s32 1, %s7
  %s10 = scalar_select 0, %s9, %s7
  $region1: #{cnn_forward.1} parent=0
    #allocation2 [shape = 'u8[1024]{0}', space=vmem, size = 0x400, scoped, tag = 'output window, operand 0, single buffered']
    #allocation3 [shape = 's32[1]{0}', space=sflag, size = 0x4, scoped, tag = 'scoped memory for cnn_forward.1']
    %11 = vsyncpa [#allocation3], 0
    // Predicated region
    $region2: #{cnn_forward.1} parent=1 // pred_check
      _
    $region3: #{cnn_forward.1} parent=1 // pred_check_branch
      %13 = sbr.rel (0) target = $region5
    $region4: #{cnn_forward.1} parent=1 // pred_region
      _
    $region5: #{cnn_forward.1} parent=1 // pred_fallthru
      _
    // Predicated region
    $region6: #{cnn_forward.1} parent=1 // pred_check
      _
    $region7: #{cnn_forward.1} parent=1 // pred_check_branch
      %15 = sbr.rel (0) target = $region9
    $region8: #{cnn_forward.1} parent=1 // pred_region
      _
    $region9: #{cnn_forward.1} parent=1 // pred_fallthru
      _
    // Predicated region
    $region10: #{cnn_forward.1} parent=1 // pred_check
      _
    $region11: #{cnn_forward.1} parent=1 // pred_check_branch
      %17 = sbr.rel (0) target = $region13
    $region12: #{cnn_forward.1} parent=1 // pred_region
      _
    $region13: #{cnn_forward.1} parent=1 // pred_fallthru
      _
    // Predicated region
    $region14: #{cnn_forward.1} parent=1 // pred_check
      _
    $region15: #{cnn_forward.1} parent=1 // pred_check_branch
      %19 = sbr.rel (0) target = $region17
    $region16: #{cnn_forward.1} parent=1 // pred_region
      _
    $region17: #{cnn_forward.1} parent=1 // pred_fallthru
      _
    // Predicated region
    $region18: #{cnn_forward.1} parent=1 // pred_check
      _
    $region19: #{cnn_forward.1} parent=1 // pred_check_branch
      %21 = sbr.rel (0) target = $region21
    $region20: #{cnn_forward.1} parent=1 // pred_region
      _
    $region21: #{cnn_forward.1} parent=1 // pred_fallthru
      _
    // Predicated region
    $region22: #{cnn_forward.1} parent=1 // pred_check
      _
    $region23: #{cnn_forward.1} parent=1 // pred_check_branch
      %23 = sbr.rel (0) target = $region25
    $region24: #{cnn_forward.1} parent=1 // pred_region
      _
    $region25: #{cnn_forward.1} parent=1 // pred_fallthru
      _
    %v24 = vld [vmem:[%s0] sm:$0xff]
    %v25 = vld [vmem:[%s0 + $0x8] sm:$0xff]
    %v26 = vld [vmem:[%s0 + $0x10] sm:$0x3]
    %v27 = vld [vmem:[%s0 + $0x18] sm:$0xff]
    %v28 = vld [vmem:[%s0 + $0x20] sm:$0xff]
    %v29 = vld [vmem:[%s0 + $0x28] sm:$0x3]
    %v30 = vld [vmem:[%s0 + $0x30] sm:$0xff]
    %v31 = vld [vmem:[%s0 + $0x38] sm:$0xff]
    %v32 = vld [vmem:[%s0 + $0x40] sm:$0x3]
    %v33 = vld [vmem:[%s0 + $0x48] sm:$0xff]
    %v34 = vld [vmem:[%s0 + $0x50] sm:$0xff]
    %v35 = vld [vmem:[%s0 + $0x58] sm:$0x3]
    %v36 = vld [vmem:[%s0 + $0x60] sm:$0xff]
    %v37 = vld [vmem:[%s0 + $0x68] sm:$0xff]
    %v38 = vld [vmem:[%s0 + $0x70] sm:$0x3]
    %v39 = vld [vmem:[%s0 + $0x78] sm:$0xff]
    %v40 = vld [vmem:[%s0 + $0x80] sm:$0xff]
    %v41 = vld [vmem:[%s0 + $0x88] sm:$0x3]
    %v42 = vld [vmem:[%s0 + $0x90] sm:$0xff]
    %v43 = vld [vmem:[%s0 + $0x98] sm:$0xff]
    %v44 = vld [vmem:[%s0 + $0xa0] sm:$0x3]
    %v45 = vld [vmem:[%s0 + $0xa8] sm:$0xff]
    %v46 = vld [vmem:[%s0 + $0xb0] sm:$0xff]
    %v47 = vld [vmem:[%s0 + $0xb8] sm:$0x3]
    %v48 = vld [vmem:[%s0 + $0xc0] sm:$0xff]
    %v49 = vld [vmem:[%s0 + $0xc8] sm:$0xff]
    %v50 = vld [vmem:[%s0 + $0xd0] sm:$0x3]
    %v51 = vld [vmem:[%s0 + $0xd8] sm:$0xff]
    %v52 = vld [vmem:[%s0 + $0xe0] sm:$0xff]
    %v53 = vld [vmem:[%s0 + $0xe8] sm:$0x3]
    %v54 = vld [vmem:[%s0 + $0xf0] sm:$0xff]
    %v55 = vld [vmem:[%s0 + $0xf8] sm:$0xff]
    %v56 = vld [vmem:[%s0 + $0x100] sm:$0x3]
    %v57 = vld [vmem:[%s0 + $0x108] sm:$0xff]
    %v58 = vld [vmem:[%s0 + $0x110] sm:$0xff]
    %v59 = vld [vmem:[%s0 + $0x118] sm:$0x3]
    %v60 = vld [vmem:[%s0 + $0x120] sm:$0xff]
    %v61 = vld [vmem:[%s0 + $0x128] sm:$0xff]
    %v62 = vld [vmem:[%s0 + $0x130] sm:$0x3]
    %v63 = vld [vmem:[%s0 + $0x138] sm:$0xff]
    %v64 = vld [vmem:[%s0 + $0x140] sm:$0xff]
    %v65 = vld [vmem:[%s0 + $0x148] sm:$0x3]
    %v66 = vld [vmem:[%s0 + $0x150] sm:$0xff]
    %v67 = vld [vmem:[%s0 + $0x158] sm:$0xff]
    %v68 = vld [vmem:[%s0 + $0x160] sm:$0x3]
    %v69 = vld [vmem:[%s0 + $0x168] sm:$0xff]
    %v70 = vld [vmem:[%s0 + $0x170] sm:$0xff]
    %v71 = vld [vmem:[%s0 + $0x178] sm:$0x3]
    %v72 = vld [vmem:[%s0 + $0x180] sm:$0xff]
    %v73 = vld [vmem:[%s0 + $0x188] sm:$0xff]
    %v74 = vld [vmem:[%s0 + $0x190] sm:$0x3]
    %v75 = vld [vmem:[%s0 + $0x198] sm:$0xff]
    %v76 = vld [vmem:[%s0 + $0x1a0] sm:$0xff]
    %v77 = vld [vmem:[%s0 + $0x1a8] sm:$0x3]
    %v78 = vld [vmem:[%s0 + $0x1b0] sm:$0xff]
    %v79 = vld [vmem:[%s0 + $0x1b8] sm:$0xff]
    %v80 = vld [vmem:[%s0 + $0x1c0] sm:$0x3]
    %v81 = vld [vmem:[%s0 + $0x1c8] sm:$0xff]
    %v82 = vld [vmem:[%s0 + $0x1d0] sm:$0xff]
    %v83 = vld [vmem:[%s0 + $0x1d8] sm:$0x3]
    %v84 = vld [vmem:[%s0 + $0x1e0] sm:$0xff]
    %v85 = vld [vmem:[%s0 + $0x1e8] sm:$0xff]
    %v86 = vld [vmem:[%s0 + $0x1f0] sm:$0x3]
    %v87 = vld [vmem:[%s0 + $0x1f8] sm:$0xff]
    %v88 = vld [vmem:[%s0 + $0x200] sm:$0xff]
    %v89 = vld [vmem:[%s0 + $0x208] sm:$0x3]
    %v90 = vld [vmem:[%s0 + $0x210] sm:$0xff]
    %v91 = vld [vmem:[%s0 + $0x218] sm:$0xff]
    %v92 = vld [vmem:[%s0 + $0x220] sm:$0x3]
    %v93 = vld [vmem:[%s0 + $0x228] sm:$0xff]
    %v94 = vld [vmem:[%s0 + $0x230] sm:$0xff]
    %v95 = vld [vmem:[%s0 + $0x238] sm:$0x3]
    %v96 = vld [vmem:[%s0 + $0x240] sm:$0xff]
    %v97 = vld [vmem:[%s0 + $0x248] sm:$0xff]
    %v98 = vld [vmem:[%s0 + $0x250] sm:$0x3]
    %v99 = vld [vmem:[%s0 + $0x258] sm:$0xff]
    %v100 = vld [vmem:[%s0 + $0x260] sm:$0xff]
    %v101 = vld [vmem:[%s0 + $0x268] sm:$0x3]
    %v102 = vld [vmem:[%s0 + $0x270] sm:$0xff]
    %v103 = vld [vmem:[%s0 + $0x278] sm:$0xff]
    %v104 = vld [vmem:[%s0 + $0x280] sm:$0x3]
    %v105 = vld [vmem:[%s0 + $0x288] sm:$0xff]
    %v106 = vld [vmem:[%s0 + $0x290] sm:$0xff]
    %v107 = vld [vmem:[%s0 + $0x298] sm:$0x3]
    %v108 = vld [vmem:[%s0 + $0x2a0] sm:$0xff]
    %v109 = vld [vmem:[%s0 + $0x2a8] sm:$0xff]
    %v110 = vld [vmem:[%s0 + $0x2b0] sm:$0x3]
    %v111 = vld [vmem:[%s0 + $0x2b8] sm:$0xff]
    %v112 = vld [vmem:[%s0 + $0x2c0] sm:$0xff]
    %v113 = vld [vmem:[%s0 + $0x2c8] sm:$0x3]
    %v114 = vld [vmem:[%s0 + $0x2d0] sm:$0xff]
    %v115 = vld [vmem:[%s0 + $0x2d8] sm:$0xff]
    %v116 = vld [vmem:[%s0 + $0x2e0] sm:$0x3]
    %v117 = vld [vmem:[%s0 + $0x2e8] sm:$0xff]
    %v118 = vld [vmem:[%s0 + $0x2f0] sm:$0xff]
    %v119 = vld [vmem:[%s0 + $0x2f8] sm:$0x3]
    %v120 = vld [vmem:[%s0 + $0x300] sm:$0xff]
    %v121 = vld [vmem:[%s0 + $0x308] sm:$0xff]
    %v122 = vld [vmem:[%s0 + $0x310] sm:$0x3]
    %v123 = vld [vmem:[%s0 + $0x318] sm:$0xff]
    %v124 = vld [vmem:[%s0 + $0x320] sm:$0xff]
    %v125 = vld [vmem:[%s0 + $0x328] sm:$0x3]
    %v126 = vld [vmem:[%s0 + $0x330] sm:$0xff]
    %v127 = vld [vmem:[%s0 + $0x338] sm:$0xff]
    %v128 = vld [vmem:[%s0 + $0x340] sm:$0x3]
    %v129 = vld [vmem:[%s0 + $0x348] sm:$0xff]
    %v130 = vld [vmem:[%s0 + $0x350] sm:$0xff]
    %v131 = vld [vmem:[%s0 + $0x358] sm:$0x3]
    %v132 = vld [vmem:[%s1] sm:$0xf]
    %134 = vset.pattern.permute.xlu0 0
    %135 = vperm.xlu0 %134, %v24
    %v136 = vpop.permute.xlu0 %135
    %139 = vset.pattern.permute.xlu0 0
    %140 = vperm.xlu0 %139, %v25
    %v141 = vpop.permute.xlu0 %140
    %144 = vset.pattern.permute.xlu0 0
    %145 = vperm.xlu0 %144, %v26
    %v146 = vpop.permute.xlu0 %145
    %149 = vset.pattern.permute.xlu0 0
    %150 = vperm.xlu0 %149, %v27
    %v151 = vpop.permute.xlu0 %150
    %154 = vset.pattern.permute.xlu0 0
    %155 = vperm.xlu0 %154, %v28
    %v156 = vpop.permute.xlu0 %155
    %159 = vset.pattern.permute.xlu0 0
    %160 = vperm.xlu0 %159, %v29
    %v161 = vpop.permute.xlu0 %160
    %164 = vset.pattern.permute.xlu0 0
    %165 = vperm.xlu0 %164, %v30
    %v166 = vpop.permute.xlu0 %165
    %169 = vset.pattern.permute.xlu0 0
    %170 = vperm.xlu0 %169, %v31
    %v171 = vpop.permute.xlu0 %170
    %174 = vset.pattern.permute.xlu0 0
    %175 = vperm.xlu0 %174, %v32
    %v176 = vpop.permute.xlu0 %175
    %179 = vset.pattern.permute.xlu0 0
    %180 = vperm.xlu0 %179, %v33
    %v181 = vpop.permute.xlu0 %180
    %184 = vset.pattern.permute.xlu0 0
    %185 = vperm.xlu0 %184, %v34
    %v186 = vpop.permute.xlu0 %185
    %189 = vset.pattern.permute.xlu0 0
    %190 = vperm.xlu0 %189, %v35
    %v191 = vpop.permute.xlu0 %190
    %194 = vset.pattern.permute.xlu0 0
    %195 = vperm.xlu0 %194, %v36
    %v196 = vpop.permute.xlu0 %195
    %199 = vset.pattern.permute.xlu0 0
    %200 = vperm.xlu0 %199, %v37
    %v201 = vpop.permute.xlu0 %200
    %204 = vset.pattern.permute.xlu0 0
    %205 = vperm.xlu0 %204, %v38
    %v206 = vpop.permute.xlu0 %205
    %209 = vset.pattern.permute.xlu0 0
    %210 = vperm.xlu0 %209, %v39
    %v211 = vpop.permute.xlu0 %210
    %214 = vset.pattern.permute.xlu0 0
    %215 = vperm.xlu0 %214, %v40
    %v216 = vpop.permute.xlu0 %215
    %219 = vset.pattern.permute.xlu0 0
    %220 = vperm.xlu0 %219, %v41
    %v221 = vpop.permute.xlu0 %220
    %224 = vset.pattern.permute.xlu0 0
    %225 = vperm.xlu0 %224, %v42
    %v226 = vpop.permute.xlu0 %225
    %229 = vset.pattern.permute.xlu0 0
    %230 = vperm.xlu0 %229, %v43
    %v231 = vpop.permute.xlu0 %230
    %234 = vset.pattern.permute.xlu0 0
    %235 = vperm.xlu0 %234, %v44
    %v236 = vpop.permute.xlu0 %235
    %239 = vset.pattern.permute.xlu0 0
    %240 = vperm.xlu0 %239, %v45
    %v241 = vpop.permute.xlu0 %240
    %244 = vset.pattern.permute.xlu0 0
    %245 = vperm.xlu0 %244, %v46
    %v246 = vpop.permute.xlu0 %245
    %249 = vset.pattern.permute.xlu0 0
    %250 = vperm.xlu0 %249, %v47
    %v251 = vpop.permute.xlu0 %250
    %254 = vset.pattern.permute.xlu0 0
    %255 = vperm.xlu0 %254, %v48
    %v256 = vpop.permute.xlu0 %255
    %259 = vset.pattern.permute.xlu0 0
    %260 = vperm.xlu0 %259, %v49
    %v261 = vpop.permute.xlu0 %260
    %264 = vset.pattern.permute.xlu0 0
    %265 = vperm.xlu0 %264, %v50
    %v266 = vpop.permute.xlu0 %265
    %269 = vset.pattern.permute.xlu0 0
    %270 = vperm.xlu0 %269, %v51
    %v271 = vpop.permute.xlu0 %270
    %274 = vset.pattern.permute.xlu0 0
    %275 = vperm.xlu0 %274, %v52
    %v276 = vpop.permute.xlu0 %275
    %279 = vset.pattern.permute.xlu0 0
    %280 = vperm.xlu0 %279, %v53
    %v281 = vpop.permute.xlu0 %280
    %284 = vset.pattern.permute.xlu0 0
    %285 = vperm.xlu0 %284, %v54
    %v286 = vpop.permute.xlu0 %285
    %289 = vset.pattern.permute.xlu0 0
    %290 = vperm.xlu0 %289, %v55
    %v291 = vpop.permute.xlu0 %290
    %294 = vset.pattern.permute.xlu0 0
    %295 = vperm.xlu0 %294, %v56
    %v296 = vpop.permute.xlu0 %295
    %299 = vset.pattern.permute.xlu0 0
    %300 = vperm.xlu0 %299, %v57
    %v301 = vpop.permute.xlu0 %300
    %304 = vset.pattern.permute.xlu0 0
    %305 = vperm.xlu0 %304, %v58
    %v306 = vpop.permute.xlu0 %305
    %309 = vset.pattern.permute.xlu0 0
    %310 = vperm.xlu0 %309, %v59
    %v311 = vpop.permute.xlu0 %310
    %314 = vset.pattern.permute.xlu0 0
    %315 = vperm.xlu0 %314, %v60
    %v316 = vpop.permute.xlu0 %315
    %319 = vset.pattern.permute.xlu0 0
    %320 = vperm.xlu0 %319, %v61
    %v321 = vpop.permute.xlu0 %320
    %324 = vset.pattern.permute.xlu0 0
    %325 = vperm.xlu0 %324, %v62
    %v326 = vpop.permute.xlu0 %325
    %329 = vset.pattern.permute.xlu0 0
    %330 = vperm.xlu0 %329, %v63
    %v331 = vpop.permute.xlu0 %330
    %334 = vset.pattern.permute.xlu0 0
    %335 = vperm.xlu0 %334, %v64
    %v336 = vpop.permute.xlu0 %335
    %339 = vset.pattern.permute.xlu0 0
    %340 = vperm.xlu0 %339, %v65
    %v341 = vpop.permute.xlu0 %340
    %344 = vset.pattern.permute.xlu0 0
    %345 = vperm.xlu0 %344, %v66
    %v346 = vpop.permute.xlu0 %345
    %349 = vset.pattern.permute.xlu0 0
    %350 = vperm.xlu0 %349, %v67
    %v351 = vpop.permute.xlu0 %350
    %354 = vset.pattern.permute.xlu0 0
    %355 = vperm.xlu0 %354, %v68
    %v356 = vpop.permute.xlu0 %355
    %359 = vset.pattern.permute.xlu0 0
    %360 = vperm.xlu0 %359, %v69
    %v361 = vpop.permute.xlu0 %360
    %364 = vset.pattern.permute.xlu0 0
    %365 = vperm.xlu0 %364, %v70
    %v366 = vpop.permute.xlu0 %365
    %369 = vset.pattern.permute.xlu0 0
    %370 = vperm.xlu0 %369, %v71
    %v371 = vpop.permute.xlu0 %370
    %374 = vset.pattern.permute.xlu0 0
    %375 = vperm.xlu0 %374, %v72
    %v376 = vpop.permute.xlu0 %375
    %379 = vset.pattern.permute.xlu0 0
    %380 = vperm.xlu0 %379, %v73
    %v381 = vpop.permute.xlu0 %380
    %384 = vset.pattern.permute.xlu0 0
    %385 = vperm.xlu0 %384, %v74
    %v386 = vpop.permute.xlu0 %385
    %389 = vset.pattern.permute.xlu0 0
    %390 = vperm.xlu0 %389, %v75
    %v391 = vpop.permute.xlu0 %390
    %394 = vset.pattern.permute.xlu0 0
    %395 = vperm.xlu0 %394, %v76
    %v396 = vpop.permute.xlu0 %395
    %399 = vset.pattern.permute.xlu0 0
    %400 = vperm.xlu0 %399, %v77
    %v401 = vpop.permute.xlu0 %400
    %404 = vset.pattern.permute.xlu0 0
    %405 = vperm.xlu0 %404, %v78
    %v406 = vpop.permute.xlu0 %405
    %409 = vset.pattern.permute.xlu0 0
    %410 = vperm.xlu0 %409, %v79
    %v411 = vpop.permute.xlu0 %410
    %414 = vset.pattern.permute.xlu0 0
    %415 = vperm.xlu0 %414, %v80
    %v416 = vpop.permute.xlu0 %415
    %419 = vset.pattern.permute.xlu0 0
    %420 = vperm.xlu0 %419, %v81
    %v421 = vpop.permute.xlu0 %420
    %424 = vset.pattern.permute.xlu0 0
    %425 = vperm.xlu0 %424, %v82
    %v426 = vpop.permute.xlu0 %425
    %429 = vset.pattern.permute.xlu0 0
    %430 = vperm.xlu0 %429, %v83
    %v431 = vpop.permute.xlu0 %430
    %434 = vset.pattern.permute.xlu0 0
    %435 = vperm.xlu0 %434, %v84
    %v436 = vpop.permute.xlu0 %435
    %439 = vset.pattern.permute.xlu0 0
    %440 = vperm.xlu0 %439, %v85
    %v441 = vpop.permute.xlu0 %440
    %444 = vset.pattern.permute.xlu0 0
    %445 = vperm.xlu0 %444, %v86
    %v446 = vpop.permute.xlu0 %445
    %449 = vset.pattern.permute.xlu0 0
    %450 = vperm.xlu0 %449, %v87
    %v451 = vpop.permute.xlu0 %450
    %454 = vset.pattern.permute.xlu0 0
    %455 = vperm.xlu0 %454, %v88
    %v456 = vpop.permute.xlu0 %455
    %459 = vset.pattern.permute.xlu0 0
    %460 = vperm.xlu0 %459, %v89
    %v461 = vpop.permute.xlu0 %460
    %464 = vset.pattern.permute.xlu0 0
    %465 = vperm.xlu0 %464, %v90
    %v466 = vpop.permute.xlu0 %465
    %469 = vset.pattern.permute.xlu0 0
    %470 = vperm.xlu0 %469, %v91
    %v471 = vpop.permute.xlu0 %470
    %474 = vset.pattern.permute.xlu0 0
    %475 = vperm.xlu0 %474, %v92
    %v476 = vpop.permute.xlu0 %475
    %479 = vset.pattern.permute.xlu0 0
    %480 = vperm.xlu0 %479, %v93
    %v481 = vpop.permute.xlu0 %480
    %484 = vset.pattern.permute.xlu0 0
    %485 = vperm.xlu0 %484, %v94
    %v486 = vpop.permute.xlu0 %485
    %489 = vset.pattern.permute.xlu0 0
    %490 = vperm.xlu0 %489, %v95
    %v491 = vpop.permute.xlu0 %490
    %494 = vset.pattern.permute.xlu0 0
    %495 = vperm.xlu0 %494, %v96
    %v496 = vpop.permute.xlu0 %495
    %499 = vset.pattern.permute.xlu0 0
    %500 = vperm.xlu0 %499, %v97
    %v501 = vpop.permute.xlu0 %500
    %504 = vset.pattern.permute.xlu0 0
    %505 = vperm.xlu0 %504, %v98
    %v506 = vpop.permute.xlu0 %505
    %509 = vset.pattern.permute.xlu0 0
    %510 = vperm.xlu0 %509, %v99
    %v511 = vpop.permute.xlu0 %510
    %514 = vset.pattern.permute.xlu0 0
    %515 = vperm.xlu0 %514, %v100
    %v516 = vpop.permute.xlu0 %515
    %519 = vset.pattern.permute.xlu0 0
    %520 = vperm.xlu0 %519, %v101
    %v521 = vpop.permute.xlu0 %520
    %524 = vset.pattern.permute.xlu0 0
    %525 = vperm.xlu0 %524, %v102
    %v526 = vpop.permute.xlu0 %525
    %529 = vset.pattern.permute.xlu0 0
    %530 = vperm.xlu0 %529, %v103
    %v531 = vpop.permute.xlu0 %530
    %534 = vset.pattern.permute.xlu0 0
    %535 = vperm.xlu0 %534, %v104
    %v536 = vpop.permute.xlu0 %535
    %539 = vset.pattern.permute.xlu0 0
    %540 = vperm.xlu0 %539, %v105
    %v541 = vpop.permute.xlu0 %540
    %544 = vset.pattern.permute.xlu0 0
    %545 = vperm.xlu0 %544, %v106
    %v546 = vpop.permute.xlu0 %545
    %549 = vset.pattern.permute.xlu0 0
    %550 = vperm.xlu0 %549, %v107
    %v551 = vpop.permute.xlu0 %550
    %554 = vset.pattern.permute.xlu0 0
    %555 = vperm.xlu0 %554, %v108
    %v556 = vpop.permute.xlu0 %555
    %559 = vset.pattern.permute.xlu0 0
    %560 = vperm.xlu0 %559, %v109
    %v561 = vpop.permute.xlu0 %560
    %564 = vset.pattern.permute.xlu0 0
    %565 = vperm.xlu0 %564, %v110
    %v566 = vpop.permute.xlu0 %565
    %569 = vset.pattern.permute.xlu0 0
    %570 = vperm.xlu0 %569, %v111
    %v571 = vpop.permute.xlu0 %570
    %574 = vset.pattern.permute.xlu0 0
    %575 = vperm.xlu0 %574, %v112
    %v576 = vpop.permute.xlu0 %575
    %579 = vset.pattern.permute.xlu0 0
    %580 = vperm.xlu0 %579, %v113
    %v581 = vpop.permute.xlu0 %580
    %584 = vset.pattern.permute.xlu0 0
    %585 = vperm.xlu0 %584, %v114
    %v586 = vpop.permute.xlu0 %585
    %589 = vset.pattern.permute.xlu0 0
    %590 = vperm.xlu0 %589, %v115
    %v591 = vpop.permute.xlu0 %590
    %594 = vset.pattern.permute.xlu0 0
    %595 = vperm.xlu0 %594, %v116
    %v596 = vpop.permute.xlu0 %595
    %599 = vset.pattern.permute.xlu0 0
    %600 = vperm.xlu0 %599, %v117
    %v601 = vpop.permute.xlu0 %600
    %604 = vset.pattern.permute.xlu0 0
    %605 = vperm.xlu0 %604, %v118
    %v606 = vpop.permute.xlu0 %605
    %609 = vset.pattern.permute.xlu0 0
    %610 = vperm.xlu0 %609, %v119
    %v611 = vpop.permute.xlu0 %610
    %614 = vset.pattern.permute.xlu0 0
    %615 = vperm.xlu0 %614, %v120
    %v616 = vpop.permute.xlu0 %615
    %619 = vset.pattern.permute.xlu0 0
    %620 = vperm.xlu0 %619, %v121
    %v621 = vpop.permute.xlu0 %620
    %624 = vset.pattern.permute.xlu0 0
    %625 = vperm.xlu0 %624, %v122
    %v626 = vpop.permute.xlu0 %625
    %629 = vset.pattern.permute.xlu0 0
    %630 = vperm.xlu0 %629, %v123
    %v631 = vpop.permute.xlu0 %630
    %634 = vset.pattern.permute.xlu0 0
    %635 = vperm.xlu0 %634, %v124
    %v636 = vpop.permute.xlu0 %635
    %639 = vset.pattern.permute.xlu0 0
    %640 = vperm.xlu0 %639, %v125
    %v641 = vpop.permute.xlu0 %640
    %644 = vset.pattern.permute.xlu0 0
    %645 = vperm.xlu0 %644, %v126
    %v646 = vpop.permute.xlu0 %645
    %649 = vset.pattern.permute.xlu0 0
    %650 = vperm.xlu0 %649, %v127
    %v651 = vpop.permute.xlu0 %650
    %654 = vset.pattern.permute.xlu0 0
    %655 = vperm.xlu0 %654, %v128
    %v656 = vpop.permute.xlu0 %655
    %659 = vset.pattern.permute.xlu0 0
    %660 = vperm.xlu0 %659, %v129
    %v661 = vpop.permute.xlu0 %660
    %664 = vset.pattern.permute.xlu0 0
    %665 = vperm.xlu0 %664, %v130
    %v666 = vpop.permute.xlu0 %665
    %669 = vset.pattern.permute.xlu0 0
    %670 = vperm.xlu0 %669, %v131
    %v671 = vpop.permute.xlu0 %670
    %v673 = vlaneseq
    %v674 = vshrl.u32 %v673, 7
    %v675 = vsub.s32 0, %v674
    %v676 = vrot.slane %v132, %v675
    %v677 = vmul.f32 %v136, %v676
    %v678 = vmul.f32 %v141, %v676
    %v679 = vmul.f32 %v146, %v676
    %v680 = vmul.f32 %v151, %v676
    %v681 = vmul.f32 %v156, %v676
    %v682 = vmul.f32 %v161, %v676
    %v683 = vmul.f32 %v166, %v676
    %v684 = vmul.f32 %v171, %v676
    %v685 = vmul.f32 %v176, %v676
    %v686 = vmul.f32 %v181, %v676
    %v687 = vmul.f32 %v186, %v676
    %v688 = vmul.f32 %v191, %v676
    %v689 = vmul.f32 %v196, %v676
    %v690 = vmul.f32 %v201, %v676
    %v691 = vmul.f32 %v206, %v676
    %v692 = vmul.f32 %v211, %v676
    %v693 = vmul.f32 %v216, %v676
    %v694 = vmul.f32 %v221, %v676
    %v695 = vmul.f32 %v226, %v676
    %v696 = vmul.f32 %v231, %v676
    %v697 = vmul.f32 %v236, %v676
    %v698 = vmul.f32 %v241, %v676
    %v699 = vmul.f32 %v246, %v676
    %v700 = vmul.f32 %v251, %v676
    %v701 = vmul.f32 %v256, %v676
    %v702 = vmul.f32 %v261, %v676
    %v703 = vmul.f32 %v266, %v676
    %v704 = vmul.f32 %v271, %v676
    %v705 = vmul.f32 %v276, %v676
    %v706 = vmul.f32 %v281, %v676
    %v707 = vmul.f32 %v286, %v676
    %v708 = vmul.f32 %v291, %v676
    %v709 = vmul.f32 %v296, %v676
    %v710 = vmul.f32 %v301, %v676
    %v711 = vmul.f32 %v306, %v676
    %v712 = vmul.f32 %v311, %v676
    %v713 = vmul.f32 %v316, %v676
    %v714 = vmul.f32 %v321, %v676
    %v715 = vmul.f32 %v326, %v676
    %v716 = vmul.f32 %v331, %v676
    %v717 = vmul.f32 %v336, %v676
    %v718 = vmul.f32 %v341, %v676
    %v719 = vmul.f32 %v346, %v676
    %v720 = vmul.f32 %v351, %v676
    %v721 = vmul.f32 %v356, %v676
    %v722 = vmul.f32 %v361, %v676
    %v723 = vmul.f32 %v366, %v676
    %v724 = vmul.f32 %v371, %v676
    %v725 = vmul.f32 %v376, %v676
    %v726 = vmul.f32 %v381, %v676
    %v727 = vmul.f32 %v386, %v676
    %v728 = vmul.f32 %v391, %v676
    %v729 = vmul.f32 %v396, %v676
    %v730 = vmul.f32 %v401, %v676
    %v731 = vmul.f32 %v406, %v676
    %v732 = vmul.f32 %v411, %v676
    %v733 = vmul.f32 %v416, %v676
    %v734 = vmul.f32 %v421, %v676
    %v735 = vmul.f32 %v426, %v676
    %v736 = vmul.f32 %v431, %v676
    %v737 = vmul.f32 %v436, %v676
    %v738 = vmul.f32 %v441, %v676
    %v739 = vmul.f32 %v446, %v676
    %v740 = vmul.f32 %v451, %v676
    %v741 = vmul.f32 %v456, %v676
    %v742 = vmul.f32 %v461, %v676
    %v743 = vmul.f32 %v466, %v676
    %v744 = vmul.f32 %v471, %v676
    %v745 = vmul.f32 %v476, %v676
    %v746 = vmul.f32 %v481, %v676
    %v747 = vmul.f32 %v486, %v676
    %v748 = vmul.f32 %v491, %v676
    %v749 = vmul.f32 %v496, %v676
    %v750 = vmul.f32 %v501, %v676
    %v751 = vmul.f32 %v506, %v676
    %v752 = vmul.f32 %v511, %v676
    %v753 = vmul.f32 %v516, %v676
    %v754 = vmul.f32 %v521, %v676
    %v755 = vmul.f32 %v526, %v676
    %v756 = vmul.f32 %v531, %v676
    %v757 = vmul.f32 %v536, %v676
    %v758 = vmul.f32 %v541, %v676
    %v759 = vmul.f32 %v546, %v676
    %v760 = vmul.f32 %v551, %v676
    %v761 = vmul.f32 %v556, %v676
    %v762 = vmul.f32 %v561, %v676
    %v763 = vmul.f32 %v566, %v676
    %v764 = vmul.f32 %v571, %v676
    %v765 = vmul.f32 %v576, %v676
    %v766 = vmul.f32 %v581, %v676
    %v767 = vmul.f32 %v586, %v676
    %v768 = vmul.f32 %v591, %v676
    %v769 = vmul.f32 %v596, %v676
    %v770 = vmul.f32 %v601, %v676
    %v771 = vmul.f32 %v606, %v676
    %v772 = vmul.f32 %v611, %v676
    %v773 = vmul.f32 %v616, %v676
    %v774 = vmul.f32 %v621, %v676
    %v775 = vmul.f32 %v626, %v676
    %v776 = vmul.f32 %v631, %v676
    %v777 = vmul.f32 %v636, %v676
    %v778 = vmul.f32 %v641, %v676
    %v779 = vmul.f32 %v646, %v676
    %v780 = vmul.f32 %v651, %v676
    %v781 = vmul.f32 %v656, %v676
    %v782 = vmul.f32 %v661, %v676
    %v783 = vmul.f32 %v666, %v676
    %v784 = vmul.f32 %v671, %v676
    %785 = vset.pattern.permute.xlu0 1
    %786 = vperm.xlu0 %785, %v24
    %v787 = vpop.permute.xlu0 %786
    %789 = vset.pattern.permute.xlu0 1
    %790 = vperm.xlu0 %789, %v25
    %v791 = vpop.permute.xlu0 %790
    %793 = vset.pattern.permute.xlu0 1
    %794 = vperm.xlu0 %793, %v26
    %v795 = vpop.permute.xlu0 %794
    %797 = vset.pattern.permute.xlu0 1
    %798 = vperm.xlu0 %797, %v27
    %v799 = vpop.permute.xlu0 %798
    %801 = vset.pattern.permute.xlu0 1
    %802 = vperm.xlu0 %801, %v28
    %v803 = vpop.permute.xlu0 %802
    %805 = vset.pattern.permute.xlu0 1
    %806 = vperm.xlu0 %805, %v29
    %v807 = vpop.permute.xlu0 %806
    %809 = vset.pattern.permute.xlu0 1
    %810 = vperm.xlu0 %809, %v30
    %v811 = vpop.permute.xlu0 %810
    %813 = vset.pattern.permute.xlu0 1
    %814 = vperm.xlu0 %813, %v31
    %v815 = vpop.permute.xlu0 %814
    %817 = vset.pattern.permute.xlu0 1
    %818 = vperm.xlu0 %817, %v32
    %v819 = vpop.permute.xlu0 %818
    %821 = vset.pattern.permute.xlu0 1
    %822 = vperm.xlu0 %821, %v33
    %v823 = vpop.permute.xlu0 %822
    %825 = vset.pattern.permute.xlu0 1
    %826 = vperm.xlu0 %825, %v34
    %v827 = vpop.permute.xlu0 %826
    %829 = vset.pattern.permute.xlu0 1
    %830 = vperm.xlu0 %829, %v35
    %v831 = vpop.permute.xlu0 %830
    %833 = vset.pattern.permute.xlu0 1
    %834 = vperm.xlu0 %833, %v36
    %v835 = vpop.permute.xlu0 %834
    %837 = vset.pattern.permute.xlu0 1
    %838 = vperm.xlu0 %837, %v37
    %v839 = vpop.permute.xlu0 %838
    %841 = vset.pattern.permute.xlu0 1
    %842 = vperm.xlu0 %841, %v38
    %v843 = vpop.permute.xlu0 %842
    %845 = vset.pattern.permute.xlu0 1
    %846 = vperm.xlu0 %845, %v39
    %v847 = vpop.permute.xlu0 %846
    %849 = vset.pattern.permute.xlu0 1
    %850 = vperm.xlu0 %849, %v40
    %v851 = vpop.permute.xlu0 %850
    %853 = vset.pattern.permute.xlu0 1
    %854 = vperm.xlu0 %853, %v41
    %v855 = vpop.permute.xlu0 %854
    %857 = vset.pattern.permute.xlu0 1
    %858 = vperm.xlu0 %857, %v42
    %v859 = vpop.permute.xlu0 %858
    %861 = vset.pattern.permute.xlu0 1
    %862 = vperm.xlu0 %861, %v43
    %v863 = vpop.permute.xlu0 %862
    %865 = vset.pattern.permute.xlu0 1
    %866 = vperm.xlu0 %865, %v44
    %v867 = vpop.permute.xlu0 %866
    %869 = vset.pattern.permute.xlu0 1
    %870 = vperm.xlu0 %869, %v45
    %v871 = vpop.permute.xlu0 %870
    %873 = vset.pattern.permute.xlu0 1
    %874 = vperm.xlu0 %873, %v46
    %v875 = vpop.permute.xlu0 %874
    %877 = vset.pattern.permute.xlu0 1
    %878 = vperm.xlu0 %877, %v47
    %v879 = vpop.permute.xlu0 %878
    %881 = vset.pattern.permute.xlu0 1
    %882 = vperm.xlu0 %881, %v48
    %v883 = vpop.permute.xlu0 %882
    %885 = vset.pattern.permute.xlu0 1
    %886 = vperm.xlu0 %885, %v49
    %v887 = vpop.permute.xlu0 %886
    %889 = vset.pattern.permute.xlu0 1
    %890 = vperm.xlu0 %889, %v50
    %v891 = vpop.permute.xlu0 %890
    %893 = vset.pattern.permute.xlu0 1
    %894 = vperm.xlu0 %893, %v51
    %v895 = vpop.permute.xlu0 %894
    %897 = vset.pattern.permute.xlu0 1
    %898 = vperm.xlu0 %897, %v52
    %v899 = vpop.permute.xlu0 %898
    %901 = vset.pattern.permute.xlu0 1
    %902 = vperm.xlu0 %901, %v53
    %v903 = vpop.permute.xlu0 %902
    %905 = vset.pattern.permute.xlu0 1
    %906 = vperm.xlu0 %905, %v54
    %v907 = vpop.permute.xlu0 %906
    %909 = vset.pattern.permute.xlu0 1
    %910 = vperm.xlu0 %909, %v55
    %v911 = vpop.permute.xlu0 %910
    %913 = vset.pattern.permute.xlu0 1
    %914 = vperm.xlu0 %913, %v56
    %v915 = vpop.permute.xlu0 %914
    %917 = vset.pattern.permute.xlu0 1
    %918 = vperm.xlu0 %917, %v57
    %v919 = vpop.permute.xlu0 %918
    %921 = vset.pattern.permute.xlu0 1
    %922 = vperm.xlu0 %921, %v58
    %v923 = vpop.permute.xlu0 %922
    %925 = vset.pattern.permute.xlu0 1
    %926 = vperm.xlu0 %925, %v59
    %v927 = vpop.permute.xlu0 %926
    %929 = vset.pattern.permute.xlu0 1
    %930 = vperm.xlu0 %929, %v60
    %v931 = vpop.permute.xlu0 %930
    %933 = vset.pattern.permute.xlu0 1
    %934 = vperm.xlu0 %933, %v61
    %v935 = vpop.permute.xlu0 %934
    %937 = vset.pattern.permute.xlu0 1
    %938 = vperm.xlu0 %937, %v62
    %v939 = vpop.permute.xlu0 %938
    %941 = vset.pattern.permute.xlu0 1
    %942 = vperm.xlu0 %941, %v63
    %v943 = vpop.permute.xlu0 %942
    %945 = vset.pattern.permute.xlu0 1
    %946 = vperm.xlu0 %945, %v64
    %v947 = vpop.permute.xlu0 %946
    %949 = vset.pattern.permute.xlu0 1
    %950 = vperm.xlu0 %949, %v65
    %v951 = vpop.permute.xlu0 %950
    %953 = vset.pattern.permute.xlu0 1
    %954 = vperm.xlu0 %953, %v66
    %v955 = vpop.permute.xlu0 %954
    %957 = vset.pattern.permute.xlu0 1
    %958 = vperm.xlu0 %957, %v67
    %v959 = vpop.permute.xlu0 %958
    %961 = vset.pattern.permute.xlu0 1
    %962 = vperm.xlu0 %961, %v68
    %v963 = vpop.permute.xlu0 %962
    %965 = vset.pattern.permute.xlu0 1
    %966 = vperm.xlu0 %965, %v69
    %v967 = vpop.permute.xlu0 %966
    %969 = vset.pattern.permute.xlu0 1
    %970 = vperm.xlu0 %969, %v70
    %v971 = vpop.permute.xlu0 %970
    %973 = vset.pattern.permute.xlu0 1
    %974 = vperm.xlu0 %973, %v71
    %v975 = vpop.permute.xlu0 %974
    %977 = vset.pattern.permute.xlu0 1
    %978 = vperm.xlu0 %977, %v72
    %v979 = vpop.permute.xlu0 %978
    %981 = vset.pattern.permute.xlu0 1
    %982 = vperm.xlu0 %981, %v73
    %v983 = vpop.permute.xlu0 %982
    %985 = vset.pattern.permute.xlu0 1
    %986 = vperm.xlu0 %985, %v74
    %v987 = vpop.permute.xlu0 %986
    %989 = vset.pattern.permute.xlu0 1
    %990 = vperm.xlu0 %989, %v75
    %v991 = vpop.permute.xlu0 %990
    %993 = vset.pattern.permute.xlu0 1
    %994 = vperm.xlu0 %993, %v76
    %v995 = vpop.permute.xlu0 %994
    %997 = vset.pattern.permute.xlu0 1
    %998 = vperm.xlu0 %997, %v77
    %v999 = vpop.permute.xlu0 %998
    %1001 = vset.pattern.permute.xlu0 1
    %1002 = vperm.xlu0 %1001, %v78
    %v1003 = vpop.permute.xlu0 %1002
    %1005 = vset.pattern.permute.xlu0 1
    %1006 = vperm.xlu0 %1005, %v79
    %v1007 = vpop.permute.xlu0 %1006
    %1009 = vset.pattern.permute.xlu0 1
    %1010 = vperm.xlu0 %1009, %v80
    %v1011 = vpop.permute.xlu0 %1010
    %1013 = vset.pattern.permute.xlu0 1
    %1014 = vperm.xlu0 %1013, %v81
    %v1015 = vpop.permute.xlu0 %1014
    %1017 = vset.pattern.permute.xlu0 1
    %1018 = vperm.xlu0 %1017, %v82
    %v1019 = vpop.permute.xlu0 %1018
    %1021 = vset.pattern.permute.xlu0 1
    %1022 = vperm.xlu0 %1021, %v83
    %v1023 = vpop.permute.xlu0 %1022
    %1025 = vset.pattern.permute.xlu0 1
    %1026 = vperm.xlu0 %1025, %v84
    %v1027 = vpop.permute.xlu0 %1026
    %1029 = vset.pattern.permute.xlu0 1
    %1030 = vperm.xlu0 %1029, %v85
    %v1031 = vpop.permute.xlu0 %1030
    %1033 = vset.pattern.permute.xlu0 1
    %1034 = vperm.xlu0 %1033, %v86
    %v1035 = vpop.permute.xlu0 %1034
    %1037 = vset.pattern.permute.xlu0 1
    %1038 = vperm.xlu0 %1037, %v87
    %v1039 = vpop.permute.xlu0 %1038
    %1041 = vset.pattern.permute.xlu0 1
    %1042 = vperm.xlu0 %1041, %v88
    %v1043 = vpop.permute.xlu0 %1042
    %1045 = vset.pattern.permute.xlu0 1
    %1046 = vperm.xlu0 %1045, %v89
    %v1047 = vpop.permute.xlu0 %1046
    %1049 = vset.pattern.permute.xlu0 1
    %1050 = vperm.xlu0 %1049, %v90
    %v1051 = vpop.permute.xlu0 %1050
    %1053 = vset.pattern.permute.xlu0 1
    %1054 = vperm.xlu0 %1053, %v91
    %v1055 = vpop.permute.xlu0 %1054
    %1057 = vset.pattern.permute.xlu0 1
    %1058 = vperm.xlu0 %1057, %v92
    %v1059 = vpop.permute.xlu0 %1058
    %1061 = vset.pattern.permute.xlu0 1
    %1062 = vperm.xlu0 %1061, %v93
    %v1063 = vpop.permute.xlu0 %1062
    %1065 = vset.pattern.permute.xlu0 1
    %1066 = vperm.xlu0 %1065, %v94
    %v1067 = vpop.permute.xlu0 %1066
    %1069 = vset.pattern.permute.xlu0 1
    %1070 = vperm.xlu0 %1069, %v95
    %v1071 = vpop.permute.xlu0 %1070
    %1073 = vset.pattern.permute.xlu0 1
    %1074 = vperm.xlu0 %1073, %v96
    %v1075 = vpop.permute.xlu0 %1074
    %1077 = vset.pattern.permute.xlu0 1
    %1078 = vperm.xlu0 %1077, %v97
    %v1079 = vpop.permute.xlu0 %1078
    %1081 = vset.pattern.permute.xlu0 1
    %1082 = vperm.xlu0 %1081, %v98
    %v1083 = vpop.permute.xlu0 %1082
    %1085 = vset.pattern.permute.xlu0 1
    %1086 = vperm.xlu0 %1085, %v99
    %v1087 = vpop.permute.xlu0 %1086
    %1089 = vset.pattern.permute.xlu0 1
    %1090 = vperm.xlu0 %1089, %v100
    %v1091 = vpop.permute.xlu0 %1090
    %1093 = vset.pattern.permute.xlu0 1
    %1094 = vperm.xlu0 %1093, %v101
    %v1095 = vpop.permute.xlu0 %1094
    %1097 = vset.pattern.permute.xlu0 1
    %1098 = vperm.xlu0 %1097, %v102
    %v1099 = vpop.permute.xlu0 %1098
    %1101 = vset.pattern.permute.xlu0 1
    %1102 = vperm.xlu0 %1101, %v103
    %v1103 = vpop.permute.xlu0 %1102
    %1105 = vset.pattern.permute.xlu0 1
    %1106 = vperm.xlu0 %1105, %v104
    %v1107 = vpop.permute.xlu0 %1106
    %1109 = vset.pattern.permute.xlu0 1
    %1110 = vperm.xlu0 %1109, %v105
    %v1111 = vpop.permute.xlu0 %1110
    %1113 = vset.pattern.permute.xlu0 1
    %1114 = vperm.xlu0 %1113, %v106
    %v1115 = vpop.permute.xlu0 %1114
    %1117 = vset.pattern.permute.xlu0 1
    %1118 = vperm.xlu0 %1117, %v107
    %v1119 = vpop.permute.xlu0 %1118
    %1121 = vset.pattern.permute.xlu0 1
    %1122 = vperm.xlu0 %1121, %v108
    %v1123 = vpop.permute.xlu0 %1122
    %1125 = vset.pattern.permute.xlu0 1
    %1126 = vperm.xlu0 %1125, %v109
    %v1127 = vpop.permute.xlu0 %1126
    %1129 = vset.pattern.permute.xlu0 1
    %1130 = vperm.xlu0 %1129, %v110
    %v1131 = vpop.permute.xlu0 %1130
    %1133 = vset.pattern.permute.xlu0 1
    %1134 = vperm.xlu0 %1133, %v111
    %v1135 = vpop.permute.xlu0 %1134
    %1137 = vset.pattern.permute.xlu0 1
    %1138 = vperm.xlu0 %1137, %v112
    %v1139 = vpop.permute.xlu0 %1138
    %1141 = vset.pattern.permute.xlu0 1
    %1142 = vperm.xlu0 %1141, %v113
    %v1143 = vpop.permute.xlu0 %1142
    %1145 = vset.pattern.permute.xlu0 1
    %1146 = vperm.xlu0 %1145, %v114
    %v1147 = vpop.permute.xlu0 %1146
    %1149 = vset.pattern.permute.xlu0 1
    %1150 = vperm.xlu0 %1149, %v115
    %v1151 = vpop.permute.xlu0 %1150
    %1153 = vset.pattern.permute.xlu0 1
    %1154 = vperm.xlu0 %1153, %v116
    %v1155 = vpop.permute.xlu0 %1154
    %1157 = vset.pattern.permute.xlu0 1
    %1158 = vperm.xlu0 %1157, %v117
    %v1159 = vpop.permute.xlu0 %1158
    %1161 = vset.pattern.permute.xlu0 1
    %1162 = vperm.xlu0 %1161, %v118
    %v1163 = vpop.permute.xlu0 %1162
    %1165 = vset.pattern.permute.xlu0 1
    %1166 = vperm.xlu0 %1165, %v119
    %v1167 = vpop.permute.xlu0 %1166
    %1169 = vset.pattern.permute.xlu0 1
    %1170 = vperm.xlu0 %1169, %v120
    %v1171 = vpop.permute.xlu0 %1170
    %1173 = vset.pattern.permute.xlu0 1
    %1174 = vperm.xlu0 %1173, %v121
    %v1175 = vpop.permute.xlu0 %1174
    %1177 = vset.pattern.permute.xlu0 1
    %1178 = vperm.xlu0 %1177, %v122
    %v1179 = vpop.permute.xlu0 %1178
    %1181 = vset.pattern.permute.xlu0 1
    %1182 = vperm.xlu0 %1181, %v123
    %v1183 = vpop.permute.xlu0 %1182
    %1185 = vset.pattern.permute.xlu0 1
    %1186 = vperm.xlu0 %1185, %v124
    %v1187 = vpop.permute.xlu0 %1186
    %1189 = vset.pattern.permute.xlu0 1
    %1190 = vperm.xlu0 %1189, %v125
    %v1191 = vpop.permute.xlu0 %1190
    %1193 = vset.pattern.permute.xlu0 1
    %1194 = vperm.xlu0 %1193, %v126
    %v1195 = vpop.permute.xlu0 %1194
    %1197 = vset.pattern.permute.xlu0 1
    %1198 = vperm.xlu0 %1197, %v127
    %v1199 = vpop.permute.xlu0 %1198
    %1201 = vset.pattern.permute.xlu0 1
    %1202 = vperm.xlu0 %1201, %v128
    %v1203 = vpop.permute.xlu0 %1202
    %1205 = vset.pattern.permute.xlu0 1
    %1206 = vperm.xlu0 %1205, %v129
    %v1207 = vpop.permute.xlu0 %1206
    %1209 = vset.pattern.permute.xlu0 1
    %1210 = vperm.xlu0 %1209, %v130
    %v1211 = vpop.permute.xlu0 %1210
    %1213 = vset.pattern.permute.xlu0 1
    %1214 = vperm.xlu0 %1213, %v131
    %v1215 = vpop.permute.xlu0 %1214
    %v1217 = vlaneseq
    %v1218 = vshrl.u32 %v1217, 7
    %v1219 = vsub.s32 1, %v1218
    %v1220 = vrot.slane %v132, %v1219
    %v1221 = vmul.f32 %v787, %v1220
    %v1222 = vmul.f32 %v791, %v1220
    %v1223 = vmul.f32 %v795, %v1220
    %v1224 = vmul.f32 %v799, %v1220
    %v1225 = vmul.f32 %v803, %v1220
    %v1226 = vmul.f32 %v807, %v1220
    %v1227 = vmul.f32 %v811, %v1220
    %v1228 = vmul.f32 %v815, %v1220
    %v1229 = vmul.f32 %v819, %v1220
    %v1230 = vmul.f32 %v823, %v1220
    %v1231 = vmul.f32 %v827, %v1220
    %v1232 = vmul.f32 %v831, %v1220
    %v1233 = vmul.f32 %v835, %v1220
    %v1234 = vmul.f32 %v839, %v1220
    %v1235 = vmul.f32 %v843, %v1220
    %v1236 = vmul.f32 %v847, %v1220
    %v1237 = vmul.f32 %v851, %v1220
    %v1238 = vmul.f32 %v855, %v1220
    %v1239 = vmul.f32 %v859, %v1220
    %v1240 = vmul.f32 %v863, %v1220
    %v1241 = vmul.f32 %v867, %v1220
    %v1242 = vmul.f32 %v871, %v1220
    %v1243 = vmul.f32 %v875, %v1220
    %v1244 = vmul.f32 %v879, %v1220
    %v1245 = vmul.f32 %v883, %v1220
    %v1246 = vmul.f32 %v887, %v1220
    %v1247 = vmul.f32 %v891, %v1220
    %v1248 = vmul.f32 %v895, %v1220
    %v1249 = vmul.f32 %v899, %v1220
    %v1250 = vmul.f32 %v903, %v1220
    %v1251 = vmul.f32 %v907, %v1220
    %v1252 = vmul.f32 %v911, %v1220
    %v1253 = vmul.f32 %v915, %v1220
    %v1254 = vmul.f32 %v919, %v1220
    %v1255 = vmul.f32 %v923, %v1220
    %v1256 = vmul.f32 %v927, %v1220
    %v1257 = vmul.f32 %v931, %v1220
    %v1258 = vmul.f32 %v935, %v1220
    %v1259 = vmul.f32 %v939, %v1220
    %v1260 = vmul.f32 %v943, %v1220
    %v1261 = vmul.f32 %v947, %v1220
    %v1262 = vmul.f32 %v951, %v1220
    %v1263 = vmul.f32 %v955, %v1220
    %v1264 = vmul.f32 %v959, %v1220
    %v1265 = vmul.f32 %v963, %v1220
    %v1266 = vmul.f32 %v967, %v1220
    %v1267 = vmul.f32 %v971, %v1220
    %v1268 = vmul.f32 %v975, %v1220
    %v1269 = vmul.f32 %v979, %v1220
    %v1270 = vmul.f32 %v983, %v1220
    %v1271 = vmul.f32 %v987, %v1220
    %v1272 = vmul.f32 %v991, %v1220
    %v1273 = vmul.f32 %v995, %v1220
    %v1274 = vmul.f32 %v999, %v1220
    %v1275 = vmul.f32 %v1003, %v1220
    %v1276 = vmul.f32 %v1007, %v1220
    %v1277 = vmul.f32 %v1011, %v1220
    %v1278 = vmul.f32 %v1015, %v1220
    %v1279 = vmul.f32 %v1019, %v1220
    %v1280 = vmul.f32 %v1023, %v1220
    %v1281 = vmul.f32 %v1027, %v1220
    %v1282 = vmul.f32 %v1031, %v1220
    %v1283 = vmul.f32 %v1035, %v1220
    %v1284 = vmul.f32 %v1039, %v1220
    %v1285 = vmul.f32 %v1043, %v1220
    %v1286 = vmul.f32 %v1047, %v1220
    %v1287 = vmul.f32 %v1051, %v1220
    %v1288 = vmul.f32 %v1055, %v1220
    %v1289 = vmul.f32 %v1059, %v1220
    %v1290 = vmul.f32 %v1063, %v1220
    %v1291 = vmul.f32 %v1067, %v1220
    %v1292 = vmul.f32 %v1071, %v1220
    %v1293 = vmul.f32 %v1075, %v1220
    %v1294 = vmul.f32 %v1079, %v1220
    %v1295 = vmul.f32 %v1083, %v1220
    %v1296 = vmul.f32 %v1087, %v1220
    %v1297 = vmul.f32 %v1091, %v1220
    %v1298 = vmul.f32 %v1095, %v1220
    %v1299 = vmul.f32 %v1099, %v1220
    %v1300 = vmul.f32 %v1103, %v1220
    %v1301 = vmul.f32 %v1107, %v1220
    %v1302 = vmul.f32 %v1111, %v1220
    %v1303 = vmul.f32 %v1115, %v1220
    %v1304 = vmul.f32 %v1119, %v1220
    %v1305 = vmul.f32 %v1123, %v1220
    %v1306 = vmul.f32 %v1127, %v1220
    %v1307 = vmul.f32 %v1131, %v1220
    %v1308 = vmul.f32 %v1135, %v1220
    %v1309 = vmul.f32 %v1139, %v1220
    %v1310 = vmul.f32 %v1143, %v1220
    %v1311 = vmul.f32 %v1147, %v1220
    %v1312 = vmul.f32 %v1151, %v1220
    %v1313 = vmul.f32 %v1155, %v1220
    %v1314 = vmul.f32 %v1159, %v1220
    %v1315 = vmul.f32 %v1163, %v1220
    %v1316 = vmul.f32 %v1167, %v1220
    %v1317 = vmul.f32 %v1171, %v1220
    %v1318 = vmul.f32 %v1175, %v1220
    %v1319 = vmul.f32 %v1179, %v1220
    %v1320 = vmul.f32 %v1183, %v1220
    %v1321 = vmul.f32 %v1187, %v1220
    %v1322 = vmul.f32 %v1191, %v1220
    %v1323 = vmul.f32 %v1195, %v1220
    %v1324 = vmul.f32 %v1199, %v1220
    %v1325 = vmul.f32 %v1203, %v1220
    %v1326 = vmul.f32 %v1207, %v1220
    %v1327 = vmul.f32 %v1211, %v1220
    %v1328 = vmul.f32 %v1215, %v1220
    %v1329 = vadd.f32 %v677, %v1221
    %v1330 = vadd.f32 %v678, %v1222
    %v1331 = vadd.f32 %v679, %v1223
    %v1332 = vadd.f32 %v680, %v1224
    %v1333 = vadd.f32 %v681, %v1225
    %v1334 = vadd.f32 %v682, %v1226
    %v1335 = vadd.f32 %v683, %v1227
    %v1336 = vadd.f32 %v684, %v1228
    %v1337 = vadd.f32 %v685, %v1229
    %v1338 = vadd.f32 %v686, %v1230
    %v1339 = vadd.f32 %v687, %v1231
    %v1340 = vadd.f32 %v688, %v1232
    %v1341 = vadd.f32 %v689, %v1233
    %v1342 = vadd.f32 %v690, %v1234
    %v1343 = vadd.f32 %v691, %v1235
    %v1344 = vadd.f32 %v692, %v1236
    %v1345 = vadd.f32 %v693, %v1237
    %v1346 = vadd.f32 %v694, %v1238
    %v1347 = vadd.f32 %v695, %v1239
    %v1348 = vadd.f32 %v696, %v1240
    %v1349 = vadd.f32 %v697, %v1241
    %v1350 = vadd.f32 %v698, %v1242
    %v1351 = vadd.f32 %v699, %v1243
    %v1352 = vadd.f32 %v700, %v1244
    %v1353 = vadd.f32 %v701, %v1245
    %v1354 = vadd.f32 %v702, %v1246
    %v1355 = vadd.f32 %v703, %v1247
    %v1356 = vadd.f32 %v704, %v1248
    %v1357 = vadd.f32 %v705, %v1249
    %v1358 = vadd.f32 %v706, %v1250
    %v1359 = vadd.f32 %v707, %v1251
    %v1360 = vadd.f32 %v708, %v1252
    %v1361 = vadd.f32 %v709, %v1253
    %v1362 = vadd.f32 %v710, %v1254
    %v1363 = vadd.f32 %v711, %v1255
    %v1364 = vadd.f32 %v712, %v1256
    %v1365 = vadd.f32 %v713, %v1257
    %v1366 = vadd.f32 %v714, %v1258
    %v1367 = vadd.f32 %v715, %v1259
    %v1368 = vadd.f32 %v716, %v1260
    %v1369 = vadd.f32 %v717, %v1261
    %v1370 = vadd.f32 %v718, %v1262
    %v1371 = vadd.f32 %v719, %v1263
    %v1372 = vadd.f32 %v720, %v1264
    %v1373 = vadd.f32 %v721, %v1265
    %v1374 = vadd.f32 %v722, %v1266
    %v1375 = vadd.f32 %v723, %v1267
    %v1376 = vadd.f32 %v724, %v1268
    %v1377 = vadd.f32 %v725, %v1269
    %v1378 = vadd.f32 %v726, %v1270
    %v1379 = vadd.f32 %v727, %v1271
    %v1380 = vadd.f32 %v728, %v1272
    %v1381 = vadd.f32 %v729, %v1273
    %v1382 = vadd.f32 %v730, %v1274
    %v1383 = vadd.f32 %v731, %v1275
    %v1384 = vadd.f32 %v732, %v1276
    %v1385 = vadd.f32 %v733, %v1277
    %v1386 = vadd.f32 %v734, %v1278
    %v1387 = vadd.f32 %v735, %v1279
    %v1388 = vadd.f32 %v736, %v1280
    %v1389 = vadd.f32 %v737, %v1281
    %v1390 = vadd.f32 %v738, %v1282
    %v1391 = vadd.f32 %v739, %v1283
    %v1392 = vadd.f32 %v740, %v1284
    %v1393 = vadd.f32 %v741, %v1285
    %v1394 = vadd.f32 %v742, %v1286
    %v1395 = vadd.f32 %v743, %v1287
    %v1396 = vadd.f32 %v744, %v1288
    %v1397 = vadd.f32 %v745, %v1289
    %v1398 = vadd.f32 %v746, %v1290
    %v1399 = vadd.f32 %v747, %v1291
    %v1400 = vadd.f32 %v748, %v1292
    %v1401 = vadd.f32 %v749, %v1293
    %v1402 = vadd.f32 %v750, %v1294
    %v1403 = vadd.f32 %v751, %v1295
    %v1404 = vadd.f32 %v752, %v1296
    %v1405 = vadd.f32 %v753, %v1297
    %v1406 = vadd.f32 %v754, %v1298
    %v1407 = vadd.f32 %v755, %v1299
    %v1408 = vadd.f32 %v756, %v1300
    %v1409 = vadd.f32 %v757, %v1301
    %v1410 = vadd.f32 %v758, %v1302
    %v1411 = vadd.f32 %v759, %v1303
    %v1412 = vadd.f32 %v760, %v1304
    %v1413 = vadd.f32 %v761, %v1305
    %v1414 = vadd.f32 %v762, %v1306
    %v1415 = vadd.f32 %v763, %v1307
    %v1416 = vadd.f32 %v764, %v1308
    %v1417 = vadd.f32 %v765, %v1309
    %v1418 = vadd.f32 %v766, %v1310
    %v1419 = vadd.f32 %v767, %v1311
    %v1420 = vadd.f32 %v768, %v1312
    %v1421 = vadd.f32 %v769, %v1313
    %v1422 = vadd.f32 %v770, %v1314
    %v1423 = vadd.f32 %v771, %v1315
    %v1424 = vadd.f32 %v772, %v1316
    %v1425 = vadd.f32 %v773, %v1317
    %v1426 = vadd.f32 %v774, %v1318
    %v1427 = vadd.f32 %v775, %v1319
    %v1428 = vadd.f32 %v776, %v1320
    %v1429 = vadd.f32 %v777, %v1321
    %v1430 = vadd.f32 %v778, %v1322
    %v1431 = vadd.f32 %v779, %v1323
    %v1432 = vadd.f32 %v780, %v1324
    %v1433 = vadd.f32 %v781, %v1325
    %v1434 = vadd.f32 %v782, %v1326
    %v1435 = vadd.f32 %v783, %v1327
    %v1436 = vadd.f32 %v784, %v1328
    %1437 = vset.pattern.permute.xlu0 2
    %1438 = vperm.xlu0 %1437, %v24
    %v1439 = vpop.permute.xlu0 %1438
    %1441 = vset.pattern.permute.xlu0 2
    %1442 = vperm.xlu0 %1441, %v25
    %v1443 = vpop.permute.xlu0 %1442
    %1445 = vset.pattern.permute.xlu0 2
    %1446 = vperm.xlu0 %1445, %v26
    %v1447 = vpop.permute.xlu0 %1446
    %1449 = vset.pattern.permute.xlu0 2
    %1450 = vperm.xlu0 %1449, %v27
    %v1451 = vpop.permute.xlu0 %1450
    %1453 = vset.pattern.permute.xlu0 2
    %1454 = vperm.xlu0 %1453, %v28
    %v1455 = vpop.permute.xlu0 %1454
    %1457 = vset.pattern.permute.xlu0 2
    %1458 = vperm.xlu0 %1457, %v29
    %v1459 = vpop.permute.xlu0 %1458
    %1461 = vset.pattern.permute.xlu0 2
    %1462 = vperm.xlu0 %1461, %v30
    %v1463 = vpop.permute.xlu0 %1462
    %1465 = vset.pattern.permute.xlu0 2
    %1466 = vperm.xlu0 %1465, %v31
    %v1467 = vpop.permute.xlu0 %1466
    %1469 = vset.pattern.permute.xlu0 2
    %1470 = vperm.xlu0 %1469, %v32
    %v1471 = vpop.permute.xlu0 %1470
    %1473 = vset.pattern.permute.xlu0 2
    %1474 = vperm.xlu0 %1473, %v33
    %v1475 = vpop.permute.xlu0 %1474
    %1477 = vset.pattern.permute.xlu0 2
    %1478 = vperm.xlu0 %1477, %v34
    %v1479 = vpop.permute.xlu0 %1478
    %1481 = vset.pattern.permute.xlu0 2
    %1482 = vperm.xlu0 %1481, %v35
    %v1483 = vpop.permute.xlu0 %1482
    %1485 = vset.pattern.permute.xlu0 2
    %1486 = vperm.xlu0 %1485, %v36
    %v1487 = vpop.permute.xlu0 %1486
    %1489 = vset.pattern.permute.xlu0 2
    %1490 = vperm.xlu0 %1489, %v37
    %v1491 = vpop.permute.xlu0 %1490
    %1493 = vset.pattern.permute.xlu0 2
    %1494 = vperm.xlu0 %1493, %v38
    %v1495 = vpop.permute.xlu0 %1494
    %1497 = vset.pattern.permute.xlu0 2
    %1498 = vperm.xlu0 %1497, %v39
    %v1499 = vpop.permute.xlu0 %1498
    %1501 = vset.pattern.permute.xlu0 2
    %1502 = vperm.xlu0 %1501, %v40
    %v1503 = vpop.permute.xlu0 %1502
    %1505 = vset.pattern.permute.xlu0 2
    %1506 = vperm.xlu0 %1505, %v41
    %v1507 = vpop.permute.xlu0 %1506
    %1509 = vset.pattern.permute.xlu0 2
    %1510 = vperm.xlu0 %1509, %v42
    %v1511 = vpop.permute.xlu0 %1510
    %1513 = vset.pattern.permute.xlu0 2
    %1514 = vperm.xlu0 %1513, %v43
    %v1515 = vpop.permute.xlu0 %1514
    %1517 = vset.pattern.permute.xlu0 2
    %1518 = vperm.xlu0 %1517, %v44
    %v1519 = vpop.permute.xlu0 %1518
    %1521 = vset.pattern.permute.xlu0 2
    %1522 = vperm.xlu0 %1521, %v45
    %v1523 = vpop.permute.xlu0 %1522
    %1525 = vset.pattern.permute.xlu0 2
    %1526 = vperm.xlu0 %1525, %v46
    %v1527 = vpop.permute.xlu0 %1526
    %1529 = vset.pattern.permute.xlu0 2
    %1530 = vperm.xlu0 %1529, %v47
    %v1531 = vpop.permute.xlu0 %1530
    %1533 = vset.pattern.permute.xlu0 2
    %1534 = vperm.xlu0 %1533, %v48
    %v1535 = vpop.permute.xlu0 %1534
    %1537 = vset.pattern.permute.xlu0 2
    %1538 = vperm.xlu0 %1537, %v49
    %v1539 = vpop.permute.xlu0 %1538
    %1541 = vset.pattern.permute.xlu0 2
    %1542 = vperm.xlu0 %1541, %v50
    %v1543 = vpop.permute.xlu0 %1542
    %1545 = vset.pattern.permute.xlu0 2
    %1546 = vperm.xlu0 %1545, %v51
    %v1547 = vpop.permute.xlu0 %1546
    %1549 = vset.pattern.permute.xlu0 2
    %1550 = vperm.xlu0 %1549, %v52
    %v1551 = vpop.permute.xlu0 %1550
    %1553 = vset.pattern.permute.xlu0 2
    %1554 = vperm.xlu0 %1553, %v53
    %v1555 = vpop.permute.xlu0 %1554
    %1557 = vset.pattern.permute.xlu0 2
    %1558 = vperm.xlu0 %1557, %v54
    %v1559 = vpop.permute.xlu0 %1558
    %1561 = vset.pattern.permute.xlu0 2
    %1562 = vperm.xlu0 %1561, %v55
    %v1563 = vpop.permute.xlu0 %1562
    %1565 = vset.pattern.permute.xlu0 2
    %1566 = vperm.xlu0 %1565, %v56
    %v1567 = vpop.permute.xlu0 %1566
    %1569 = vset.pattern.permute.xlu0 2
    %1570 = vperm.xlu0 %1569, %v57
    %v1571 = vpop.permute.xlu0 %1570
    %1573 = vset.pattern.permute.xlu0 2
    %1574 = vperm.xlu0 %1573, %v58
    %v1575 = vpop.permute.xlu0 %1574
    %1577 = vset.pattern.permute.xlu0 2
    %1578 = vperm.xlu0 %1577, %v59
    %v1579 = vpop.permute.xlu0 %1578
    %1581 = vset.pattern.permute.xlu0 2
    %1582 = vperm.xlu0 %1581, %v60
    %v1583 = vpop.permute.xlu0 %1582
    %1585 = vset.pattern.permute.xlu0 2
    %1586 = vperm.xlu0 %1585, %v61
    %v1587 = vpop.permute.xlu0 %1586
    %1589 = vset.pattern.permute.xlu0 2
    %1590 = vperm.xlu0 %1589, %v62
    %v1591 = vpop.permute.xlu0 %1590
    %1593 = vset.pattern.permute.xlu0 2
    %1594 = vperm.xlu0 %1593, %v63
    %v1595 = vpop.permute.xlu0 %1594
    %1597 = vset.pattern.permute.xlu0 2
    %1598 = vperm.xlu0 %1597, %v64
    %v1599 = vpop.permute.xlu0 %1598
    %1601 = vset.pattern.permute.xlu0 2
    %1602 = vperm.xlu0 %1601, %v65
    %v1603 = vpop.permute.xlu0 %1602
    %1605 = vset.pattern.permute.xlu0 2
    %1606 = vperm.xlu0 %1605, %v66
    %v1607 = vpop.permute.xlu0 %1606
    %1609 = vset.pattern.permute.xlu0 2
    %1610 = vperm.xlu0 %1609, %v67
    %v1611 = vpop.permute.xlu0 %1610
    %1613 = vset.pattern.permute.xlu0 2
    %1614 = vperm.xlu0 %1613, %v68
    %v1615 = vpop.permute.xlu0 %1614
    %1617 = vset.pattern.permute.xlu0 2
    %1618 = vperm.xlu0 %1617, %v69
    %v1619 = vpop.permute.xlu0 %1618
    %1621 = vset.pattern.permute.xlu0 2
    %1622 = vperm.xlu0 %1621, %v70
    %v1623 = vpop.permute.xlu0 %1622
    %1625 = vset.pattern.permute.xlu0 2
    %1626 = vperm.xlu0 %1625, %v71
    %v1627 = vpop.permute.xlu0 %1626
    %1629 = vset.pattern.permute.xlu0 2
    %1630 = vperm.xlu0 %1629, %v72
    %v1631 = vpop.permute.xlu0 %1630
    %1633 = vset.pattern.permute.xlu0 2
    %1634 = vperm.xlu0 %1633, %v73
    %v1635 = vpop.permute.xlu0 %1634
    %1637 = vset.pattern.permute.xlu0 2
    %1638 = vperm.xlu0 %1637, %v74
    %v1639 = vpop.permute.xlu0 %1638
    %1641 = vset.pattern.permute.xlu0 2
    %1642 = vperm.xlu0 %1641, %v75
    %v1643 = vpop.permute.xlu0 %1642
    %1645 = vset.pattern.permute.xlu0 2
    %1646 = vperm.xlu0 %1645, %v76
    %v1647 = vpop.permute.xlu0 %1646
    %1649 = vset.pattern.permute.xlu0 2
    %1650 = vperm.xlu0 %1649, %v77
    %v1651 = vpop.permute.xlu0 %1650
    %1653 = vset.pattern.permute.xlu0 2
    %1654 = vperm.xlu0 %1653, %v78
    %v1655 = vpop.permute.xlu0 %1654
    %1657 = vset.pattern.permute.xlu0 2
    %1658 = vperm.xlu0 %1657, %v79
    %v1659 = vpop.permute.xlu0 %1658
    %1661 = vset.pattern.permute.xlu0 2
    %1662 = vperm.xlu0 %1661, %v80
    %v1663 = vpop.permute.xlu0 %1662
    %1665 = vset.pattern.permute.xlu0 2
    %1666 = vperm.xlu0 %1665, %v81
    %v1667 = vpop.permute.xlu0 %1666
    %1669 = vset.pattern.permute.xlu0 2
    %1670 = vperm.xlu0 %1669, %v82
    %v1671 = vpop.permute.xlu0 %1670
    %1673 = vset.pattern.permute.xlu0 2
    %1674 = vperm.xlu0 %1673, %v83
    %v1675 = vpop.permute.xlu0 %1674
    %1677 = vset.pattern.permute.xlu0 2
    %1678 = vperm.xlu0 %1677, %v84
    %v1679 = vpop.permute.xlu0 %1678
    %1681 = vset.pattern.permute.xlu0 2
    %1682 = vperm.xlu0 %1681, %v85
    %v1683 = vpop.permute.xlu0 %1682
    %1685 = vset.pattern.permute.xlu0 2
    %1686 = vperm.xlu0 %1685, %v86
    %v1687 = vpop.permute.xlu0 %1686
    %1689 = vset.pattern.permute.xlu0 2
    %1690 = vperm.xlu0 %1689, %v87
    %v1691 = vpop.permute.xlu0 %1690
    %1693 = vset.pattern.permute.xlu0 2
    %1694 = vperm.xlu0 %1693, %v88
    %v1695 = vpop.permute.xlu0 %1694
    %1697 = vset.pattern.permute.xlu0 2
    %1698 = vperm.xlu0 %1697, %v89
    %v1699 = vpop.permute.xlu0 %1698
    %1701 = vset.pattern.permute.xlu0 2
    %1702 = vperm.xlu0 %1701, %v90
    %v1703 = vpop.permute.xlu0 %1702
    %1705 = vset.pattern.permute.xlu0 2
    %1706 = vperm.xlu0 %1705, %v91
    %v1707 = vpop.permute.xlu0 %1706
    %1709 = vset.pattern.permute.xlu0 2
    %1710 = vperm.xlu0 %1709, %v92
    %v1711 = vpop.permute.xlu0 %1710
    %1713 = vset.pattern.permute.xlu0 2
    %1714 = vperm.xlu0 %1713, %v93
    %v1715 = vpop.permute.xlu0 %1714
    %1717 = vset.pattern.permute.xlu0 2
    %1718 = vperm.xlu0 %1717, %v94
    %v1719 = vpop.permute.xlu0 %1718
    %1721 = vset.pattern.permute.xlu0 2
    %1722 = vperm.xlu0 %1721, %v95
    %v1723 = vpop.permute.xlu0 %1722
    %1725 = vset.pattern.permute.xlu0 2
    %1726 = vperm.xlu0 %1725, %v96
    %v1727 = vpop.permute.xlu0 %1726
    %1729 = vset.pattern.permute.xlu0 2
    %1730 = vperm.xlu0 %1729, %v97
    %v1731 = vpop.permute.xlu0 %1730
    %1733 = vset.pattern.permute.xlu0 2
    %1734 = vperm.xlu0 %1733, %v98
    %v1735 = vpop.permute.xlu0 %1734
    %1737 = vset.pattern.permute.xlu0 2
    %1738 = vperm.xlu0 %1737, %v99
    %v1739 = vpop.permute.xlu0 %1738
    %1741 = vset.pattern.permute.xlu0 2
    %1742 = vperm.xlu0 %1741, %v100
    %v1743 = vpop.permute.xlu0 %1742
    %1745 = vset.pattern.permute.xlu0 2
    %1746 = vperm.xlu0 %1745, %v101
    %v1747 = vpop.permute.xlu0 %1746
    %1749 = vset.pattern.permute.xlu0 2
    %1750 = vperm.xlu0 %1749, %v102
    %v1751 = vpop.permute.xlu0 %1750
    %1753 = vset.pattern.permute.xlu0 2
    %1754 = vperm.xlu0 %1753, %v103
    %v1755 = vpop.permute.xlu0 %1754
    %1757 = vset.pattern.permute.xlu0 2
    %1758 = vperm.xlu0 %1757, %v104
    %v1759 = vpop.permute.xlu0 %1758
    %1761 = vset.pattern.permute.xlu0 2
    %1762 = vperm.xlu0 %1761, %v105
    %v1763 = vpop.permute.xlu0 %1762
    %1765 = vset.pattern.permute.xlu0 2
    %1766 = vperm.xlu0 %1765, %v106
    %v1767 = vpop.permute.xlu0 %1766
    %1769 = vset.pattern.permute.xlu0 2
    %1770 = vperm.xlu0 %1769, %v107
    %v1771 = vpop.permute.xlu0 %1770
    %1773 = vset.pattern.permute.xlu0 2
    %1774 = vperm.xlu0 %1773, %v108
    %v1775 = vpop.permute.xlu0 %1774
    %1777 = vset.pattern.permute.xlu0 2
    %1778 = vperm.xlu0 %1777, %v109
    %v1779 = vpop.permute.xlu0 %1778
    %1781 = vset.pattern.permute.xlu0 2
    %1782 = vperm.xlu0 %1781, %v110
    %v1783 = vpop.permute.xlu0 %1782
    %1785 = vset.pattern.permute.xlu0 2
    %1786 = vperm.xlu0 %1785, %v111
    %v1787 = vpop.permute.xlu0 %1786
    %1789 = vset.pattern.permute.xlu0 2
    %1790 = vperm.xlu0 %1789, %v112
    %v1791 = vpop.permute.xlu0 %1790
    %1793 = vset.pattern.permute.xlu0 2
    %1794 = vperm.xlu0 %1793, %v113
    %v1795 = vpop.permute.xlu0 %1794
    %1797 = vset.pattern.permute.xlu0 2
    %1798 = vperm.xlu0 %1797, %v114
    %v1799 = vpop.permute.xlu0 %1798
    %1801 = vset.pattern.permute.xlu0 2
    %1802 = vperm.xlu0 %1801, %v115
    %v1803 = vpop.permute.xlu0 %1802
    %1805 = vset.pattern.permute.xlu0 2
    %1806 = vperm.xlu0 %1805, %v116
    %v1807 = vpop.permute.xlu0 %1806
    %1809 = vset.pattern.permute.xlu0 2
    %1810 = vperm.xlu0 %1809, %v117
    %v1811 = vpop.permute.xlu0 %1810
    %1813 = vset.pattern.permute.xlu0 2
    %1814 = vperm.xlu0 %1813, %v118
    %v1815 = vpop.permute.xlu0 %1814
    %1817 = vset.pattern.permute.xlu0 2
    %1818 = vperm.xlu0 %1817, %v119
    %v1819 = vpop.permute.xlu0 %1818
    %1821 = vset.pattern.permute.xlu0 2
    %1822 = vperm.xlu0 %1821, %v120
    %v1823 = vpop.permute.xlu0 %1822
    %1825 = vset.pattern.permute.xlu0 2
    %1826 = vperm.xlu0 %1825, %v121
    %v1827 = vpop.permute.xlu0 %1826
    %1829 = vset.pattern.permute.xlu0 2
    %1830 = vperm.xlu0 %1829, %v122
    %v1831 = vpop.permute.xlu0 %1830
    %1833 = vset.pattern.permute.xlu0 2
    %1834 = vperm.xlu0 %1833, %v123
    %v1835 = vpop.permute.xlu0 %1834
    %1837 = vset.pattern.permute.xlu0 2
    %1838 = vperm.xlu0 %1837, %v124
    %v1839 = vpop.permute.xlu0 %1838
    %1841 = vset.pattern.permute.xlu0 2
    %1842 = vperm.xlu0 %1841, %v125
    %v1843 = vpop.permute.xlu0 %1842
    %1845 = vset.pattern.permute.xlu0 2
    %1846 = vperm.xlu0 %1845, %v126
    %v1847 = vpop.permute.xlu0 %1846
    %1849 = vset.pattern.permute.xlu0 2
    %1850 = vperm.xlu0 %1849, %v127
    %v1851 = vpop.permute.xlu0 %1850
    %1853 = vset.pattern.permute.xlu0 2
    %1854 = vperm.xlu0 %1853, %v128
    %v1855 = vpop.permute.xlu0 %1854
    %1857 = vset.pattern.permute.xlu0 2
    %1858 = vperm.xlu0 %1857, %v129
    %v1859 = vpop.permute.xlu0 %1858
    %1861 = vset.pattern.permute.xlu0 2
    %1862 = vperm.xlu0 %1861, %v130
    %v1863 = vpop.permute.xlu0 %1862
    %1865 = vset.pattern.permute.xlu0 2
    %1866 = vperm.xlu0 %1865, %v131
    %v1867 = vpop.permute.xlu0 %1866
    %v1869 = vlaneseq
    %v1870 = vshrl.u32 %v1869, 7
    %v1871 = vsub.s32 2, %v1870
    %v1872 = vrot.slane %v132, %v1871
    %v1873 = vmul.f32 %v1439, %v1872
    %v1874 = vmul.f32 %v1443, %v1872
    %v1875 = vmul.f32 %v1447, %v1872
    %v1876 = vmul.f32 %v1451, %v1872
    %v1877 = vmul.f32 %v1455, %v1872
    %v1878 = vmul.f32 %v1459, %v1872
    %v1879 = vmul.f32 %v1463, %v1872
    %v1880 = vmul.f32 %v1467, %v1872
    %v1881 = vmul.f32 %v1471, %v1872
    %v1882 = vmul.f32 %v1475, %v1872
    %v1883 = vmul.f32 %v1479, %v1872
    %v1884 = vmul.f32 %v1483, %v1872
    %v1885 = vmul.f32 %v1487, %v1872
    %v1886 = vmul.f32 %v1491, %v1872
    %v1887 = vmul.f32 %v1495, %v1872
    %v1888 = vmul.f32 %v1499, %v1872
    %v1889 = vmul.f32 %v1503, %v1872
    %v1890 = vmul.f32 %v1507, %v1872
    %v1891 = vmul.f32 %v1511, %v1872
    %v1892 = vmul.f32 %v1515, %v1872
    %v1893 = vmul.f32 %v1519, %v1872
    %v1894 = vmul.f32 %v1523, %v1872
    %v1895 = vmul.f32 %v1527, %v1872
    %v1896 = vmul.f32 %v1531, %v1872
    %v1897 = vmul.f32 %v1535, %v1872
    %v1898 = vmul.f32 %v1539, %v1872
    %v1899 = vmul.f32 %v1543, %v1872
    %v1900 = vmul.f32 %v1547, %v1872
    %v1901 = vmul.f32 %v1551, %v1872
    %v1902 = vmul.f32 %v1555, %v1872
    %v1903 = vmul.f32 %v1559, %v1872
    %v1904 = vmul.f32 %v1563, %v1872
    %v1905 = vmul.f32 %v1567, %v1872
    %v1906 = vmul.f32 %v1571, %v1872
    %v1907 = vmul.f32 %v1575, %v1872
    %v1908 = vmul.f32 %v1579, %v1872
    %v1909 = vmul.f32 %v1583, %v1872
    %v1910 = vmul.f32 %v1587, %v1872
    %v1911 = vmul.f32 %v1591, %v1872
    %v1912 = vmul.f32 %v1595, %v1872
    %v1913 = vmul.f32 %v1599, %v1872
    %v1914 = vmul.f32 %v1603, %v1872
    %v1915 = vmul.f32 %v1607, %v1872
    %v1916 = vmul.f32 %v1611, %v1872
    %v1917 = vmul.f32 %v1615, %v1872
    %v1918 = vmul.f32 %v1619, %v1872
    %v1919 = vmul.f32 %v1623, %v1872
    %v1920 = vmul.f32 %v1627, %v1872
    %v1921 = vmul.f32 %v1631, %v1872
    %v1922 = vmul.f32 %v1635, %v1872
    %v1923 = vmul.f32 %v1639, %v1872
    %v1924 = vmul.f32 %v1643, %v1872
    %v1925 = vmul.f32 %v1647, %v1872
    %v1926 = vmul.f32 %v1651, %v1872
    %v1927 = vmul.f32 %v1655, %v1872
    %v1928 = vmul.f32 %v1659, %v1872
    %v1929 = vmul.f32 %v1663, %v1872
    %v1930 = vmul.f32 %v1667, %v1872
    %v1931 = vmul.f32 %v1671, %v1872
    %v1932 = vmul.f32 %v1675, %v1872
    %v1933 = vmul.f32 %v1679, %v1872
    %v1934 = vmul.f32 %v1683, %v1872
    %v1935 = vmul.f32 %v1687, %v1872
    %v1936 = vmul.f32 %v1691, %v1872
    %v1937 = vmul.f32 %v1695, %v1872
    %v1938 = vmul.f32 %v1699, %v1872
    %v1939 = vmul.f32 %v1703, %v1872
    %v1940 = vmul.f32 %v1707, %v1872
    %v1941 = vmul.f32 %v1711, %v1872
    %v1942 = vmul.f32 %v1715, %v1872
    %v1943 = vmul.f32 %v1719, %v1872
    %v1944 = vmul.f32 %v1723, %v1872
    %v1945 = vmul.f32 %v1727, %v1872
    %v1946 = vmul.f32 %v1731, %v1872
    %v1947 = vmul.f32 %v1735, %v1872
    %v1948 = vmul.f32 %v1739, %v1872
    %v1949 = vmul.f32 %v1743, %v1872
    %v1950 = vmul.f32 %v1747, %v1872
    %v1951 = vmul.f32 %v1751, %v1872
    %v1952 = vmul.f32 %v1755, %v1872
    %v1953 = vmul.f32 %v1759, %v1872
    %v1954 = vmul.f32 %v1763, %v1872
    %v1955 = vmul.f32 %v1767, %v1872
    %v1956 = vmul.f32 %v1771, %v1872
    %v1957 = vmul.f32 %v1775, %v1872
    %v1958 = vmul.f32 %v1779, %v1872
    %v1959 = vmul.f32 %v1783, %v1872
    %v1960 = vmul.f32 %v1787, %v1872
    %v1961 = vmul.f32 %v1791, %v1872
    %v1962 = vmul.f32 %v1795, %v1872
    %v1963 = vmul.f32 %v1799, %v1872
    %v1964 = vmul.f32 %v1803, %v1872
    %v1965 = vmul.f32 %v1807, %v1872
    %v1966 = vmul.f32 %v1811, %v1872
    %v1967 = vmul.f32 %v1815, %v1872
    %v1968 = vmul.f32 %v1819, %v1872
    %v1969 = vmul.f32 %v1823, %v1872
    %v1970 = vmul.f32 %v1827, %v1872
    %v1971 = vmul.f32 %v1831, %v1872
    %v1972 = vmul.f32 %v1835, %v1872
    %v1973 = vmul.f32 %v1839, %v1872
    %v1974 = vmul.f32 %v1843, %v1872
    %v1975 = vmul.f32 %v1847, %v1872
    %v1976 = vmul.f32 %v1851, %v1872
    %v1977 = vmul.f32 %v1855, %v1872
    %v1978 = vmul.f32 %v1859, %v1872
    %v1979 = vmul.f32 %v1863, %v1872
    %v1980 = vmul.f32 %v1867, %v1872
    %v1981 = vadd.f32 %v1329, %v1873
    %v1982 = vadd.f32 %v1330, %v1874
    %v1983 = vadd.f32 %v1331, %v1875
    %v1984 = vadd.f32 %v1332, %v1876
    %v1985 = vadd.f32 %v1333, %v1877
    %v1986 = vadd.f32 %v1334, %v1878
    %v1987 = vadd.f32 %v1335, %v1879
    %v1988 = vadd.f32 %v1336, %v1880
    %v1989 = vadd.f32 %v1337, %v1881
    %v1990 = vadd.f32 %v1338, %v1882
    %v1991 = vadd.f32 %v1339, %v1883
    %v1992 = vadd.f32 %v1340, %v1884
    %v1993 = vadd.f32 %v1341, %v1885
    %v1994 = vadd.f32 %v1342, %v1886
    %v1995 = vadd.f32 %v1343, %v1887
    %v1996 = vadd.f32 %v1344, %v1888
    %v1997 = vadd.f32 %v1345, %v1889
    %v1998 = vadd.f32 %v1346, %v1890
    %v1999 = vadd.f32 %v1347, %v1891
    %v2000 = vadd.f32 %v1348, %v1892
    %v2001 = vadd.f32 %v1349, %v1893
    %v2002 = vadd.f32 %v1350, %v1894
    %v2003 = vadd.f32 %v1351, %v1895
    %v2004 = vadd.f32 %v1352, %v1896
    %v2005 = vadd.f32 %v1353, %v1897
    %v2006 = vadd.f32 %v1354, %v1898
    %v2007 = vadd.f32 %v1355, %v1899
    %v2008 = vadd.f32 %v1356, %v1900
    %v2009 = vadd.f32 %v1357, %v1901
    %v2010 = vadd.f32 %v1358, %v1902
    %v2011 = vadd.f32 %v1359, %v1903
    %v2012 = vadd.f32 %v1360, %v1904
    %v2013 = vadd.f32 %v1361, %v1905
    %v2014 = vadd.f32 %v1362, %v1906
    %v2015 = vadd.f32 %v1363, %v1907
    %v2016 = vadd.f32 %v1364, %v1908
    %v2017 = vadd.f32 %v1365, %v1909
    %v2018 = vadd.f32 %v1366, %v1910
    %v2019 = vadd.f32 %v1367, %v1911
    %v2020 = vadd.f32 %v1368, %v1912
    %v2021 = vadd.f32 %v1369, %v1913
    %v2022 = vadd.f32 %v1370, %v1914
    %v2023 = vadd.f32 %v1371, %v1915
    %v2024 = vadd.f32 %v1372, %v1916
    %v2025 = vadd.f32 %v1373, %v1917
    %v2026 = vadd.f32 %v1374, %v1918
    %v2027 = vadd.f32 %v1375, %v1919
    %v2028 = vadd.f32 %v1376, %v1920
    %v2029 = vadd.f32 %v1377, %v1921
    %v2030 = vadd.f32 %v1378, %v1922
    %v2031 = vadd.f32 %v1379, %v1923
    %v2032 = vadd.f32 %v1380, %v1924
    %v2033 = vadd.f32 %v1381, %v1925
    %v2034 = vadd.f32 %v1382, %v1926
    %v2035 = vadd.f32 %v1383, %v1927
    %v2036 = vadd.f32 %v1384, %v1928
    %v2037 = vadd.f32 %v1385, %v1929
    %v2038 = vadd.f32 %v1386, %v1930
    %v2039 = vadd.f32 %v1387, %v1931
    %v2040 = vadd.f32 %v1388, %v1932
    %v2041 = vadd.f32 %v1389, %v1933
    %v2042 = vadd.f32 %v1390, %v1934
    %v2043 = vadd.f32 %v1391, %v1935
    %v2044 = vadd.f32 %v1392, %v1936
    %v2045 = vadd.f32 %v1393, %v1937
    %v2046 = vadd.f32 %v1394, %v1938
    %v2047 = vadd.f32 %v1395, %v1939
    %v2048 = vadd.f32 %v1396, %v1940
    %v2049 = vadd.f32 %v1397, %v1941
    %v2050 = vadd.f32 %v1398, %v1942
    %v2051 = vadd.f32 %v1399, %v1943
    %v2052 = vadd.f32 %v1400, %v1944
    %v2053 = vadd.f32 %v1401, %v1945
    %v2054 = vadd.f32 %v1402, %v1946
    %v2055 = vadd.f32 %v1403, %v1947
    %v2056 = vadd.f32 %v1404, %v1948
    %v2057 = vadd.f32 %v1405, %v1949
    %v2058 = vadd.f32 %v1406, %v1950
    %v2059 = vadd.f32 %v1407, %v1951
    %v2060 = vadd.f32 %v1408, %v1952
    %v2061 = vadd.f32 %v1409, %v1953
    %v2062 = vadd.f32 %v1410, %v1954
    %v2063 = vadd.f32 %v1411, %v1955
    %v2064 = vadd.f32 %v1412, %v1956
    %v2065 = vadd.f32 %v1413, %v1957
    %v2066 = vadd.f32 %v1414, %v1958
    %v2067 = vadd.f32 %v1415, %v1959
    %v2068 = vadd.f32 %v1416, %v1960
    %v2069 = vadd.f32 %v1417, %v1961
    %v2070 = vadd.f32 %v1418, %v1962
    %v2071 = vadd.f32 %v1419, %v1963
    %v2072 = vadd.f32 %v1420, %v1964
    %v2073 = vadd.f32 %v1421, %v1965
    %v2074 = vadd.f32 %v1422, %v1966
    %v2075 = vadd.f32 %v1423, %v1967
    %v2076 = vadd.f32 %v1424, %v1968
    %v2077 = vadd.f32 %v1425, %v1969
    %v2078 = vadd.f32 %v1426, %v1970
    %v2079 = vadd.f32 %v1427, %v1971
    %v2080 = vadd.f32 %v1428, %v1972
    %v2081 = vadd.f32 %v1429, %v1973
    %v2082 = vadd.f32 %v1430, %v1974
    %v2083 = vadd.f32 %v1431, %v1975
    %v2084 = vadd.f32 %v1432, %v1976
    %v2085 = vadd.f32 %v1433, %v1977
    %v2086 = vadd.f32 %v1434, %v1978
    %v2087 = vadd.f32 %v1435, %v1979
    %v2088 = vadd.f32 %v1436, %v1980
    %2089 = vset.pattern.permute.xlu0 3
    %2090 = vperm.xlu0 %2089, %v24
    %v2091 = vpop.permute.xlu0 %2090
    %2093 = vset.pattern.permute.xlu0 3
    %2094 = vperm.xlu0 %2093, %v25
    %v2095 = vpop.permute.xlu0 %2094
    %2097 = vset.pattern.permute.xlu0 3
    %2098 = vperm.xlu0 %2097, %v26
    %v2099 = vpop.permute.xlu0 %2098
    %2101 = vset.pattern.permute.xlu0 3
    %2102 = vperm.xlu0 %2101, %v27
    %v2103 = vpop.permute.xlu0 %2102
    %2105 = vset.pattern.permute.xlu0 3
    %2106 = vperm.xlu0 %2105, %v28
    %v2107 = vpop.permute.xlu0 %2106
    %2109 = vset.pattern.permute.xlu0 3
    %2110 = vperm.xlu0 %2109, %v29
    %v2111 = vpop.permute.xlu0 %2110
    %2113 = vset.pattern.permute.xlu0 3
    %2114 = vperm.xlu0 %2113, %v30
    %v2115 = vpop.permute.xlu0 %2114
    %2117 = vset.pattern.permute.xlu0 3
    %2118 = vperm.xlu0 %2117, %v31
    %v2119 = vpop.permute.xlu0 %2118
    %2121 = vset.pattern.permute.xlu0 3
    %2122 = vperm.xlu0 %2121, %v32
    %v2123 = vpop.permute.xlu0 %2122
    %2125 = vset.pattern.permute.xlu0 3
    %2126 = vperm.xlu0 %2125, %v33
    %v2127 = vpop.permute.xlu0 %2126
    %2129 = vset.pattern.permute.xlu0 3
    %2130 = vperm.xlu0 %2129, %v34
    %v2131 = vpop.permute.xlu0 %2130
    %2133 = vset.pattern.permute.xlu0 3
    %2134 = vperm.xlu0 %2133, %v35
    %v2135 = vpop.permute.xlu0 %2134
    %2137 = vset.pattern.permute.xlu0 3
    %2138 = vperm.xlu0 %2137, %v36
    %v2139 = vpop.permute.xlu0 %2138
    %2141 = vset.pattern.permute.xlu0 3
    %2142 = vperm.xlu0 %2141, %v37
    %v2143 = vpop.permute.xlu0 %2142
    %2145 = vset.pattern.permute.xlu0 3
    %2146 = vperm.xlu0 %2145, %v38
    %v2147 = vpop.permute.xlu0 %2146
    %2149 = vset.pattern.permute.xlu0 3
    %2150 = vperm.xlu0 %2149, %v39
    %v2151 = vpop.permute.xlu0 %2150
    %2153 = vset.pattern.permute.xlu0 3
    %2154 = vperm.xlu0 %2153, %v40
    %v2155 = vpop.permute.xlu0 %2154
    %2157 = vset.pattern.permute.xlu0 3
    %2158 = vperm.xlu0 %2157, %v41
    %v2159 = vpop.permute.xlu0 %2158
    %2161 = vset.pattern.permute.xlu0 3
    %2162 = vperm.xlu0 %2161, %v42
    %v2163 = vpop.permute.xlu0 %2162
    %2165 = vset.pattern.permute.xlu0 3
    %2166 = vperm.xlu0 %2165, %v43
    %v2167 = vpop.permute.xlu0 %2166
    %2169 = vset.pattern.permute.xlu0 3
    %2170 = vperm.xlu0 %2169, %v44
    %v2171 = vpop.permute.xlu0 %2170
    %2173 = vset.pattern.permute.xlu0 3
    %2174 = vperm.xlu0 %2173, %v45
    %v2175 = vpop.permute.xlu0 %2174
    %2177 = vset.pattern.permute.xlu0 3
    %2178 = vperm.xlu0 %2177, %v46
    %v2179 = vpop.permute.xlu0 %2178
    %2181 = vset.pattern.permute.xlu0 3
    %2182 = vperm.xlu0 %2181, %v47
    %v2183 = vpop.permute.xlu0 %2182
    %2185 = vset.pattern.permute.xlu0 3
    %2186 = vperm.xlu0 %2185, %v48
    %v2187 = vpop.permute.xlu0 %2186
    %2189 = vset.pattern.permute.xlu0 3
    %2190 = vperm.xlu0 %2189, %v49
    %v2191 = vpop.permute.xlu0 %2190
    %2193 = vset.pattern.permute.xlu0 3
    %2194 = vperm.xlu0 %2193, %v50
    %v2195 = vpop.permute.xlu0 %2194
    %2197 = vset.pattern.permute.xlu0 3
    %2198 = vperm.xlu0 %2197, %v51
    %v2199 = vpop.permute.xlu0 %2198
    %2201 = vset.pattern.permute.xlu0 3
    %2202 = vperm.xlu0 %2201, %v52
    %v2203 = vpop.permute.xlu0 %2202
    %2205 = vset.pattern.permute.xlu0 3
    %2206 = vperm.xlu0 %2205, %v53
    %v2207 = vpop.permute.xlu0 %2206
    %2209 = vset.pattern.permute.xlu0 3
    %2210 = vperm.xlu0 %2209, %v54
    %v2211 = vpop.permute.xlu0 %2210
    %2213 = vset.pattern.permute.xlu0 3
    %2214 = vperm.xlu0 %2213, %v55
    %v2215 = vpop.permute.xlu0 %2214
    %2217 = vset.pattern.permute.xlu0 3
    %2218 = vperm.xlu0 %2217, %v56
    %v2219 = vpop.permute.xlu0 %2218
    %2221 = vset.pattern.permute.xlu0 3
    %2222 = vperm.xlu0 %2221, %v57
    %v2223 = vpop.permute.xlu0 %2222
    %2225 = vset.pattern.permute.xlu0 3
    %2226 = vperm.xlu0 %2225, %v58
    %v2227 = vpop.permute.xlu0 %2226
    %2229 = vset.pattern.permute.xlu0 3
    %2230 = vperm.xlu0 %2229, %v59
    %v2231 = vpop.permute.xlu0 %2230
    %2233 = vset.pattern.permute.xlu0 3
    %2234 = vperm.xlu0 %2233, %v60
    %v2235 = vpop.permute.xlu0 %2234
    %2237 = vset.pattern.permute.xlu0 3
    %2238 = vperm.xlu0 %2237, %v61
    %v2239 = vpop.permute.xlu0 %2238
    %2241 = vset.pattern.permute.xlu0 3
    %2242 = vperm.xlu0 %2241, %v62
    %v2243 = vpop.permute.xlu0 %2242
    %2245 = vset.pattern.permute.xlu0 3
    %2246 = vperm.xlu0 %2245, %v63
    %v2247 = vpop.permute.xlu0 %2246
    %2249 = vset.pattern.permute.xlu0 3
    %2250 = vperm.xlu0 %2249, %v64
    %v2251 = vpop.permute.xlu0 %2250
    %2253 = vset.pattern.permute.xlu0 3
    %2254 = vperm.xlu0 %2253, %v65
    %v2255 = vpop.permute.xlu0 %2254
    %2257 = vset.pattern.permute.xlu0 3
    %2258 = vperm.xlu0 %2257, %v66
    %v2259 = vpop.permute.xlu0 %2258
    %2261 = vset.pattern.permute.xlu0 3
    %2262 = vperm.xlu0 %2261, %v67
    %v2263 = vpop.permute.xlu0 %2262
    %2265 = vset.pattern.permute.xlu0 3
    %2266 = vperm.xlu0 %2265, %v68
    %v2267 = vpop.permute.xlu0 %2266
    %2269 = vset.pattern.permute.xlu0 3
    %2270 = vperm.xlu0 %2269, %v69
    %v2271 = vpop.permute.xlu0 %2270
    %2273 = vset.pattern.permute.xlu0 3
    %2274 = vperm.xlu0 %2273, %v70
    %v2275 = vpop.permute.xlu0 %2274
    %2277 = vset.pattern.permute.xlu0 3
    %2278 = vperm.xlu0 %2277, %v71
    %v2279 = vpop.permute.xlu0 %2278
    %2281 = vset.pattern.permute.xlu0 3
    %2282 = vperm.xlu0 %2281, %v72
    %v2283 = vpop.permute.xlu0 %2282
    %2285 = vset.pattern.permute.xlu0 3
    %2286 = vperm.xlu0 %2285, %v73
    %v2287 = vpop.permute.xlu0 %2286
    %2289 = vset.pattern.permute.xlu0 3
    %2290 = vperm.xlu0 %2289, %v74
    %v2291 = vpop.permute.xlu0 %2290
    %2293 = vset.pattern.permute.xlu0 3
    %2294 = vperm.xlu0 %2293, %v75
    %v2295 = vpop.permute.xlu0 %2294
    %2297 = vset.pattern.permute.xlu0 3
    %2298 = vperm.xlu0 %2297, %v76
    %v2299 = vpop.permute.xlu0 %2298
    %2301 = vset.pattern.permute.xlu0 3
    %2302 = vperm.xlu0 %2301, %v77
    %v2303 = vpop.permute.xlu0 %2302
    %2305 = vset.pattern.permute.xlu0 3
    %2306 = vperm.xlu0 %2305, %v78
    %v2307 = vpop.permute.xlu0 %2306
    %2309 = vset.pattern.permute.xlu0 3
    %2310 = vperm.xlu0 %2309, %v79
    %v2311 = vpop.permute.xlu0 %2310
    %2313 = vset.pattern.permute.xlu0 3
    %2314 = vperm.xlu0 %2313, %v80
    %v2315 = vpop.permute.xlu0 %2314
    %2317 = vset.pattern.permute.xlu0 3
    %2318 = vperm.xlu0 %2317, %v81
    %v2319 = vpop.permute.xlu0 %2318
    %2321 = vset.pattern.permute.xlu0 3
    %2322 = vperm.xlu0 %2321, %v82
    %v2323 = vpop.permute.xlu0 %2322
    %2325 = vset.pattern.permute.xlu0 3
    %2326 = vperm.xlu0 %2325, %v83
    %v2327 = vpop.permute.xlu0 %2326
    %2329 = vset.pattern.permute.xlu0 3
    %2330 = vperm.xlu0 %2329, %v84
    %v2331 = vpop.permute.xlu0 %2330
    %2333 = vset.pattern.permute.xlu0 3
    %2334 = vperm.xlu0 %2333, %v85
    %v2335 = vpop.permute.xlu0 %2334
    %2337 = vset.pattern.permute.xlu0 3
    %2338 = vperm.xlu0 %2337, %v86
    %v2339 = vpop.permute.xlu0 %2338
    %2341 = vset.pattern.permute.xlu0 3
    %2342 = vperm.xlu0 %2341, %v87
    %v2343 = vpop.permute.xlu0 %2342
    %2345 = vset.pattern.permute.xlu0 3
    %2346 = vperm.xlu0 %2345, %v88
    %v2347 = vpop.permute.xlu0 %2346
    %2349 = vset.pattern.permute.xlu0 3
    %2350 = vperm.xlu0 %2349, %v89
    %v2351 = vpop.permute.xlu0 %2350
    %2353 = vset.pattern.permute.xlu0 3
    %2354 = vperm.xlu0 %2353, %v90
    %v2355 = vpop.permute.xlu0 %2354
    %2357 = vset.pattern.permute.xlu0 3
    %2358 = vperm.xlu0 %2357, %v91
    %v2359 = vpop.permute.xlu0 %2358
    %2361 = vset.pattern.permute.xlu0 3
    %2362 = vperm.xlu0 %2361, %v92
    %v2363 = vpop.permute.xlu0 %2362
    %2365 = vset.pattern.permute.xlu0 3
    %2366 = vperm.xlu0 %2365, %v93
    %v2367 = vpop.permute.xlu0 %2366
    %2369 = vset.pattern.permute.xlu0 3
    %2370 = vperm.xlu0 %2369, %v94
    %v2371 = vpop.permute.xlu0 %2370
    %2373 = vset.pattern.permute.xlu0 3
    %2374 = vperm.xlu0 %2373, %v95
    %v2375 = vpop.permute.xlu0 %2374
    %2377 = vset.pattern.permute.xlu0 3
    %2378 = vperm.xlu0 %2377, %v96
    %v2379 = vpop.permute.xlu0 %2378
    %2381 = vset.pattern.permute.xlu0 3
    %2382 = vperm.xlu0 %2381, %v97
    %v2383 = vpop.permute.xlu0 %2382
    %2385 = vset.pattern.permute.xlu0 3
    %2386 = vperm.xlu0 %2385, %v98
    %v2387 = vpop.permute.xlu0 %2386
    %2389 = vset.pattern.permute.xlu0 3
    %2390 = vperm.xlu0 %2389, %v99
    %v2391 = vpop.permute.xlu0 %2390
    %2393 = vset.pattern.permute.xlu0 3
    %2394 = vperm.xlu0 %2393, %v100
    %v2395 = vpop.permute.xlu0 %2394
    %2397 = vset.pattern.permute.xlu0 3
    %2398 = vperm.xlu0 %2397, %v101
    %v2399 = vpop.permute.xlu0 %2398
    %2401 = vset.pattern.permute.xlu0 3
    %2402 = vperm.xlu0 %2401, %v102
    %v2403 = vpop.permute.xlu0 %2402
    %2405 = vset.pattern.permute.xlu0 3
    %2406 = vperm.xlu0 %2405, %v103
    %v2407 = vpop.permute.xlu0 %2406
    %2409 = vset.pattern.permute.xlu0 3
    %2410 = vperm.xlu0 %2409, %v104
    %v2411 = vpop.permute.xlu0 %2410
    %2413 = vset.pattern.permute.xlu0 3
    %2414 = vperm.xlu0 %2413, %v105
    %v2415 = vpop.permute.xlu0 %2414
    %2417 = vset.pattern.permute.xlu0 3
    %2418 = vperm.xlu0 %2417, %v106
    %v2419 = vpop.permute.xlu0 %2418
    %2421 = vset.pattern.permute.xlu0 3
    %2422 = vperm.xlu0 %2421, %v107
    %v2423 = vpop.permute.xlu0 %2422
    %2425 = vset.pattern.permute.xlu0 3
    %2426 = vperm.xlu0 %2425, %v108
    %v2427 = vpop.permute.xlu0 %2426
    %2429 = vset.pattern.permute.xlu0 3
    %2430 = vperm.xlu0 %2429, %v109
    %v2431 = vpop.permute.xlu0 %2430
    %2433 = vset.pattern.permute.xlu0 3
    %2434 = vperm.xlu0 %2433, %v110
    %v2435 = vpop.permute.xlu0 %2434
    %2437 = vset.pattern.permute.xlu0 3
    %2438 = vperm.xlu0 %2437, %v111
    %v2439 = vpop.permute.xlu0 %2438
    %2441 = vset.pattern.permute.xlu0 3
    %2442 = vperm.xlu0 %2441, %v112
    %v2443 = vpop.permute.xlu0 %2442
    %2445 = vset.pattern.permute.xlu0 3
    %2446 = vperm.xlu0 %2445, %v113
    %v2447 = vpop.permute.xlu0 %2446
    %2449 = vset.pattern.permute.xlu0 3
    %2450 = vperm.xlu0 %2449, %v114
    %v2451 = vpop.permute.xlu0 %2450
    %2453 = vset.pattern.permute.xlu0 3
    %2454 = vperm.xlu0 %2453, %v115
    %v2455 = vpop.permute.xlu0 %2454
    %2457 = vset.pattern.permute.xlu0 3
    %2458 = vperm.xlu0 %2457, %v116
    %v2459 = vpop.permute.xlu0 %2458
    %2461 = vset.pattern.permute.xlu0 3
    %2462 = vperm.xlu0 %2461, %v117
    %v2463 = vpop.permute.xlu0 %2462
    %2465 = vset.pattern.permute.xlu0 3
    %2466 = vperm.xlu0 %2465, %v118
    %v2467 = vpop.permute.xlu0 %2466
    %2469 = vset.pattern.permute.xlu0 3
    %2470 = vperm.xlu0 %2469, %v119
    %v2471 = vpop.permute.xlu0 %2470
    %2473 = vset.pattern.permute.xlu0 3
    %2474 = vperm.xlu0 %2473, %v120
    %v2475 = vpop.permute.xlu0 %2474
    %2477 = vset.pattern.permute.xlu0 3
    %2478 = vperm.xlu0 %2477, %v121
    %v2479 = vpop.permute.xlu0 %2478
    %2481 = vset.pattern.permute.xlu0 3
    %2482 = vperm.xlu0 %2481, %v122
    %v2483 = vpop.permute.xlu0 %2482
    %2485 = vset.pattern.permute.xlu0 3
    %2486 = vperm.xlu0 %2485, %v123
    %v2487 = vpop.permute.xlu0 %2486
    %2489 = vset.pattern.permute.xlu0 3
    %2490 = vperm.xlu0 %2489, %v124
    %v2491 = vpop.permute.xlu0 %2490
    %2493 = vset.pattern.permute.xlu0 3
    %2494 = vperm.xlu0 %2493, %v125
    %v2495 = vpop.permute.xlu0 %2494
    %2497 = vset.pattern.permute.xlu0 3
    %2498 = vperm.xlu0 %2497, %v126
    %v2499 = vpop.permute.xlu0 %2498
    %2501 = vset.pattern.permute.xlu0 3
    %2502 = vperm.xlu0 %2501, %v127
    %v2503 = vpop.permute.xlu0 %2502
    %2505 = vset.pattern.permute.xlu0 3
    %2506 = vperm.xlu0 %2505, %v128
    %v2507 = vpop.permute.xlu0 %2506
    %2509 = vset.pattern.permute.xlu0 3
    %2510 = vperm.xlu0 %2509, %v129
    %v2511 = vpop.permute.xlu0 %2510
    %2513 = vset.pattern.permute.xlu0 3
    %2514 = vperm.xlu0 %2513, %v130
    %v2515 = vpop.permute.xlu0 %2514
    %2517 = vset.pattern.permute.xlu0 3
    %2518 = vperm.xlu0 %2517, %v131
    %v2519 = vpop.permute.xlu0 %2518
    %v2521 = vlaneseq
    %v2522 = vshrl.u32 %v2521, 7
    %v2523 = vsub.s32 3, %v2522
    %v2524 = vrot.slane %v132, %v2523
    %v2525 = vmul.f32 %v2091, %v2524
    %v2526 = vmul.f32 %v2095, %v2524
    %v2527 = vmul.f32 %v2099, %v2524
    %v2528 = vmul.f32 %v2103, %v2524
    %v2529 = vmul.f32 %v2107, %v2524
    %v2530 = vmul.f32 %v2111, %v2524
    %v2531 = vmul.f32 %v2115, %v2524
    %v2532 = vmul.f32 %v2119, %v2524
    %v2533 = vmul.f32 %v2123, %v2524
    %v2534 = vmul.f32 %v2127, %v2524
    %v2535 = vmul.f32 %v2131, %v2524
    %v2536 = vmul.f32 %v2135, %v2524
    %v2537 = vmul.f32 %v2139, %v2524
    %v2538 = vmul.f32 %v2143, %v2524
    %v2539 = vmul.f32 %v2147, %v2524
    %v2540 = vmul.f32 %v2151, %v2524
    %v2541 = vmul.f32 %v2155, %v2524
    %v2542 = vmul.f32 %v2159, %v2524
    %v2543 = vmul.f32 %v2163, %v2524
    %v2544 = vmul.f32 %v2167, %v2524
    %v2545 = vmul.f32 %v2171, %v2524
    %v2546 = vmul.f32 %v2175, %v2524
    %v2547 = vmul.f32 %v2179, %v2524
    %v2548 = vmul.f32 %v2183, %v2524
    %v2549 = vmul.f32 %v2187, %v2524
    %v2550 = vmul.f32 %v2191, %v2524
    %v2551 = vmul.f32 %v2195, %v2524
    %v2552 = vmul.f32 %v2199, %v2524
    %v2553 = vmul.f32 %v2203, %v2524
    %v2554 = vmul.f32 %v2207, %v2524
    %v2555 = vmul.f32 %v2211, %v2524
    %v2556 = vmul.f32 %v2215, %v2524
    %v2557 = vmul.f32 %v2219, %v2524
    %v2558 = vmul.f32 %v2223, %v2524
    %v2559 = vmul.f32 %v2227, %v2524
    %v2560 = vmul.f32 %v2231, %v2524
    %v2561 = vmul.f32 %v2235, %v2524
    %v2562 = vmul.f32 %v2239, %v2524
    %v2563 = vmul.f32 %v2243, %v2524
    %v2564 = vmul.f32 %v2247, %v2524
    %v2565 = vmul.f32 %v2251, %v2524
    %v2566 = vmul.f32 %v2255, %v2524
    %v2567 = vmul.f32 %v2259, %v2524
    %v2568 = vmul.f32 %v2263, %v2524
    %v2569 = vmul.f32 %v2267, %v2524
    %v2570 = vmul.f32 %v2271, %v2524
    %v2571 = vmul.f32 %v2275, %v2524
    %v2572 = vmul.f32 %v2279, %v2524
    %v2573 = vmul.f32 %v2283, %v2524
    %v2574 = vmul.f32 %v2287, %v2524
    %v2575 = vmul.f32 %v2291, %v2524
    %v2576 = vmul.f32 %v2295, %v2524
    %v2577 = vmul.f32 %v2299, %v2524
    %v2578 = vmul.f32 %v2303, %v2524
    %v2579 = vmul.f32 %v2307, %v2524
    %v2580 = vmul.f32 %v2311, %v2524
    %v2581 = vmul.f32 %v2315, %v2524
    %v2582 = vmul.f32 %v2319, %v2524
    %v2583 = vmul.f32 %v2323, %v2524
    %v2584 = vmul.f32 %v2327, %v2524
    %v2585 = vmul.f32 %v2331, %v2524
    %v2586 = vmul.f32 %v2335, %v2524
    %v2587 = vmul.f32 %v2339, %v2524
    %v2588 = vmul.f32 %v2343, %v2524
    %v2589 = vmul.f32 %v2347, %v2524
    %v2590 = vmul.f32 %v2351, %v2524
    %v2591 = vmul.f32 %v2355, %v2524
    %v2592 = vmul.f32 %v2359, %v2524
    %v2593 = vmul.f32 %v2363, %v2524
    %v2594 = vmul.f32 %v2367, %v2524
    %v2595 = vmul.f32 %v2371, %v2524
    %v2596 = vmul.f32 %v2375, %v2524
    %v2597 = vmul.f32 %v2379, %v2524
    %v2598 = vmul.f32 %v2383, %v2524
    %v2599 = vmul.f32 %v2387, %v2524
    %v2600 = vmul.f32 %v2391, %v2524
    %v2601 = vmul.f32 %v2395, %v2524
    %v2602 = vmul.f32 %v2399, %v2524
    %v2603 = vmul.f32 %v2403, %v2524
    %v2604 = vmul.f32 %v2407, %v2524
    %v2605 = vmul.f32 %v2411, %v2524
    %v2606 = vmul.f32 %v2415, %v2524
    %v2607 = vmul.f32 %v2419, %v2524
    %v2608 = vmul.f32 %v2423, %v2524
    %v2609 = vmul.f32 %v2427, %v2524
    %v2610 = vmul.f32 %v2431, %v2524
    %v2611 = vmul.f32 %v2435, %v2524
    %v2612 = vmul.f32 %v2439, %v2524
    %v2613 = vmul.f32 %v2443, %v2524
    %v2614 = vmul.f32 %v2447, %v2524
    %v2615 = vmul.f32 %v2451, %v2524
    %v2616 = vmul.f32 %v2455, %v2524
    %v2617 = vmul.f32 %v2459, %v2524
    %v2618 = vmul.f32 %v2463, %v2524
    %v2619 = vmul.f32 %v2467, %v2524
    %v2620 = vmul.f32 %v2471, %v2524
    %v2621 = vmul.f32 %v2475, %v2524
    %v2622 = vmul.f32 %v2479, %v2524
    %v2623 = vmul.f32 %v2483, %v2524
    %v2624 = vmul.f32 %v2487, %v2524
    %v2625 = vmul.f32 %v2491, %v2524
    %v2626 = vmul.f32 %v2495, %v2524
    %v2627 = vmul.f32 %v2499, %v2524
    %v2628 = vmul.f32 %v2503, %v2524
    %v2629 = vmul.f32 %v2507, %v2524
    %v2630 = vmul.f32 %v2511, %v2524
    %v2631 = vmul.f32 %v2515, %v2524
    %v2632 = vmul.f32 %v2519, %v2524
    %v2633 = vadd.f32 %v1981, %v2525
    %v2634 = vadd.f32 %v1982, %v2526
    %v2635 = vadd.f32 %v1983, %v2527
    %v2636 = vadd.f32 %v1984, %v2528
    %v2637 = vadd.f32 %v1985, %v2529
    %v2638 = vadd.f32 %v1986, %v2530
    %v2639 = vadd.f32 %v1987, %v2531
    %v2640 = vadd.f32 %v1988, %v2532
    %v2641 = vadd.f32 %v1989, %v2533
    %v2642 = vadd.f32 %v1990, %v2534
    %v2643 = vadd.f32 %v1991, %v2535
    %v2644 = vadd.f32 %v1992, %v2536
    %v2645 = vadd.f32 %v1993, %v2537
    %v2646 = vadd.f32 %v1994, %v2538
    %v2647 = vadd.f32 %v1995, %v2539
    %v2648 = vadd.f32 %v1996, %v2540
    %v2649 = vadd.f32 %v1997, %v2541
    %v2650 = vadd.f32 %v1998, %v2542
    %v2651 = vadd.f32 %v1999, %v2543
    %v2652 = vadd.f32 %v2000, %v2544
    %v2653 = vadd.f32 %v2001, %v2545
    %v2654 = vadd.f32 %v2002, %v2546
    %v2655 = vadd.f32 %v2003, %v2547
    %v2656 = vadd.f32 %v2004, %v2548
    %v2657 = vadd.f32 %v2005, %v2549
    %v2658 = vadd.f32 %v2006, %v2550
    %v2659 = vadd.f32 %v2007, %v2551
    %v2660 = vadd.f32 %v2008, %v2552
    %v2661 = vadd.f32 %v2009, %v2553
    %v2662 = vadd.f32 %v2010, %v2554
    %v2663 = vadd.f32 %v2011, %v2555
    %v2664 = vadd.f32 %v2012, %v2556
    %v2665 = vadd.f32 %v2013, %v2557
    %v2666 = vadd.f32 %v2014, %v2558
    %v2667 = vadd.f32 %v2015, %v2559
    %v2668 = vadd.f32 %v2016, %v2560
    %v2669 = vadd.f32 %v2017, %v2561
    %v2670 = vadd.f32 %v2018, %v2562
    %v2671 = vadd.f32 %v2019, %v2563
    %v2672 = vadd.f32 %v2020, %v2564
    %v2673 = vadd.f32 %v2021, %v2565
    %v2674 = vadd.f32 %v2022, %v2566
    %v2675 = vadd.f32 %v2023, %v2567
    %v2676 = vadd.f32 %v2024, %v2568
    %v2677 = vadd.f32 %v2025, %v2569
    %v2678 = vadd.f32 %v2026, %v2570
    %v2679 = vadd.f32 %v2027, %v2571
    %v2680 = vadd.f32 %v2028, %v2572
    %v2681 = vadd.f32 %v2029, %v2573
    %v2682 = vadd.f32 %v2030, %v2574
    %v2683 = vadd.f32 %v2031, %v2575
    %v2684 = vadd.f32 %v2032, %v2576
    %v2685 = vadd.f32 %v2033, %v2577
    %v2686 = vadd.f32 %v2034, %v2578
    %v2687 = vadd.f32 %v2035, %v2579
    %v2688 = vadd.f32 %v2036, %v2580
    %v2689 = vadd.f32 %v2037, %v2581
    %v2690 = vadd.f32 %v2038, %v2582
    %v2691 = vadd.f32 %v2039, %v2583
    %v2692 = vadd.f32 %v2040, %v2584
    %v2693 = vadd.f32 %v2041, %v2585
    %v2694 = vadd.f32 %v2042, %v2586
    %v2695 = vadd.f32 %v2043, %v2587
    %v2696 = vadd.f32 %v2044, %v2588
    %v2697 = vadd.f32 %v2045, %v2589
    %v2698 = vadd.f32 %v2046, %v2590
    %v2699 = vadd.f32 %v2047, %v2591
    %v2700 = vadd.f32 %v2048, %v2592
    %v2701 = vadd.f32 %v2049, %v2593
    %v2702 = vadd.f32 %v2050, %v2594
    %v2703 = vadd.f32 %v2051, %v2595
    %v2704 = vadd.f32 %v2052, %v2596
    %v2705 = vadd.f32 %v2053, %v2597
    %v2706 = vadd.f32 %v2054, %v2598
    %v2707 = vadd.f32 %v2055, %v2599
    %v2708 = vadd.f32 %v2056, %v2600
    %v2709 = vadd.f32 %v2057, %v2601
    %v2710 = vadd.f32 %v2058, %v2602
    %v2711 = vadd.f32 %v2059, %v2603
    %v2712 = vadd.f32 %v2060, %v2604
    %v2713 = vadd.f32 %v2061, %v2605
    %v2714 = vadd.f32 %v2062, %v2606
    %v2715 = vadd.f32 %v2063, %v2607
    %v2716 = vadd.f32 %v2064, %v2608
    %v2717 = vadd.f32 %v2065, %v2609
    %v2718 = vadd.f32 %v2066, %v2610
    %v2719 = vadd.f32 %v2067, %v2611
    %v2720 = vadd.f32 %v2068, %v2612
    %v2721 = vadd.f32 %v2069, %v2613
    %v2722 = vadd.f32 %v2070, %v2614
    %v2723 = vadd.f32 %v2071, %v2615
    %v2724 = vadd.f32 %v2072, %v2616
    %v2725 = vadd.f32 %v2073, %v2617
    %v2726 = vadd.f32 %v2074, %v2618
    %v2727 = vadd.f32 %v2075, %v2619
    %v2728 = vadd.f32 %v2076, %v2620
    %v2729 = vadd.f32 %v2077, %v2621
    %v2730 = vadd.f32 %v2078, %v2622
    %v2731 = vadd.f32 %v2079, %v2623
    %v2732 = vadd.f32 %v2080, %v2624
    %v2733 = vadd.f32 %v2081, %v2625
    %v2734 = vadd.f32 %v2082, %v2626
    %v2735 = vadd.f32 %v2083, %v2627
    %v2736 = vadd.f32 %v2084, %v2628
    %v2737 = vadd.f32 %v2085, %v2629
    %v2738 = vadd.f32 %v2086, %v2630
    %v2739 = vadd.f32 %v2087, %v2631
    %v2740 = vadd.f32 %v2088, %v2632
    %v2741 = vmax.f32 %v2633, 0.0
    %v2742 = vmax.f32 %v2634, 0.0
    %v2743 = vmax.f32 %v2635, 0.0
    %v2744 = vmax.f32 %v2636, 0.0
    %v2745 = vmax.f32 %v2637, 0.0
    %v2746 = vmax.f32 %v2638, 0.0
    %v2747 = vmax.f32 %v2639, 0.0
    %v2748 = vmax.f32 %v2640, 0.0
    %v2749 = vmax.f32 %v2641, 0.0
    %v2750 = vmax.f32 %v2642, 0.0
    %v2751 = vmax.f32 %v2643, 0.0
    %v2752 = vmax.f32 %v2644, 0.0
    %v2753 = vmax.f32 %v2645, 0.0
    %v2754 = vmax.f32 %v2646, 0.0
    %v2755 = vmax.f32 %v2647, 0.0
    %v2756 = vmax.f32 %v2648, 0.0
    %v2757 = vmax.f32 %v2649, 0.0
    %v2758 = vmax.f32 %v2650, 0.0
    %v2759 = vmax.f32 %v2651, 0.0
    %v2760 = vmax.f32 %v2652, 0.0
    %v2761 = vmax.f32 %v2653, 0.0
    %v2762 = vmax.f32 %v2654, 0.0
    %v2763 = vmax.f32 %v2655, 0.0
    %v2764 = vmax.f32 %v2656, 0.0
    %v2765 = vmax.f32 %v2657, 0.0
    %v2766 = vmax.f32 %v2658, 0.0
    %v2767 = vmax.f32 %v2659, 0.0
    %v2768 = vmax.f32 %v2660, 0.0
    %v2769 = vmax.f32 %v2661, 0.0
    %v2770 = vmax.f32 %v2662, 0.0
    %v2771 = vmax.f32 %v2663, 0.0
    %v2772 = vmax.f32 %v2664, 0.0
    %v2773 = vmax.f32 %v2665, 0.0
    %v2774 = vmax.f32 %v2666, 0.0
    %v2775 = vmax.f32 %v2667, 0.0
    %v2776 = vmax.f32 %v2668, 0.0
    %v2777 = vmax.f32 %v2669, 0.0
    %v2778 = vmax.f32 %v2670, 0.0
    %v2779 = vmax.f32 %v2671, 0.0
    %v2780 = vmax.f32 %v2672, 0.0
    %v2781 = vmax.f32 %v2673, 0.0
    %v2782 = vmax.f32 %v2674, 0.0
    %v2783 = vmax.f32 %v2675, 0.0
    %v2784 = vmax.f32 %v2676, 0.0
    %v2785 = vmax.f32 %v2677, 0.0
    %v2786 = vmax.f32 %v2678, 0.0
    %v2787 = vmax.f32 %v2679, 0.0
    %v2788 = vmax.f32 %v2680, 0.0
    %v2789 = vmax.f32 %v2681, 0.0
    %v2790 = vmax.f32 %v2682, 0.0
    %v2791 = vmax.f32 %v2683, 0.0
    %v2792 = vmax.f32 %v2684, 0.0
    %v2793 = vmax.f32 %v2685, 0.0
    %v2794 = vmax.f32 %v2686, 0.0
    %v2795 = vmax.f32 %v2687, 0.0
    %v2796 = vmax.f32 %v2688, 0.0
    %v2797 = vmax.f32 %v2689, 0.0
    %v2798 = vmax.f32 %v2690, 0.0
    %v2799 = vmax.f32 %v2691, 0.0
    %v2800 = vmax.f32 %v2692, 0.0
    %v2801 = vmax.f32 %v2693, 0.0
    %v2802 = vmax.f32 %v2694, 0.0
    %v2803 = vmax.f32 %v2695, 0.0
    %v2804 = vmax.f32 %v2696, 0.0
    %v2805 = vmax.f32 %v2697, 0.0
    %v2806 = vmax.f32 %v2698, 0.0
    %v2807 = vmax.f32 %v2699, 0.0
    %v2808 = vmax.f32 %v2700, 0.0
    %v2809 = vmax.f32 %v2701, 0.0
    %v2810 = vmax.f32 %v2702, 0.0
    %v2811 = vmax.f32 %v2703, 0.0
    %v2812 = vmax.f32 %v2704, 0.0
    %v2813 = vmax.f32 %v2705, 0.0
    %v2814 = vmax.f32 %v2706, 0.0
    %v2815 = vmax.f32 %v2707, 0.0
    %v2816 = vmax.f32 %v2708, 0.0
    %v2817 = vmax.f32 %v2709, 0.0
    %v2818 = vmax.f32 %v2710, 0.0
    %v2819 = vmax.f32 %v2711, 0.0
    %v2820 = vmax.f32 %v2712, 0.0
    %v2821 = vmax.f32 %v2713, 0.0
    %v2822 = vmax.f32 %v2714, 0.0
    %v2823 = vmax.f32 %v2715, 0.0
    %v2824 = vmax.f32 %v2716, 0.0
    %v2825 = vmax.f32 %v2717, 0.0
    %v2826 = vmax.f32 %v2718, 0.0
    %v2827 = vmax.f32 %v2719, 0.0
    %v2828 = vmax.f32 %v2720, 0.0
    %v2829 = vmax.f32 %v2721, 0.0
    %v2830 = vmax.f32 %v2722, 0.0
    %v2831 = vmax.f32 %v2723, 0.0
    %v2832 = vmax.f32 %v2724, 0.0
    %v2833 = vmax.f32 %v2725, 0.0
    %v2834 = vmax.f32 %v2726, 0.0
    %v2835 = vmax.f32 %v2727, 0.0
    %v2836 = vmax.f32 %v2728, 0.0
    %v2837 = vmax.f32 %v2729, 0.0
    %v2838 = vmax.f32 %v2730, 0.0
    %v2839 = vmax.f32 %v2731, 0.0
    %v2840 = vmax.f32 %v2732, 0.0
    %v2841 = vmax.f32 %v2733, 0.0
    %v2842 = vmax.f32 %v2734, 0.0
    %v2843 = vmax.f32 %v2735, 0.0
    %v2844 = vmax.f32 %v2736, 0.0
    %v2845 = vmax.f32 %v2737, 0.0
    %v2846 = vmax.f32 %v2738, 0.0
    %v2847 = vmax.f32 %v2739, 0.0
    %v2848 = vmax.f32 %v2740, 0.0
    %vm2945 = vcmask 1046528
    %v2946 = vrot.slane %v2741, 1
    %v2947 = vrot.slane %v2742, 1
    %v2948 = vsel %vm2945, %v2946, %v2947
    %v2949 = vrot.slane %v2743, 1
    %v2950 = vsel %vm2945, %v2947, %v2949
    %v2951 = vrot.slane %v2744, 1
    %v2952 = vrot.slane %v2745, 1
    %v2953 = vsel %vm2945, %v2951, %v2952
    %v2954 = vrot.slane %v2746, 1
    %v2955 = vsel %vm2945, %v2952, %v2954
    %v2956 = vrot.slane %v2747, 1
    %v2957 = vrot.slane %v2748, 1
    %v2958 = vsel %vm2945, %v2956, %v2957
    %v2959 = vrot.slane %v2749, 1
    %v2960 = vsel %vm2945, %v2957, %v2959
    %v2961 = vrot.slane %v2750, 1
    %v2962 = vrot.slane %v2751, 1
    %v2963 = vsel %vm2945, %v2961, %v2962
    %v2964 = vrot.slane %v2752, 1
    %v2965 = vsel %vm2945, %v2962, %v2964
    %v2966 = vrot.slane %v2753, 1
    %v2967 = vrot.slane %v2754, 1
    %v2968 = vsel %vm2945, %v2966, %v2967
    %v2969 = vrot.slane %v2755, 1
    %v2970 = vsel %vm2945, %v2967, %v2969
    %v2971 = vrot.slane %v2756, 1
    %v2972 = vrot.slane %v2757, 1
    %v2973 = vsel %vm2945, %v2971, %v2972
    %v2974 = vrot.slane %v2758, 1
    %v2975 = vsel %vm2945, %v2972, %v2974
    %v2976 = vrot.slane %v2759, 1
    %v2977 = vrot.slane %v2760, 1
    %v2978 = vsel %vm2945, %v2976, %v2977
    %v2979 = vrot.slane %v2761, 1
    %v2980 = vsel %vm2945, %v2977, %v2979
    %v2981 = vrot.slane %v2762, 1
    %v2982 = vrot.slane %v2763, 1
    %v2983 = vsel %vm2945, %v2981, %v2982
    %v2984 = vrot.slane %v2764, 1
    %v2985 = vsel %vm2945, %v2982, %v2984
    %v2986 = vrot.slane %v2765, 1
    %v2987 = vrot.slane %v2766, 1
    %v2988 = vsel %vm2945, %v2986, %v2987
    %v2989 = vrot.slane %v2767, 1
    %v2990 = vsel %vm2945, %v2987, %v2989
    %v2991 = vrot.slane %v2768, 1
    %v2992 = vrot.slane %v2769, 1
    %v2993 = vsel %vm2945, %v2991, %v2992
    %v2994 = vrot.slane %v2770, 1
    %v2995 = vsel %vm2945, %v2992, %v2994
    %v2996 = vrot.slane %v2771, 1
    %v2997 = vrot.slane %v2772, 1
    %v2998 = vsel %vm2945, %v2996, %v2997
    %v2999 = vrot.slane %v2773, 1
    %v3000 = vsel %vm2945, %v2997, %v2999
    %v3001 = vrot.slane %v2774, 1
    %v3002 = vrot.slane %v2775, 1
    %v3003 = vsel %vm2945, %v3001, %v3002
    %v3004 = vrot.slane %v2776, 1
    %v3005 = vsel %vm2945, %v3002, %v3004
    %v3006 = vrot.slane %v2777, 1
    %v3007 = vrot.slane %v2778, 1
    %v3008 = vsel %vm2945, %v3006, %v3007
    %v3009 = vrot.slane %v2779, 1
    %v3010 = vsel %vm2945, %v3007, %v3009
    %v3011 = vrot.slane %v2780, 1
    %v3012 = vrot.slane %v2781, 1
    %v3013 = vsel %vm2945, %v3011, %v3012
    %v3014 = vrot.slane %v2782, 1
    %v3015 = vsel %vm2945, %v3012, %v3014
    %v3016 = vrot.slane %v2783, 1
    %v3017 = vrot.slane %v2784, 1
    %v3018 = vsel %vm2945, %v3016, %v3017
    %v3019 = vrot.slane %v2785, 1
    %v3020 = vsel %vm2945, %v3017, %v3019
    %v3021 = vrot.slane %v2786, 1
    %v3022 = vrot.slane %v2787, 1
    %v3023 = vsel %vm2945, %v3021, %v3022
    %v3024 = vrot.slane %v2788, 1
    %v3025 = vsel %vm2945, %v3022, %v3024
    %v3026 = vrot.slane %v2795, 1
    %v3027 = vrot.slane %v2796, 1
    %v3028 = vsel %vm2945, %v3026, %v3027
    %v3029 = vrot.slane %v2797, 1
    %v3030 = vsel %vm2945, %v3027, %v3029
    %v3031 = vrot.slane %v2798, 1
    %v3032 = vrot.slane %v2799, 1
    %v3033 = vsel %vm2945, %v3031, %v3032
    %v3034 = vrot.slane %v2800, 1
    %v3035 = vsel %vm2945, %v3032, %v3034
    %v3036 = vrot.slane %v2801, 1
    %v3037 = vrot.slane %v2802, 1
    %v3038 = vsel %vm2945, %v3036, %v3037
    %v3039 = vrot.slane %v2803, 1
    %v3040 = vsel %vm2945, %v3037, %v3039
    %v3041 = vrot.slane %v2804, 1
    %v3042 = vrot.slane %v2805, 1
    %v3043 = vsel %vm2945, %v3041, %v3042
    %v3044 = vrot.slane %v2806, 1
    %v3045 = vsel %vm2945, %v3042, %v3044
    %v3046 = vrot.slane %v2807, 1
    %v3047 = vrot.slane %v2808, 1
    %v3048 = vsel %vm2945, %v3046, %v3047
    %v3049 = vrot.slane %v2809, 1
    %v3050 = vsel %vm2945, %v3047, %v3049
    %v3051 = vrot.slane %v2810, 1
    %v3052 = vrot.slane %v2811, 1
    %v3053 = vsel %vm2945, %v3051, %v3052
    %v3054 = vrot.slane %v2812, 1
    %v3055 = vsel %vm2945, %v3052, %v3054
    %v3056 = vrot.slane %v2813, 1
    %v3057 = vrot.slane %v2814, 1
    %v3058 = vsel %vm2945, %v3056, %v3057
    %v3059 = vrot.slane %v2815, 1
    %v3060 = vsel %vm2945, %v3057, %v3059
    %v3061 = vrot.slane %v2816, 1
    %v3062 = vrot.slane %v2817, 1
    %v3063 = vsel %vm2945, %v3061, %v3062
    %v3064 = vrot.slane %v2818, 1
    %v3065 = vsel %vm2945, %v3062, %v3064
    %v3066 = vrot.slane %v2819, 1
    %v3067 = vrot.slane %v2820, 1
    %v3068 = vsel %vm2945, %v3066, %v3067
    %v3069 = vrot.slane %v2821, 1
    %v3070 = vsel %vm2945, %v3067, %v3069
    %v3071 = vrot.slane %v2822, 1
    %v3072 = vrot.slane %v2823, 1
    %v3073 = vsel %vm2945, %v3071, %v3072
    %v3074 = vrot.slane %v2824, 1
    %v3075 = vsel %vm2945, %v3072, %v3074
    %v3076 = vrot.slane %v2825, 1
    %v3077 = vrot.slane %v2826, 1
    %v3078 = vsel %vm2945, %v3076, %v3077
    %v3079 = vrot.slane %v2827, 1
    %v3080 = vsel %vm2945, %v3077, %v3079
    %v3081 = vrot.slane %v2828, 1
    %v3082 = vrot.slane %v2829, 1
    %v3083 = vsel %vm2945, %v3081, %v3082
    %v3084 = vrot.slane %v2830, 1
    %v3085 = vsel %vm2945, %v3082, %v3084
    %v3086 = vrot.slane %v2831, 1
    %v3087 = vrot.slane %v2832, 1
    %v3088 = vsel %vm2945, %v3086, %v3087
    %v3089 = vrot.slane %v2833, 1
    %v3090 = vsel %vm2945, %v3087, %v3089
    %v3091 = vrot.slane %v2834, 1
    %v3092 = vrot.slane %v2835, 1
    %v3093 = vsel %vm2945, %v3091, %v3092
    %v3094 = vrot.slane %v2836, 1
    %v3095 = vsel %vm2945, %v3092, %v3094
    %v3096 = vrot.slane %v2837, 1
    %v3097 = vrot.slane %v2838, 1
    %v3098 = vsel %vm2945, %v3096, %v3097
    %v3099 = vrot.slane %v2839, 1
    %v3100 = vsel %vm2945, %v3097, %v3099
    %v3101 = vrot.slane %v2840, 1
    %v3102 = vrot.slane %v2841, 1
    %v3103 = vsel %vm2945, %v3101, %v3102
    %v3104 = vrot.slane %v2842, 1
    %v3105 = vsel %vm2945, %v3102, %v3104
    %3106 = vrot.lane.b32.xlu0 %v2948, 32
    %v3107 = vpop.permute.xlu0 %3106
    %3108 = vrot.lane.b32.xlu0 %v2950, 32
    %v3109 = vpop.permute.xlu0 %3108
    %3110 = vrot.lane.b32.xlu0 %v2953, 32
    %v3111 = vpop.permute.xlu0 %3110
    %3112 = vrot.lane.b32.xlu0 %v2955, 32
    %v3113 = vpop.permute.xlu0 %3112
    %3114 = vrot.lane.b32.xlu0 %v2958, 32
    %v3115 = vpop.permute.xlu0 %3114
    %3116 = vrot.lane.b32.xlu0 %v2960, 32
    %v3117 = vpop.permute.xlu0 %3116
    %3118 = vrot.lane.b32.xlu0 %v2963, 32
    %v3119 = vpop.permute.xlu0 %3118
    %3120 = vrot.lane.b32.xlu0 %v2965, 32
    %v3121 = vpop.permute.xlu0 %3120
    %3122 = vrot.lane.b32.xlu0 %v2968, 32
    %v3123 = vpop.permute.xlu0 %3122
    %3124 = vrot.lane.b32.xlu0 %v2970, 32
    %v3125 = vpop.permute.xlu0 %3124
    %3126 = vrot.lane.b32.xlu0 %v2973, 32
    %v3127 = vpop.permute.xlu0 %3126
    %3128 = vrot.lane.b32.xlu0 %v2975, 32
    %v3129 = vpop.permute.xlu0 %3128
    %3130 = vrot.lane.b32.xlu0 %v2978, 32
    %v3131 = vpop.permute.xlu0 %3130
    %3132 = vrot.lane.b32.xlu0 %v2980, 32
    %v3133 = vpop.permute.xlu0 %3132
    %3134 = vrot.lane.b32.xlu0 %v2983, 32
    %v3135 = vpop.permute.xlu0 %3134
    %3136 = vrot.lane.b32.xlu0 %v2985, 32
    %v3137 = vpop.permute.xlu0 %3136
    %3138 = vrot.lane.b32.xlu0 %v2988, 32
    %v3139 = vpop.permute.xlu0 %3138
    %3140 = vrot.lane.b32.xlu0 %v2990, 32
    %v3141 = vpop.permute.xlu0 %3140
    %3142 = vrot.lane.b32.xlu0 %v2993, 32
    %v3143 = vpop.permute.xlu0 %3142
    %3144 = vrot.lane.b32.xlu0 %v2995, 32
    %v3145 = vpop.permute.xlu0 %3144
    %3146 = vrot.lane.b32.xlu0 %v2998, 32
    %v3147 = vpop.permute.xlu0 %3146
    %3148 = vrot.lane.b32.xlu0 %v3000, 32
    %v3149 = vpop.permute.xlu0 %3148
    %3150 = vrot.lane.b32.xlu0 %v3003, 32
    %v3151 = vpop.permute.xlu0 %3150
    %3152 = vrot.lane.b32.xlu0 %v3005, 32
    %v3153 = vpop.permute.xlu0 %3152
    %3154 = vrot.lane.b32.xlu0 %v3008, 32
    %v3155 = vpop.permute.xlu0 %3154
    %3156 = vrot.lane.b32.xlu0 %v3010, 32
    %v3157 = vpop.permute.xlu0 %3156
    %3158 = vrot.lane.b32.xlu0 %v3013, 32
    %v3159 = vpop.permute.xlu0 %3158
    %3160 = vrot.lane.b32.xlu0 %v3015, 32
    %v3161 = vpop.permute.xlu0 %3160
    %3162 = vrot.lane.b32.xlu0 %v3018, 32
    %v3163 = vpop.permute.xlu0 %3162
    %3164 = vrot.lane.b32.xlu0 %v3020, 32
    %v3165 = vpop.permute.xlu0 %3164
    %3166 = vrot.lane.b32.xlu0 %v3023, 32
    %v3167 = vpop.permute.xlu0 %3166
    %3168 = vrot.lane.b32.xlu0 %v3025, 32
    %v3169 = vpop.permute.xlu0 %3168
    %3170 = vrot.lane.b32.xlu0 %v3028, 32
    %v3171 = vpop.permute.xlu0 %3170
    %3172 = vrot.lane.b32.xlu0 %v3030, 32
    %v3173 = vpop.permute.xlu0 %3172
    %3174 = vrot.lane.b32.xlu0 %v3033, 32
    %v3175 = vpop.permute.xlu0 %3174
    %3176 = vrot.lane.b32.xlu0 %v3035, 32
    %v3177 = vpop.permute.xlu0 %3176
    %3178 = vrot.lane.b32.xlu0 %v3038, 32
    %v3179 = vpop.permute.xlu0 %3178
    %3180 = vrot.lane.b32.xlu0 %v3040, 32
    %v3181 = vpop.permute.xlu0 %3180
    %3182 = vrot.lane.b32.xlu0 %v3043, 32
    %v3183 = vpop.permute.xlu0 %3182
    %3184 = vrot.lane.b32.xlu0 %v3045, 32
    %v3185 = vpop.permute.xlu0 %3184
    %3186 = vrot.lane.b32.xlu0 %v3048, 32
    %v3187 = vpop.permute.xlu0 %3186
    %3188 = vrot.lane.b32.xlu0 %v3050, 32
    %v3189 = vpop.permute.xlu0 %3188
    %3190 = vrot.lane.b32.xlu0 %v3053, 32
    %v3191 = vpop.permute.xlu0 %3190
    %3192 = vrot.lane.b32.xlu0 %v3055, 32
    %v3193 = vpop.permute.xlu0 %3192
    %3194 = vrot.lane.b32.xlu0 %v3058, 32
    %v3195 = vpop.permute.xlu0 %3194
    %3196 = vrot.lane.b32.xlu0 %v3060, 32
    %v3197 = vpop.permute.xlu0 %3196
    %3198 = vrot.lane.b32.xlu0 %v3063, 32
    %v3199 = vpop.permute.xlu0 %3198
    %3200 = vrot.lane.b32.xlu0 %v3065, 32
    %v3201 = vpop.permute.xlu0 %3200
    %3202 = vrot.lane.b32.xlu0 %v3068, 32
    %v3203 = vpop.permute.xlu0 %3202
    %3204 = vrot.lane.b32.xlu0 %v3070, 32
    %v3205 = vpop.permute.xlu0 %3204
    %3206 = vrot.lane.b32.xlu0 %v3073, 32
    %v3207 = vpop.permute.xlu0 %3206
    %3208 = vrot.lane.b32.xlu0 %v3075, 32
    %v3209 = vpop.permute.xlu0 %3208
    %3210 = vrot.lane.b32.xlu0 %v3078, 32
    %v3211 = vpop.permute.xlu0 %3210
    %3212 = vrot.lane.b32.xlu0 %v3080, 32
    %v3213 = vpop.permute.xlu0 %3212
    %3214 = vrot.lane.b32.xlu0 %v3083, 32
    %v3215 = vpop.permute.xlu0 %3214
    %3216 = vrot.lane.b32.xlu0 %v3085, 32
    %v3217 = vpop.permute.xlu0 %3216
    %3218 = vrot.lane.b32.xlu0 %v3088, 32
    %v3219 = vpop.permute.xlu0 %3218
    %3220 = vrot.lane.b32.xlu0 %v3090, 32
    %v3221 = vpop.permute.xlu0 %3220
    %3222 = vrot.lane.b32.xlu0 %v3093, 32
    %v3223 = vpop.permute.xlu0 %3222
    %3224 = vrot.lane.b32.xlu0 %v3095, 32
    %v3225 = vpop.permute.xlu0 %3224
    %3226 = vrot.lane.b32.xlu0 %v3098, 32
    %v3227 = vpop.permute.xlu0 %3226
    %3228 = vrot.lane.b32.xlu0 %v3100, 32
    %v3229 = vpop.permute.xlu0 %3228
    %3230 = vrot.lane.b32.xlu0 %v3103, 32
    %v3231 = vpop.permute.xlu0 %3230
    %3232 = vrot.lane.b32.xlu0 %v3105, 32
    %v3233 = vpop.permute.xlu0 %3232
    %vm3298 = vcmask 1045504
    %v3299 = vrot.slane %v2741, 2
    %v3300 = vrot.slane %v2742, 2
    %v3301 = vsel %vm3298, %v3299, %v3300
    %v3302 = vrot.slane %v2743, 2
    %v3303 = vsel %vm3298, %v3300, %v3302
    %v3304 = vrot.slane %v2744, 2
    %v3305 = vrot.slane %v2745, 2
    %v3306 = vsel %vm3298, %v3304, %v3305
    %v3307 = vrot.slane %v2746, 2
    %v3308 = vsel %vm3298, %v3305, %v3307
    %v3309 = vrot.slane %v2747, 2
    %v3310 = vrot.slane %v2748, 2
    %v3311 = vsel %vm3298, %v3309, %v3310
    %v3312 = vrot.slane %v2749, 2
    %v3313 = vsel %vm3298, %v3310, %v3312
    %v3314 = vrot.slane %v2750, 2
    %v3315 = vrot.slane %v2751, 2
    %v3316 = vsel %vm3298, %v3314, %v3315
    %v3317 = vrot.slane %v2752, 2
    %v3318 = vsel %vm3298, %v3315, %v3317
    %v3319 = vrot.slane %v2753, 2
    %v3320 = vrot.slane %v2754, 2
    %v3321 = vsel %vm3298, %v3319, %v3320
    %v3322 = vrot.slane %v2755, 2
    %v3323 = vsel %vm3298, %v3320, %v3322
    %v3324 = vrot.slane %v2756, 2
    %v3325 = vrot.slane %v2757, 2
    %v3326 = vsel %vm3298, %v3324, %v3325
    %v3327 = vrot.slane %v2758, 2
    %v3328 = vsel %vm3298, %v3325, %v3327
    %v3329 = vrot.slane %v2759, 2
    %v3330 = vrot.slane %v2760, 2
    %v3331 = vsel %vm3298, %v3329, %v3330
    %v3332 = vrot.slane %v2761, 2
    %v3333 = vsel %vm3298, %v3330, %v3332
    %v3334 = vrot.slane %v2762, 2
    %v3335 = vrot.slane %v2763, 2
    %v3336 = vsel %vm3298, %v3334, %v3335
    %v3337 = vrot.slane %v2764, 2
    %v3338 = vsel %vm3298, %v3335, %v3337
    %v3339 = vrot.slane %v2765, 2
    %v3340 = vrot.slane %v2766, 2
    %v3341 = vsel %vm3298, %v3339, %v3340
    %v3342 = vrot.slane %v2767, 2
    %v3343 = vsel %vm3298, %v3340, %v3342
    %v3344 = vrot.slane %v2768, 2
    %v3345 = vrot.slane %v2769, 2
    %v3346 = vsel %vm3298, %v3344, %v3345
    %v3347 = vrot.slane %v2770, 2
    %v3348 = vsel %vm3298, %v3345, %v3347
    %v3349 = vrot.slane %v2771, 2
    %v3350 = vrot.slane %v2772, 2
    %v3351 = vsel %vm3298, %v3349, %v3350
    %v3352 = vrot.slane %v2773, 2
    %v3353 = vsel %vm3298, %v3350, %v3352
    %v3354 = vrot.slane %v2774, 2
    %v3355 = vrot.slane %v2775, 2
    %v3356 = vsel %vm3298, %v3354, %v3355
    %v3357 = vrot.slane %v2776, 2
    %v3358 = vsel %vm3298, %v3355, %v3357
    %v3359 = vrot.slane %v2777, 2
    %v3360 = vrot.slane %v2778, 2
    %v3361 = vsel %vm3298, %v3359, %v3360
    %v3362 = vrot.slane %v2779, 2
    %v3363 = vsel %vm3298, %v3360, %v3362
    %v3364 = vrot.slane %v2780, 2
    %v3365 = vrot.slane %v2781, 2
    %v3366 = vsel %vm3298, %v3364, %v3365
    %v3367 = vrot.slane %v2782, 2
    %v3368 = vsel %vm3298, %v3365, %v3367
    %v3369 = vrot.slane %v2783, 2
    %v3370 = vrot.slane %v2784, 2
    %v3371 = vsel %vm3298, %v3369, %v3370
    %v3372 = vrot.slane %v2785, 2
    %v3373 = vsel %vm3298, %v3370, %v3372
    %v3374 = vrot.slane %v2786, 2
    %v3375 = vrot.slane %v2787, 2
    %v3376 = vsel %vm3298, %v3374, %v3375
    %v3377 = vrot.slane %v2788, 2
    %v3378 = vsel %vm3298, %v3375, %v3377
    %v3379 = vrot.slane %v2795, 2
    %v3380 = vrot.slane %v2796, 2
    %v3381 = vsel %vm3298, %v3379, %v3380
    %v3382 = vrot.slane %v2797, 2
    %v3383 = vsel %vm3298, %v3380, %v3382
    %v3384 = vrot.slane %v2798, 2
    %v3385 = vrot.slane %v2799, 2
    %v3386 = vsel %vm3298, %v3384, %v3385
    %v3387 = vrot.slane %v2800, 2
    %v3388 = vsel %vm3298, %v3385, %v3387
    %v3389 = vrot.slane %v2801, 2
    %v3390 = vrot.slane %v2802, 2
    %v3391 = vsel %vm3298, %v3389, %v3390
    %v3392 = vrot.slane %v2803, 2
    %v3393 = vsel %vm3298, %v3390, %v3392
    %v3394 = vrot.slane %v2804, 2
    %v3395 = vrot.slane %v2805, 2
    %v3396 = vsel %vm3298, %v3394, %v3395
    %v3397 = vrot.slane %v2806, 2
    %v3398 = vsel %vm3298, %v3395, %v3397
    %v3399 = vrot.slane %v2807, 2
    %v3400 = vrot.slane %v2808, 2
    %v3401 = vsel %vm3298, %v3399, %v3400
    %v3402 = vrot.slane %v2809, 2
    %v3403 = vsel %vm3298, %v3400, %v3402
    %v3404 = vrot.slane %v2810, 2
    %v3405 = vrot.slane %v2811, 2
    %v3406 = vsel %vm3298, %v3404, %v3405
    %v3407 = vrot.slane %v2812, 2
    %v3408 = vsel %vm3298, %v3405, %v3407
    %v3409 = vrot.slane %v2813, 2
    %v3410 = vrot.slane %v2814, 2
    %v3411 = vsel %vm3298, %v3409, %v3410
    %v3412 = vrot.slane %v2815, 2
    %v3413 = vsel %vm3298, %v3410, %v3412
    %v3414 = vrot.slane %v2816, 2
    %v3415 = vrot.slane %v2817, 2
    %v3416 = vsel %vm3298, %v3414, %v3415
    %v3417 = vrot.slane %v2818, 2
    %v3418 = vsel %vm3298, %v3415, %v3417
    %v3419 = vrot.slane %v2819, 2
    %v3420 = vrot.slane %v2820, 2
    %v3421 = vsel %vm3298, %v3419, %v3420
    %v3422 = vrot.slane %v2821, 2
    %v3423 = vsel %vm3298, %v3420, %v3422
    %v3424 = vrot.slane %v2822, 2
    %v3425 = vrot.slane %v2823, 2
    %v3426 = vsel %vm3298, %v3424, %v3425
    %v3427 = vrot.slane %v2824, 2
    %v3428 = vsel %vm3298, %v3425, %v3427
    %v3429 = vrot.slane %v2825, 2
    %v3430 = vrot.slane %v2826, 2
    %v3431 = vsel %vm3298, %v3429, %v3430
    %v3432 = vrot.slane %v2827, 2
    %v3433 = vsel %vm3298, %v3430, %v3432
    %v3434 = vrot.slane %v2828, 2
    %v3435 = vrot.slane %v2829, 2
    %v3436 = vsel %vm3298, %v3434, %v3435
    %v3437 = vrot.slane %v2830, 2
    %v3438 = vsel %vm3298, %v3435, %v3437
    %v3439 = vrot.slane %v2831, 2
    %v3440 = vrot.slane %v2832, 2
    %v3441 = vsel %vm3298, %v3439, %v3440
    %v3442 = vrot.slane %v2833, 2
    %v3443 = vsel %vm3298, %v3440, %v3442
    %v3444 = vrot.slane %v2834, 2
    %v3445 = vrot.slane %v2835, 2
    %v3446 = vsel %vm3298, %v3444, %v3445
    %v3447 = vrot.slane %v2836, 2
    %v3448 = vsel %vm3298, %v3445, %v3447
    %v3449 = vrot.slane %v2837, 2
    %v3450 = vrot.slane %v2838, 2
    %v3451 = vsel %vm3298, %v3449, %v3450
    %v3452 = vrot.slane %v2839, 2
    %v3453 = vsel %vm3298, %v3450, %v3452
    %v3454 = vrot.slane %v2840, 2
    %v3455 = vrot.slane %v2841, 2
    %v3456 = vsel %vm3298, %v3454, %v3455
    %v3457 = vrot.slane %v2842, 2
    %v3458 = vsel %vm3298, %v3455, %v3457
    %3459 = vrot.lane.b32.xlu0 %v3301, 64
    %v3460 = vpop.permute.xlu0 %3459
    %3461 = vrot.lane.b32.xlu0 %v3303, 64
    %v3462 = vpop.permute.xlu0 %3461
    %3463 = vrot.lane.b32.xlu0 %v3306, 64
    %v3464 = vpop.permute.xlu0 %3463
    %3465 = vrot.lane.b32.xlu0 %v3308, 64
    %v3466 = vpop.permute.xlu0 %3465
    %3467 = vrot.lane.b32.xlu0 %v3311, 64
    %v3468 = vpop.permute.xlu0 %3467
    %3469 = vrot.lane.b32.xlu0 %v3313, 64
    %v3470 = vpop.permute.xlu0 %3469
    %3471 = vrot.lane.b32.xlu0 %v3316, 64
    %v3472 = vpop.permute.xlu0 %3471
    %3473 = vrot.lane.b32.xlu0 %v3318, 64
    %v3474 = vpop.permute.xlu0 %3473
    %3475 = vrot.lane.b32.xlu0 %v3321, 64
    %v3476 = vpop.permute.xlu0 %3475
    %3477 = vrot.lane.b32.xlu0 %v3323, 64
    %v3478 = vpop.permute.xlu0 %3477
    %3479 = vrot.lane.b32.xlu0 %v3326, 64
    %v3480 = vpop.permute.xlu0 %3479
    %3481 = vrot.lane.b32.xlu0 %v3328, 64
    %v3482 = vpop.permute.xlu0 %3481
    %3483 = vrot.lane.b32.xlu0 %v3331, 64
    %v3484 = vpop.permute.xlu0 %3483
    %3485 = vrot.lane.b32.xlu0 %v3333, 64
    %v3486 = vpop.permute.xlu0 %3485
    %3487 = vrot.lane.b32.xlu0 %v3336, 64
    %v3488 = vpop.permute.xlu0 %3487
    %3489 = vrot.lane.b32.xlu0 %v3338, 64
    %v3490 = vpop.permute.xlu0 %3489
    %3491 = vrot.lane.b32.xlu0 %v3341, 64
    %v3492 = vpop.permute.xlu0 %3491
    %3493 = vrot.lane.b32.xlu0 %v3343, 64
    %v3494 = vpop.permute.xlu0 %3493
    %3495 = vrot.lane.b32.xlu0 %v3346, 64
    %v3496 = vpop.permute.xlu0 %3495
    %3497 = vrot.lane.b32.xlu0 %v3348, 64
    %v3498 = vpop.permute.xlu0 %3497
    %3499 = vrot.lane.b32.xlu0 %v3351, 64
    %v3500 = vpop.permute.xlu0 %3499
    %3501 = vrot.lane.b32.xlu0 %v3353, 64
    %v3502 = vpop.permute.xlu0 %3501
    %3503 = vrot.lane.b32.xlu0 %v3356, 64
    %v3504 = vpop.permute.xlu0 %3503
    %3505 = vrot.lane.b32.xlu0 %v3358, 64
    %v3506 = vpop.permute.xlu0 %3505
    %3507 = vrot.lane.b32.xlu0 %v3361, 64
    %v3508 = vpop.permute.xlu0 %3507
    %3509 = vrot.lane.b32.xlu0 %v3363, 64
    %v3510 = vpop.permute.xlu0 %3509
    %3511 = vrot.lane.b32.xlu0 %v3366, 64
    %v3512 = vpop.permute.xlu0 %3511
    %3513 = vrot.lane.b32.xlu0 %v3368, 64
    %v3514 = vpop.permute.xlu0 %3513
    %3515 = vrot.lane.b32.xlu0 %v3371, 64
    %v3516 = vpop.permute.xlu0 %3515
    %3517 = vrot.lane.b32.xlu0 %v3373, 64
    %v3518 = vpop.permute.xlu0 %3517
    %3519 = vrot.lane.b32.xlu0 %v3376, 64
    %v3520 = vpop.permute.xlu0 %3519
    %3521 = vrot.lane.b32.xlu0 %v3378, 64
    %v3522 = vpop.permute.xlu0 %3521
    %3523 = vrot.lane.b32.xlu0 %v3381, 64
    %v3524 = vpop.permute.xlu0 %3523
    %3525 = vrot.lane.b32.xlu0 %v3383, 64
    %v3526 = vpop.permute.xlu0 %3525
    %3527 = vrot.lane.b32.xlu0 %v3386, 64
    %v3528 = vpop.permute.xlu0 %3527
    %3529 = vrot.lane.b32.xlu0 %v3388, 64
    %v3530 = vpop.permute.xlu0 %3529
    %3531 = vrot.lane.b32.xlu0 %v3391, 64
    %v3532 = vpop.permute.xlu0 %3531
    %3533 = vrot.lane.b32.xlu0 %v3393, 64
    %v3534 = vpop.permute.xlu0 %3533
    %3535 = vrot.lane.b32.xlu0 %v3396, 64
    %v3536 = vpop.permute.xlu0 %3535
    %3537 = vrot.lane.b32.xlu0 %v3398, 64
    %v3538 = vpop.permute.xlu0 %3537
    %3539 = vrot.lane.b32.xlu0 %v3401, 64
    %v3540 = vpop.permute.xlu0 %3539
    %3541 = vrot.lane.b32.xlu0 %v3403, 64
    %v3542 = vpop.permute.xlu0 %3541
    %3543 = vrot.lane.b32.xlu0 %v3406, 64
    %v3544 = vpop.permute.xlu0 %3543
    %3545 = vrot.lane.b32.xlu0 %v3408, 64
    %v3546 = vpop.permute.xlu0 %3545
    %3547 = vrot.lane.b32.xlu0 %v3411, 64
    %v3548 = vpop.permute.xlu0 %3547
    %3549 = vrot.lane.b32.xlu0 %v3413, 64
    %v3550 = vpop.permute.xlu0 %3549
    %3551 = vrot.lane.b32.xlu0 %v3416, 64
    %v3552 = vpop.permute.xlu0 %3551
    %3553 = vrot.lane.b32.xlu0 %v3418, 64
    %v3554 = vpop.permute.xlu0 %3553
    %3555 = vrot.lane.b32.xlu0 %v3421, 64
    %v3556 = vpop.permute.xlu0 %3555
    %3557 = vrot.lane.b32.xlu0 %v3423, 64
    %v3558 = vpop.permute.xlu0 %3557
    %3559 = vrot.lane.b32.xlu0 %v3426, 64
    %v3560 = vpop.permute.xlu0 %3559
    %3561 = vrot.lane.b32.xlu0 %v3428, 64
    %v3562 = vpop.permute.xlu0 %3561
    %3563 = vrot.lane.b32.xlu0 %v3431, 64
    %v3564 = vpop.permute.xlu0 %3563
    %3565 = vrot.lane.b32.xlu0 %v3433, 64
    %v3566 = vpop.permute.xlu0 %3565
    %3567 = vrot.lane.b32.xlu0 %v3436, 64
    %v3568 = vpop.permute.xlu0 %3567
    %3569 = vrot.lane.b32.xlu0 %v3438, 64
    %v3570 = vpop.permute.xlu0 %3569
    %3571 = vrot.lane.b32.xlu0 %v3441, 64
    %v3572 = vpop.permute.xlu0 %3571
    %3573 = vrot.lane.b32.xlu0 %v3443, 64
    %v3574 = vpop.permute.xlu0 %3573
    %3575 = vrot.lane.b32.xlu0 %v3446, 64
    %v3576 = vpop.permute.xlu0 %3575
    %3577 = vrot.lane.b32.xlu0 %v3448, 64
    %v3578 = vpop.permute.xlu0 %3577
    %3579 = vrot.lane.b32.xlu0 %v3451, 64
    %v3580 = vpop.permute.xlu0 %3579
    %3581 = vrot.lane.b32.xlu0 %v3453, 64
    %v3582 = vpop.permute.xlu0 %3581
    %3583 = vrot.lane.b32.xlu0 %v3456, 64
    %v3584 = vpop.permute.xlu0 %3583
    %3585 = vrot.lane.b32.xlu0 %v3458, 64
    %v3586 = vpop.permute.xlu0 %3585
    %3655 = vrot.lane.b32.xlu0 %v2744, 96
    %v3656 = vpop.permute.xlu0 %3655
    %3657 = vrot.lane.b32.xlu0 %v2745, 96
    %v3658 = vpop.permute.xlu0 %3657
    %3659 = vrot.lane.b32.xlu0 %v2747, 96
    %v3660 = vpop.permute.xlu0 %3659
    %3661 = vrot.lane.b32.xlu0 %v2748, 96
    %v3662 = vpop.permute.xlu0 %3661
    %3663 = vrot.lane.b32.xlu0 %v2750, 96
    %v3664 = vpop.permute.xlu0 %3663
    %3665 = vrot.lane.b32.xlu0 %v2751, 96
    %v3666 = vpop.permute.xlu0 %3665
    %3667 = vrot.lane.b32.xlu0 %v2753, 96
    %v3668 = vpop.permute.xlu0 %3667
    %3669 = vrot.lane.b32.xlu0 %v2754, 96
    %v3670 = vpop.permute.xlu0 %3669
    %3671 = vrot.lane.b32.xlu0 %v2756, 96
    %v3672 = vpop.permute.xlu0 %3671
    %3673 = vrot.lane.b32.xlu0 %v2757, 96
    %v3674 = vpop.permute.xlu0 %3673
    %3675 = vrot.lane.b32.xlu0 %v2759, 96
    %v3676 = vpop.permute.xlu0 %3675
    %3677 = vrot.lane.b32.xlu0 %v2760, 96
    %v3678 = vpop.permute.xlu0 %3677
    %3679 = vrot.lane.b32.xlu0 %v2762, 96
    %v3680 = vpop.permute.xlu0 %3679
    %3681 = vrot.lane.b32.xlu0 %v2763, 96
    %v3682 = vpop.permute.xlu0 %3681
    %3683 = vrot.lane.b32.xlu0 %v2765, 96
    %v3684 = vpop.permute.xlu0 %3683
    %3685 = vrot.lane.b32.xlu0 %v2766, 96
    %v3686 = vpop.permute.xlu0 %3685
    %3687 = vrot.lane.b32.xlu0 %v2768, 96
    %v3688 = vpop.permute.xlu0 %3687
    %3689 = vrot.lane.b32.xlu0 %v2769, 96
    %v3690 = vpop.permute.xlu0 %3689
    %3691 = vrot.lane.b32.xlu0 %v2771, 96
    %v3692 = vpop.permute.xlu0 %3691
    %3693 = vrot.lane.b32.xlu0 %v2772, 96
    %v3694 = vpop.permute.xlu0 %3693
    %3695 = vrot.lane.b32.xlu0 %v2774, 96
    %v3696 = vpop.permute.xlu0 %3695
    %3697 = vrot.lane.b32.xlu0 %v2775, 96
    %v3698 = vpop.permute.xlu0 %3697
    %3699 = vrot.lane.b32.xlu0 %v2777, 96
    %v3700 = vpop.permute.xlu0 %3699
    %3701 = vrot.lane.b32.xlu0 %v2778, 96
    %v3702 = vpop.permute.xlu0 %3701
    %3703 = vrot.lane.b32.xlu0 %v2780, 96
    %v3704 = vpop.permute.xlu0 %3703
    %3705 = vrot.lane.b32.xlu0 %v2781, 96
    %v3706 = vpop.permute.xlu0 %3705
    %3707 = vrot.lane.b32.xlu0 %v2783, 96
    %v3708 = vpop.permute.xlu0 %3707
    %3709 = vrot.lane.b32.xlu0 %v2784, 96
    %v3710 = vpop.permute.xlu0 %3709
    %3711 = vrot.lane.b32.xlu0 %v2786, 96
    %v3712 = vpop.permute.xlu0 %3711
    %3713 = vrot.lane.b32.xlu0 %v2787, 96
    %v3714 = vpop.permute.xlu0 %3713
    %3715 = vrot.lane.b32.xlu0 %v2789, 96
    %v3716 = vpop.permute.xlu0 %3715
    %3717 = vrot.lane.b32.xlu0 %v2790, 96
    %v3718 = vpop.permute.xlu0 %3717
    %3719 = vrot.lane.b32.xlu0 %v2798, 96
    %v3720 = vpop.permute.xlu0 %3719
    %3721 = vrot.lane.b32.xlu0 %v2799, 96
    %v3722 = vpop.permute.xlu0 %3721
    %3723 = vrot.lane.b32.xlu0 %v2801, 96
    %v3724 = vpop.permute.xlu0 %3723
    %3725 = vrot.lane.b32.xlu0 %v2802, 96
    %v3726 = vpop.permute.xlu0 %3725
    %3727 = vrot.lane.b32.xlu0 %v2804, 96
    %v3728 = vpop.permute.xlu0 %3727
    %3729 = vrot.lane.b32.xlu0 %v2805, 96
    %v3730 = vpop.permute.xlu0 %3729
    %3731 = vrot.lane.b32.xlu0 %v2807, 96
    %v3732 = vpop.permute.xlu0 %3731
    %3733 = vrot.lane.b32.xlu0 %v2808, 96
    %v3734 = vpop.permute.xlu0 %3733
    %3735 = vrot.lane.b32.xlu0 %v2810, 96
    %v3736 = vpop.permute.xlu0 %3735
    %3737 = vrot.lane.b32.xlu0 %v2811, 96
    %v3738 = vpop.permute.xlu0 %3737
    %3739 = vrot.lane.b32.xlu0 %v2813, 96
    %v3740 = vpop.permute.xlu0 %3739
    %3741 = vrot.lane.b32.xlu0 %v2814, 96
    %v3742 = vpop.permute.xlu0 %3741
    %3743 = vrot.lane.b32.xlu0 %v2816, 96
    %v3744 = vpop.permute.xlu0 %3743
    %3745 = vrot.lane.b32.xlu0 %v2817, 96
    %v3746 = vpop.permute.xlu0 %3745
    %3747 = vrot.lane.b32.xlu0 %v2819, 96
    %v3748 = vpop.permute.xlu0 %3747
    %3749 = vrot.lane.b32.xlu0 %v2820, 96
    %v3750 = vpop.permute.xlu0 %3749
    %3751 = vrot.lane.b32.xlu0 %v2822, 96
    %v3752 = vpop.permute.xlu0 %3751
    %3753 = vrot.lane.b32.xlu0 %v2823, 96
    %v3754 = vpop.permute.xlu0 %3753
    %3755 = vrot.lane.b32.xlu0 %v2825, 96
    %v3756 = vpop.permute.xlu0 %3755
    %3757 = vrot.lane.b32.xlu0 %v2826, 96
    %v3758 = vpop.permute.xlu0 %3757
    %3759 = vrot.lane.b32.xlu0 %v2828, 96
    %v3760 = vpop.permute.xlu0 %3759
    %3761 = vrot.lane.b32.xlu0 %v2829, 96
    %v3762 = vpop.permute.xlu0 %3761
    %3763 = vrot.lane.b32.xlu0 %v2831, 96
    %v3764 = vpop.permute.xlu0 %3763
    %3765 = vrot.lane.b32.xlu0 %v2832, 96
    %v3766 = vpop.permute.xlu0 %3765
    %3767 = vrot.lane.b32.xlu0 %v2834, 96
    %v3768 = vpop.permute.xlu0 %3767
    %3769 = vrot.lane.b32.xlu0 %v2835, 96
    %v3770 = vpop.permute.xlu0 %3769
    %3771 = vrot.lane.b32.xlu0 %v2837, 96
    %v3772 = vpop.permute.xlu0 %3771
    %3773 = vrot.lane.b32.xlu0 %v2838, 96
    %v3774 = vpop.permute.xlu0 %3773
    %3775 = vrot.lane.b32.xlu0 %v2840, 96
    %v3776 = vpop.permute.xlu0 %3775
    %3777 = vrot.lane.b32.xlu0 %v2841, 96
    %v3778 = vpop.permute.xlu0 %3777
    %3779 = vrot.lane.b32.xlu0 %v2843, 96
    %v3780 = vpop.permute.xlu0 %3779
    %3781 = vrot.lane.b32.xlu0 %v2844, 96
    %v3782 = vpop.permute.xlu0 %3781
    %v3849 = vrot.slane %v2789, 1
    %v3850 = vrot.slane %v2790, 1
    %v3851 = vsel %vm2945, %v3849, %v3850
    %v3852 = vrot.slane %v2791, 1
    %v3853 = vsel %vm2945, %v3850, %v3852
    %v3854 = vrot.slane %v2843, 1
    %v3855 = vrot.slane %v2844, 1
    %v3856 = vsel %vm2945, %v3854, %v3855
    %v3857 = vrot.slane %v2845, 1
    %v3858 = vsel %vm2945, %v3855, %v3857
    %v3923 = vrot.slane %v2789, 2
    %v3924 = vrot.slane %v2790, 2
    %v3925 = vsel %vm3298, %v3923, %v3924
    %v3926 = vrot.slane %v2791, 2
    %v3927 = vsel %vm3298, %v3924, %v3926
    %v3928 = vrot.slane %v2843, 2
    %v3929 = vrot.slane %v2844, 2
    %v3930 = vsel %vm3298, %v3928, %v3929
    %v3931 = vrot.slane %v2845, 2
    %v3932 = vsel %vm3298, %v3929, %v3931
    %3933 = vrot.lane.b32.xlu0 %v3306, 32
    %v3934 = vpop.permute.xlu0 %3933
    %3935 = vrot.lane.b32.xlu0 %v3308, 32
    %v3936 = vpop.permute.xlu0 %3935
    %3937 = vrot.lane.b32.xlu0 %v3311, 32
    %v3938 = vpop.permute.xlu0 %3937
    %3939 = vrot.lane.b32.xlu0 %v3313, 32
    %v3940 = vpop.permute.xlu0 %3939
    %3941 = vrot.lane.b32.xlu0 %v3316, 32
    %v3942 = vpop.permute.xlu0 %3941
    %3943 = vrot.lane.b32.xlu0 %v3318, 32
    %v3944 = vpop.permute.xlu0 %3943
    %3945 = vrot.lane.b32.xlu0 %v3321, 32
    %v3946 = vpop.permute.xlu0 %3945
    %3947 = vrot.lane.b32.xlu0 %v3323, 32
    %v3948 = vpop.permute.xlu0 %3947
    %3949 = vrot.lane.b32.xlu0 %v3326, 32
    %v3950 = vpop.permute.xlu0 %3949
    %3951 = vrot.lane.b32.xlu0 %v3328, 32
    %v3952 = vpop.permute.xlu0 %3951
    %3953 = vrot.lane.b32.xlu0 %v3331, 32
    %v3954 = vpop.permute.xlu0 %3953
    %3955 = vrot.lane.b32.xlu0 %v3333, 32
    %v3956 = vpop.permute.xlu0 %3955
    %3957 = vrot.lane.b32.xlu0 %v3336, 32
    %v3958 = vpop.permute.xlu0 %3957
    %3959 = vrot.lane.b32.xlu0 %v3338, 32
    %v3960 = vpop.permute.xlu0 %3959
    %3961 = vrot.lane.b32.xlu0 %v3341, 32
    %v3962 = vpop.permute.xlu0 %3961
    %3963 = vrot.lane.b32.xlu0 %v3343, 32
    %v3964 = vpop.permute.xlu0 %3963
    %3965 = vrot.lane.b32.xlu0 %v3346, 32
    %v3966 = vpop.permute.xlu0 %3965
    %3967 = vrot.lane.b32.xlu0 %v3348, 32
    %v3968 = vpop.permute.xlu0 %3967
    %3969 = vrot.lane.b32.xlu0 %v3351, 32
    %v3970 = vpop.permute.xlu0 %3969
    %3971 = vrot.lane.b32.xlu0 %v3353, 32
    %v3972 = vpop.permute.xlu0 %3971
    %3973 = vrot.lane.b32.xlu0 %v3356, 32
    %v3974 = vpop.permute.xlu0 %3973
    %3975 = vrot.lane.b32.xlu0 %v3358, 32
    %v3976 = vpop.permute.xlu0 %3975
    %3977 = vrot.lane.b32.xlu0 %v3361, 32
    %v3978 = vpop.permute.xlu0 %3977
    %3979 = vrot.lane.b32.xlu0 %v3363, 32
    %v3980 = vpop.permute.xlu0 %3979
    %3981 = vrot.lane.b32.xlu0 %v3366, 32
    %v3982 = vpop.permute.xlu0 %3981
    %3983 = vrot.lane.b32.xlu0 %v3368, 32
    %v3984 = vpop.permute.xlu0 %3983
    %3985 = vrot.lane.b32.xlu0 %v3371, 32
    %v3986 = vpop.permute.xlu0 %3985
    %3987 = vrot.lane.b32.xlu0 %v3373, 32
    %v3988 = vpop.permute.xlu0 %3987
    %3989 = vrot.lane.b32.xlu0 %v3376, 32
    %v3990 = vpop.permute.xlu0 %3989
    %3991 = vrot.lane.b32.xlu0 %v3378, 32
    %v3992 = vpop.permute.xlu0 %3991
    %3993 = vrot.lane.b32.xlu0 %v3925, 32
    %v3994 = vpop.permute.xlu0 %3993
    %3995 = vrot.lane.b32.xlu0 %v3927, 32
    %v3996 = vpop.permute.xlu0 %3995
    %3997 = vrot.lane.b32.xlu0 %v3386, 32
    %v3998 = vpop.permute.xlu0 %3997
    %3999 = vrot.lane.b32.xlu0 %v3388, 32
    %v4000 = vpop.permute.xlu0 %3999
    %4001 = vrot.lane.b32.xlu0 %v3391, 32
    %v4002 = vpop.permute.xlu0 %4001
    %4003 = vrot.lane.b32.xlu0 %v3393, 32
    %v4004 = vpop.permute.xlu0 %4003
    %4005 = vrot.lane.b32.xlu0 %v3396, 32
    %v4006 = vpop.permute.xlu0 %4005
    %4007 = vrot.lane.b32.xlu0 %v3398, 32
    %v4008 = vpop.permute.xlu0 %4007
    %4009 = vrot.lane.b32.xlu0 %v3401, 32
    %v4010 = vpop.permute.xlu0 %4009
    %4011 = vrot.lane.b32.xlu0 %v3403, 32
    %v4012 = vpop.permute.xlu0 %4011
    %4013 = vrot.lane.b32.xlu0 %v3406, 32
    %v4014 = vpop.permute.xlu0 %4013
    %4015 = vrot.lane.b32.xlu0 %v3408, 32
    %v4016 = vpop.permute.xlu0 %4015
    %4017 = vrot.lane.b32.xlu0 %v3411, 32
    %v4018 = vpop.permute.xlu0 %4017
    %4019 = vrot.lane.b32.xlu0 %v3413, 32
    %v4020 = vpop.permute.xlu0 %4019
    %4021 = vrot.lane.b32.xlu0 %v3416, 32
    %v4022 = vpop.permute.xlu0 %4021
    %4023 = vrot.lane.b32.xlu0 %v3418, 32
    %v4024 = vpop.permute.xlu0 %4023
    %4025 = vrot.lane.b32.xlu0 %v3421, 32
    %v4026 = vpop.permute.xlu0 %4025
    %4027 = vrot.lane.b32.xlu0 %v3423, 32
    %v4028 = vpop.permute.xlu0 %4027
    %4029 = vrot.lane.b32.xlu0 %v3426, 32
    %v4030 = vpop.permute.xlu0 %4029
    %4031 = vrot.lane.b32.xlu0 %v3428, 32
    %v4032 = vpop.permute.xlu0 %4031
    %4033 = vrot.lane.b32.xlu0 %v3431, 32
    %v4034 = vpop.permute.xlu0 %4033
    %4035 = vrot.lane.b32.xlu0 %v3433, 32
    %v4036 = vpop.permute.xlu0 %4035
    %4037 = vrot.lane.b32.xlu0 %v3436, 32
    %v4038 = vpop.permute.xlu0 %4037
    %4039 = vrot.lane.b32.xlu0 %v3438, 32
    %v4040 = vpop.permute.xlu0 %4039
    %4041 = vrot.lane.b32.xlu0 %v3441, 32
    %v4042 = vpop.permute.xlu0 %4041
    %4043 = vrot.lane.b32.xlu0 %v3443, 32
    %v4044 = vpop.permute.xlu0 %4043
    %4045 = vrot.lane.b32.xlu0 %v3446, 32
    %v4046 = vpop.permute.xlu0 %4045
    %4047 = vrot.lane.b32.xlu0 %v3448, 32
    %v4048 = vpop.permute.xlu0 %4047
    %4049 = vrot.lane.b32.xlu0 %v3451, 32
    %v4050 = vpop.permute.xlu0 %4049
    %4051 = vrot.lane.b32.xlu0 %v3453, 32
    %v4052 = vpop.permute.xlu0 %4051
    %4053 = vrot.lane.b32.xlu0 %v3456, 32
    %v4054 = vpop.permute.xlu0 %4053
    %4055 = vrot.lane.b32.xlu0 %v3458, 32
    %v4056 = vpop.permute.xlu0 %4055
    %4057 = vrot.lane.b32.xlu0 %v3930, 32
    %v4058 = vpop.permute.xlu0 %4057
    %4059 = vrot.lane.b32.xlu0 %v3932, 32
    %v4060 = vpop.permute.xlu0 %4059
    %4129 = vrot.lane.b32.xlu0 %v2747, 64
    %v4130 = vpop.permute.xlu0 %4129
    %4131 = vrot.lane.b32.xlu0 %v2748, 64
    %v4132 = vpop.permute.xlu0 %4131
    %4133 = vrot.lane.b32.xlu0 %v2750, 64
    %v4134 = vpop.permute.xlu0 %4133
    %4135 = vrot.lane.b32.xlu0 %v2751, 64
    %v4136 = vpop.permute.xlu0 %4135
    %4137 = vrot.lane.b32.xlu0 %v2753, 64
    %v4138 = vpop.permute.xlu0 %4137
    %4139 = vrot.lane.b32.xlu0 %v2754, 64
    %v4140 = vpop.permute.xlu0 %4139
    %4141 = vrot.lane.b32.xlu0 %v2756, 64
    %v4142 = vpop.permute.xlu0 %4141
    %4143 = vrot.lane.b32.xlu0 %v2757, 64
    %v4144 = vpop.permute.xlu0 %4143
    %4145 = vrot.lane.b32.xlu0 %v2759, 64
    %v4146 = vpop.permute.xlu0 %4145
    %4147 = vrot.lane.b32.xlu0 %v2760, 64
    %v4148 = vpop.permute.xlu0 %4147
    %4149 = vrot.lane.b32.xlu0 %v2762, 64
    %v4150 = vpop.permute.xlu0 %4149
    %4151 = vrot.lane.b32.xlu0 %v2763, 64
    %v4152 = vpop.permute.xlu0 %4151
    %4153 = vrot.lane.b32.xlu0 %v2765, 64
    %v4154 = vpop.permute.xlu0 %4153
    %4155 = vrot.lane.b32.xlu0 %v2766, 64
    %v4156 = vpop.permute.xlu0 %4155
    %4157 = vrot.lane.b32.xlu0 %v2768, 64
    %v4158 = vpop.permute.xlu0 %4157
    %4159 = vrot.lane.b32.xlu0 %v2769, 64
    %v4160 = vpop.permute.xlu0 %4159
    %4161 = vrot.lane.b32.xlu0 %v2771, 64
    %v4162 = vpop.permute.xlu0 %4161
    %4163 = vrot.lane.b32.xlu0 %v2772, 64
    %v4164 = vpop.permute.xlu0 %4163
    %4165 = vrot.lane.b32.xlu0 %v2774, 64
    %v4166 = vpop.permute.xlu0 %4165
    %4167 = vrot.lane.b32.xlu0 %v2775, 64
    %v4168 = vpop.permute.xlu0 %4167
    %4169 = vrot.lane.b32.xlu0 %v2777, 64
    %v4170 = vpop.permute.xlu0 %4169
    %4171 = vrot.lane.b32.xlu0 %v2778, 64
    %v4172 = vpop.permute.xlu0 %4171
    %4173 = vrot.lane.b32.xlu0 %v2780, 64
    %v4174 = vpop.permute.xlu0 %4173
    %4175 = vrot.lane.b32.xlu0 %v2781, 64
    %v4176 = vpop.permute.xlu0 %4175
    %4177 = vrot.lane.b32.xlu0 %v2783, 64
    %v4178 = vpop.permute.xlu0 %4177
    %4179 = vrot.lane.b32.xlu0 %v2784, 64
    %v4180 = vpop.permute.xlu0 %4179
    %4181 = vrot.lane.b32.xlu0 %v2786, 64
    %v4182 = vpop.permute.xlu0 %4181
    %4183 = vrot.lane.b32.xlu0 %v2787, 64
    %v4184 = vpop.permute.xlu0 %4183
    %4185 = vrot.lane.b32.xlu0 %v2789, 64
    %v4186 = vpop.permute.xlu0 %4185
    %4187 = vrot.lane.b32.xlu0 %v2790, 64
    %v4188 = vpop.permute.xlu0 %4187
    %4189 = vrot.lane.b32.xlu0 %v2792, 64
    %v4190 = vpop.permute.xlu0 %4189
    %4191 = vrot.lane.b32.xlu0 %v2793, 64
    %v4192 = vpop.permute.xlu0 %4191
    %4193 = vrot.lane.b32.xlu0 %v2801, 64
    %v4194 = vpop.permute.xlu0 %4193
    %4195 = vrot.lane.b32.xlu0 %v2802, 64
    %v4196 = vpop.permute.xlu0 %4195
    %4197 = vrot.lane.b32.xlu0 %v2804, 64
    %v4198 = vpop.permute.xlu0 %4197
    %4199 = vrot.lane.b32.xlu0 %v2805, 64
    %v4200 = vpop.permute.xlu0 %4199
    %4201 = vrot.lane.b32.xlu0 %v2807, 64
    %v4202 = vpop.permute.xlu0 %4201
    %4203 = vrot.lane.b32.xlu0 %v2808, 64
    %v4204 = vpop.permute.xlu0 %4203
    %4205 = vrot.lane.b32.xlu0 %v2810, 64
    %v4206 = vpop.permute.xlu0 %4205
    %4207 = vrot.lane.b32.xlu0 %v2811, 64
    %v4208 = vpop.permute.xlu0 %4207
    %4209 = vrot.lane.b32.xlu0 %v2813, 64
    %v4210 = vpop.permute.xlu0 %4209
    %4211 = vrot.lane.b32.xlu0 %v2814, 64
    %v4212 = vpop.permute.xlu0 %4211
    %4213 = vrot.lane.b32.xlu0 %v2816, 64
    %v4214 = vpop.permute.xlu0 %4213
    %4215 = vrot.lane.b32.xlu0 %v2817, 64
    %v4216 = vpop.permute.xlu0 %4215
    %4217 = vrot.lane.b32.xlu0 %v2819, 64
    %v4218 = vpop.permute.xlu0 %4217
    %4219 = vrot.lane.b32.xlu0 %v2820, 64
    %v4220 = vpop.permute.xlu0 %4219
    %4221 = vrot.lane.b32.xlu0 %v2822, 64
    %v4222 = vpop.permute.xlu0 %4221
    %4223 = vrot.lane.b32.xlu0 %v2823, 64
    %v4224 = vpop.permute.xlu0 %4223
    %4225 = vrot.lane.b32.xlu0 %v2825, 64
    %v4226 = vpop.permute.xlu0 %4225
    %4227 = vrot.lane.b32.xlu0 %v2826, 64
    %v4228 = vpop.permute.xlu0 %4227
    %4229 = vrot.lane.b32.xlu0 %v2828, 64
    %v4230 = vpop.permute.xlu0 %4229
    %4231 = vrot.lane.b32.xlu0 %v2829, 64
    %v4232 = vpop.permute.xlu0 %4231
    %4233 = vrot.lane.b32.xlu0 %v2831, 64
    %v4234 = vpop.permute.xlu0 %4233
    %4235 = vrot.lane.b32.xlu0 %v2832, 64
    %v4236 = vpop.permute.xlu0 %4235
    %4237 = vrot.lane.b32.xlu0 %v2834, 64
    %v4238 = vpop.permute.xlu0 %4237
    %4239 = vrot.lane.b32.xlu0 %v2835, 64
    %v4240 = vpop.permute.xlu0 %4239
    %4241 = vrot.lane.b32.xlu0 %v2837, 64
    %v4242 = vpop.permute.xlu0 %4241
    %4243 = vrot.lane.b32.xlu0 %v2838, 64
    %v4244 = vpop.permute.xlu0 %4243
    %4245 = vrot.lane.b32.xlu0 %v2840, 64
    %v4246 = vpop.permute.xlu0 %4245
    %4247 = vrot.lane.b32.xlu0 %v2841, 64
    %v4248 = vpop.permute.xlu0 %4247
    %4249 = vrot.lane.b32.xlu0 %v2843, 64
    %v4250 = vpop.permute.xlu0 %4249
    %4251 = vrot.lane.b32.xlu0 %v2844, 64
    %v4252 = vpop.permute.xlu0 %4251
    %4253 = vrot.lane.b32.xlu0 %v2846, 64
    %v4254 = vpop.permute.xlu0 %4253
    %4255 = vrot.lane.b32.xlu0 %v2847, 64
    %v4256 = vpop.permute.xlu0 %4255
    %v4323 = vrot.slane %v2792, 1
    %v4324 = vrot.slane %v2793, 1
    %v4325 = vsel %vm2945, %v4323, %v4324
    %v4326 = vrot.slane %v2794, 1
    %v4327 = vsel %vm2945, %v4324, %v4326
    %v4328 = vrot.slane %v2846, 1
    %v4329 = vrot.slane %v2847, 1
    %v4330 = vsel %vm2945, %v4328, %v4329
    %v4331 = vrot.slane %v2848, 1
    %v4332 = vsel %vm2945, %v4329, %v4331
    %4333 = vrot.lane.b32.xlu0 %v2958, 96
    %v4334 = vpop.permute.xlu0 %4333
    %4335 = vrot.lane.b32.xlu0 %v2960, 96
    %v4336 = vpop.permute.xlu0 %4335
    %4337 = vrot.lane.b32.xlu0 %v2963, 96
    %v4338 = vpop.permute.xlu0 %4337
    %4339 = vrot.lane.b32.xlu0 %v2965, 96
    %v4340 = vpop.permute.xlu0 %4339
    %4341 = vrot.lane.b32.xlu0 %v2968, 96
    %v4342 = vpop.permute.xlu0 %4341
    %4343 = vrot.lane.b32.xlu0 %v2970, 96
    %v4344 = vpop.permute.xlu0 %4343
    %4345 = vrot.lane.b32.xlu0 %v2973, 96
    %v4346 = vpop.permute.xlu0 %4345
    %4347 = vrot.lane.b32.xlu0 %v2975, 96
    %v4348 = vpop.permute.xlu0 %4347
    %4349 = vrot.lane.b32.xlu0 %v2978, 96
    %v4350 = vpop.permute.xlu0 %4349
    %4351 = vrot.lane.b32.xlu0 %v2980, 96
    %v4352 = vpop.permute.xlu0 %4351
    %4353 = vrot.lane.b32.xlu0 %v2983, 96
    %v4354 = vpop.permute.xlu0 %4353
    %4355 = vrot.lane.b32.xlu0 %v2985, 96
    %v4356 = vpop.permute.xlu0 %4355
    %4357 = vrot.lane.b32.xlu0 %v2988, 96
    %v4358 = vpop.permute.xlu0 %4357
    %4359 = vrot.lane.b32.xlu0 %v2990, 96
    %v4360 = vpop.permute.xlu0 %4359
    %4361 = vrot.lane.b32.xlu0 %v2993, 96
    %v4362 = vpop.permute.xlu0 %4361
    %4363 = vrot.lane.b32.xlu0 %v2995, 96
    %v4364 = vpop.permute.xlu0 %4363
    %4365 = vrot.lane.b32.xlu0 %v2998, 96
    %v4366 = vpop.permute.xlu0 %4365
    %4367 = vrot.lane.b32.xlu0 %v3000, 96
    %v4368 = vpop.permute.xlu0 %4367
    %4369 = vrot.lane.b32.xlu0 %v3003, 96
    %v4370 = vpop.permute.xlu0 %4369
    %4371 = vrot.lane.b32.xlu0 %v3005, 96
    %v4372 = vpop.permute.xlu0 %4371
    %4373 = vrot.lane.b32.xlu0 %v3008, 96
    %v4374 = vpop.permute.xlu0 %4373
    %4375 = vrot.lane.b32.xlu0 %v3010, 96
    %v4376 = vpop.permute.xlu0 %4375
    %4377 = vrot.lane.b32.xlu0 %v3013, 96
    %v4378 = vpop.permute.xlu0 %4377
    %4379 = vrot.lane.b32.xlu0 %v3015, 96
    %v4380 = vpop.permute.xlu0 %4379
    %4381 = vrot.lane.b32.xlu0 %v3018, 96
    %v4382 = vpop.permute.xlu0 %4381
    %4383 = vrot.lane.b32.xlu0 %v3020, 96
    %v4384 = vpop.permute.xlu0 %4383
    %4385 = vrot.lane.b32.xlu0 %v3023, 96
    %v4386 = vpop.permute.xlu0 %4385
    %4387 = vrot.lane.b32.xlu0 %v3025, 96
    %v4388 = vpop.permute.xlu0 %4387
    %4389 = vrot.lane.b32.xlu0 %v3851, 96
    %v4390 = vpop.permute.xlu0 %4389
    %4391 = vrot.lane.b32.xlu0 %v3853, 96
    %v4392 = vpop.permute.xlu0 %4391
    %4393 = vrot.lane.b32.xlu0 %v4325, 96
    %v4394 = vpop.permute.xlu0 %4393
    %4395 = vrot.lane.b32.xlu0 %v4327, 96
    %v4396 = vpop.permute.xlu0 %4395
    %4397 = vrot.lane.b32.xlu0 %v3038, 96
    %v4398 = vpop.permute.xlu0 %4397
    %4399 = vrot.lane.b32.xlu0 %v3040, 96
    %v4400 = vpop.permute.xlu0 %4399
    %4401 = vrot.lane.b32.xlu0 %v3043, 96
    %v4402 = vpop.permute.xlu0 %4401
    %4403 = vrot.lane.b32.xlu0 %v3045, 96
    %v4404 = vpop.permute.xlu0 %4403
    %4405 = vrot.lane.b32.xlu0 %v3048, 96
    %v4406 = vpop.permute.xlu0 %4405
    %4407 = vrot.lane.b32.xlu0 %v3050, 96
    %v4408 = vpop.permute.xlu0 %4407
    %4409 = vrot.lane.b32.xlu0 %v3053, 96
    %v4410 = vpop.permute.xlu0 %4409
    %4411 = vrot.lane.b32.xlu0 %v3055, 96
    %v4412 = vpop.permute.xlu0 %4411
    %4413 = vrot.lane.b32.xlu0 %v3058, 96
    %v4414 = vpop.permute.xlu0 %4413
    %4415 = vrot.lane.b32.xlu0 %v3060, 96
    %v4416 = vpop.permute.xlu0 %4415
    %4417 = vrot.lane.b32.xlu0 %v3063, 96
    %v4418 = vpop.permute.xlu0 %4417
    %4419 = vrot.lane.b32.xlu0 %v3065, 96
    %v4420 = vpop.permute.xlu0 %4419
    %4421 = vrot.lane.b32.xlu0 %v3068, 96
    %v4422 = vpop.permute.xlu0 %4421
    %4423 = vrot.lane.b32.xlu0 %v3070, 96
    %v4424 = vpop.permute.xlu0 %4423
    %4425 = vrot.lane.b32.xlu0 %v3073, 96
    %v4426 = vpop.permute.xlu0 %4425
    %4427 = vrot.lane.b32.xlu0 %v3075, 96
    %v4428 = vpop.permute.xlu0 %4427
    %4429 = vrot.lane.b32.xlu0 %v3078, 96
    %v4430 = vpop.permute.xlu0 %4429
    %4431 = vrot.lane.b32.xlu0 %v3080, 96
    %v4432 = vpop.permute.xlu0 %4431
    %4433 = vrot.lane.b32.xlu0 %v3083, 96
    %v4434 = vpop.permute.xlu0 %4433
    %4435 = vrot.lane.b32.xlu0 %v3085, 96
    %v4436 = vpop.permute.xlu0 %4435
    %4437 = vrot.lane.b32.xlu0 %v3088, 96
    %v4438 = vpop.permute.xlu0 %4437
    %4439 = vrot.lane.b32.xlu0 %v3090, 96
    %v4440 = vpop.permute.xlu0 %4439
    %4441 = vrot.lane.b32.xlu0 %v3093, 96
    %v4442 = vpop.permute.xlu0 %4441
    %4443 = vrot.lane.b32.xlu0 %v3095, 96
    %v4444 = vpop.permute.xlu0 %4443
    %4445 = vrot.lane.b32.xlu0 %v3098, 96
    %v4446 = vpop.permute.xlu0 %4445
    %4447 = vrot.lane.b32.xlu0 %v3100, 96
    %v4448 = vpop.permute.xlu0 %4447
    %4449 = vrot.lane.b32.xlu0 %v3103, 96
    %v4450 = vpop.permute.xlu0 %4449
    %4451 = vrot.lane.b32.xlu0 %v3105, 96
    %v4452 = vpop.permute.xlu0 %4451
    %4453 = vrot.lane.b32.xlu0 %v3856, 96
    %v4454 = vpop.permute.xlu0 %4453
    %4455 = vrot.lane.b32.xlu0 %v3858, 96
    %v4456 = vpop.permute.xlu0 %4455
    %4457 = vrot.lane.b32.xlu0 %v4330, 96
    %v4458 = vpop.permute.xlu0 %4457
    %4459 = vrot.lane.b32.xlu0 %v4332, 96
    %v4460 = vpop.permute.xlu0 %4459
    %v4525 = vrot.slane %v2792, 2
    %v4526 = vrot.slane %v2793, 2
    %v4527 = vsel %vm3298, %v4525, %v4526
    %v4528 = vrot.slane %v2794, 2
    %v4529 = vsel %vm3298, %v4526, %v4528
    %v4530 = vrot.slane %v2846, 2
    %v4531 = vrot.slane %v2847, 2
    %v4532 = vsel %vm3298, %v4530, %v4531
    %v4533 = vrot.slane %v2848, 2
    %v4534 = vsel %vm3298, %v4531, %v4533
    %vm4535 = vcmask 261120
    %v4536 = vsel %vm4535, %v2741, %v3107
    %v4537 = vsel %vm4535, %v2742, %v3109
    %v4538 = vsel %vm4535, %v2744, %v3111
    %v4539 = vsel %vm4535, %v2745, %v3113
    %v4540 = vsel %vm4535, %v2747, %v3115
    %v4541 = vsel %vm4535, %v2748, %v3117
    %v4542 = vsel %vm4535, %v2750, %v3119
    %v4543 = vsel %vm4535, %v2751, %v3121
    %v4544 = vsel %vm4535, %v2753, %v3123
    %v4545 = vsel %vm4535, %v2754, %v3125
    %v4546 = vsel %vm4535, %v2756, %v3127
    %v4547 = vsel %vm4535, %v2757, %v3129
    %v4548 = vsel %vm4535, %v2759, %v3131
    %v4549 = vsel %vm4535, %v2760, %v3133
    %v4550 = vsel %vm4535, %v2762, %v3135
    %v4551 = vsel %vm4535, %v2763, %v3137
    %v4552 = vsel %vm4535, %v2765, %v3139
    %v4553 = vsel %vm4535, %v2766, %v3141
    %v4554 = vsel %vm4535, %v2768, %v3143
    %v4555 = vsel %vm4535, %v2769, %v3145
    %v4556 = vsel %vm4535, %v2771, %v3147
    %v4557 = vsel %vm4535, %v2772, %v3149
    %v4558 = vsel %vm4535, %v2774, %v3151
    %v4559 = vsel %vm4535, %v2775, %v3153
    %v4560 = vsel %vm4535, %v2777, %v3155
    %v4561 = vsel %vm4535, %v2778, %v3157
    %v4562 = vsel %vm4535, %v2780, %v3159
    %v4563 = vsel %vm4535, %v2781, %v3161
    %v4564 = vsel %vm4535, %v2783, %v3163
    %v4565 = vsel %vm4535, %v2784, %v3165
    %v4566 = vsel %vm4535, %v2786, %v3167
    %v4567 = vsel %vm4535, %v2787, %v3169
    %v4568 = vsel %vm4535, %v2795, %v3171
    %v4569 = vsel %vm4535, %v2796, %v3173
    %v4570 = vsel %vm4535, %v2798, %v3175
    %v4571 = vsel %vm4535, %v2799, %v3177
    %v4572 = vsel %vm4535, %v2801, %v3179
    %v4573 = vsel %vm4535, %v2802, %v3181
    %v4574 = vsel %vm4535, %v2804, %v3183
    %v4575 = vsel %vm4535, %v2805, %v3185
    %v4576 = vsel %vm4535, %v2807, %v3187
    %v4577 = vsel %vm4535, %v2808, %v3189
    %v4578 = vsel %vm4535, %v2810, %v3191
    %v4579 = vsel %vm4535, %v2811, %v3193
    %v4580 = vsel %vm4535, %v2813, %v3195
    %v4581 = vsel %vm4535, %v2814, %v3197
    %v4582 = vsel %vm4535, %v2816, %v3199
    %v4583 = vsel %vm4535, %v2817, %v3201
    %v4584 = vsel %vm4535, %v2819, %v3203
    %v4585 = vsel %vm4535, %v2820, %v3205
    %v4586 = vsel %vm4535, %v2822, %v3207
    %v4587 = vsel %vm4535, %v2823, %v3209
    %v4588 = vsel %vm4535, %v2825, %v3211
    %v4589 = vsel %vm4535, %v2826, %v3213
    %v4590 = vsel %vm4535, %v2828, %v3215
    %v4591 = vsel %vm4535, %v2829, %v3217
    %v4592 = vsel %vm4535, %v2831, %v3219
    %v4593 = vsel %vm4535, %v2832, %v3221
    %v4594 = vsel %vm4535, %v2834, %v3223
    %v4595 = vsel %vm4535, %v2835, %v3225
    %v4596 = vsel %vm4535, %v2837, %v3227
    %v4597 = vsel %vm4535, %v2838, %v3229
    %v4598 = vsel %vm4535, %v2840, %v3231
    %v4599 = vsel %vm4535, %v2841, %v3233
    %vm4600 = vcmask 523264
    %v4601 = vsel %vm4600, %v4536, %v3460
    %v4602 = vsel %vm4600, %v4537, %v3462
    %v4603 = vsel %vm4600, %v4538, %v3464
    %v4604 = vsel %vm4600, %v4539, %v3466
    %v4605 = vsel %vm4600, %v4540, %v3468
    %v4606 = vsel %vm4600, %v4541, %v3470
    %v4607 = vsel %vm4600, %v4542, %v3472
    %v4608 = vsel %vm4600, %v4543, %v3474
    %v4609 = vsel %vm4600, %v4544, %v3476
    %v4610 = vsel %vm4600, %v4545, %v3478
    %v4611 = vsel %vm4600, %v4546, %v3480
    %v4612 = vsel %vm4600, %v4547, %v3482
    %v4613 = vsel %vm4600, %v4548, %v3484
    %v4614 = vsel %vm4600, %v4549, %v3486
    %v4615 = vsel %vm4600, %v4550, %v3488
    %v4616 = vsel %vm4600, %v4551, %v3490
    %v4617 = vsel %vm4600, %v4552, %v3492
    %v4618 = vsel %vm4600, %v4553, %v3494
    %v4619 = vsel %vm4600, %v4554, %v3496
    %v4620 = vsel %vm4600, %v4555, %v3498
    %v4621 = vsel %vm4600, %v4556, %v3500
    %v4622 = vsel %vm4600, %v4557, %v3502
    %v4623 = vsel %vm4600, %v4558, %v3504
    %v4624 = vsel %vm4600, %v4559, %v3506
    %v4625 = vsel %vm4600, %v4560, %v3508
    %v4626 = vsel %vm4600, %v4561, %v3510
    %v4627 = vsel %vm4600, %v4562, %v3512
    %v4628 = vsel %vm4600, %v4563, %v3514
    %v4629 = vsel %vm4600, %v4564, %v3516
    %v4630 = vsel %vm4600, %v4565, %v3518
    %v4631 = vsel %vm4600, %v4566, %v3520
    %v4632 = vsel %vm4600, %v4567, %v3522
    %v4633 = vsel %vm4600, %v4568, %v3524
    %v4634 = vsel %vm4600, %v4569, %v3526
    %v4635 = vsel %vm4600, %v4570, %v3528
    %v4636 = vsel %vm4600, %v4571, %v3530
    %v4637 = vsel %vm4600, %v4572, %v3532
    %v4638 = vsel %vm4600, %v4573, %v3534
    %v4639 = vsel %vm4600, %v4574, %v3536
    %v4640 = vsel %vm4600, %v4575, %v3538
    %v4641 = vsel %vm4600, %v4576, %v3540
    %v4642 = vsel %vm4600, %v4577, %v3542
    %v4643 = vsel %vm4600, %v4578, %v3544
    %v4644 = vsel %vm4600, %v4579, %v3546
    %v4645 = vsel %vm4600, %v4580, %v3548
    %v4646 = vsel %vm4600, %v4581, %v3550
    %v4647 = vsel %vm4600, %v4582, %v3552
    %v4648 = vsel %vm4600, %v4583, %v3554
    %v4649 = vsel %vm4600, %v4584, %v3556
    %v4650 = vsel %vm4600, %v4585, %v3558
    %v4651 = vsel %vm4600, %v4586, %v3560
    %v4652 = vsel %vm4600, %v4587, %v3562
    %v4653 = vsel %vm4600, %v4588, %v3564
    %v4654 = vsel %vm4600, %v4589, %v3566
    %v4655 = vsel %vm4600, %v4590, %v3568
    %v4656 = vsel %vm4600, %v4591, %v3570
    %v4657 = vsel %vm4600, %v4592, %v3572
    %v4658 = vsel %vm4600, %v4593, %v3574
    %v4659 = vsel %vm4600, %v4594, %v3576
    %v4660 = vsel %vm4600, %v4595, %v3578
    %v4661 = vsel %vm4600, %v4596, %v3580
    %v4662 = vsel %vm4600, %v4597, %v3582
    %v4663 = vsel %vm4600, %v4598, %v3584
    %v4664 = vsel %vm4600, %v4599, %v3586
    %vm4665 = vcmask 785408
    %v4666 = vsel %vm4665, %v4601, %v3656
    %v4667 = vsel %vm4665, %v4602, %v3658
    %v4668 = vsel %vm4665, %v4603, %v3660
    %v4669 = vsel %vm4665, %v4604, %v3662
    %v4670 = vsel %vm4665, %v4605, %v3664
    %v4671 = vsel %vm4665, %v4606, %v3666
    %v4672 = vsel %vm4665, %v4607, %v3668
    %v4673 = vsel %vm4665, %v4608, %v3670
    %v4674 = vsel %vm4665, %v4609, %v3672
    %v4675 = vsel %vm4665, %v4610, %v3674
    %v4676 = vsel %vm4665, %v4611, %v3676
    %v4677 = vsel %vm4665, %v4612, %v3678
    %v4678 = vsel %vm4665, %v4613, %v3680
    %v4679 = vsel %vm4665, %v4614, %v3682
    %v4680 = vsel %vm4665, %v4615, %v3684
    %v4681 = vsel %vm4665, %v4616, %v3686
    %v4682 = vsel %vm4665, %v4617, %v3688
    %v4683 = vsel %vm4665, %v4618, %v3690
    %v4684 = vsel %vm4665, %v4619, %v3692
    %v4685 = vsel %vm4665, %v4620, %v3694
    %v4686 = vsel %vm4665, %v4621, %v3696
    %v4687 = vsel %vm4665, %v4622, %v3698
    %v4688 = vsel %vm4665, %v4623, %v3700
    %v4689 = vsel %vm4665, %v4624, %v3702
    %v4690 = vsel %vm4665, %v4625, %v3704
    %v4691 = vsel %vm4665, %v4626, %v3706
    %v4692 = vsel %vm4665, %v4627, %v3708
    %v4693 = vsel %vm4665, %v4628, %v3710
    %v4694 = vsel %vm4665, %v4629, %v3712
    %v4695 = vsel %vm4665, %v4630, %v3714
    %v4696 = vsel %vm4665, %v4631, %v3716
    %v4697 = vsel %vm4665, %v4632, %v3718
    %v4698 = vsel %vm4665, %v4633, %v3720
    %v4699 = vsel %vm4665, %v4634, %v3722
    %v4700 = vsel %vm4665, %v4635, %v3724
    %v4701 = vsel %vm4665, %v4636, %v3726
    %v4702 = vsel %vm4665, %v4637, %v3728
    %v4703 = vsel %vm4665, %v4638, %v3730
    %v4704 = vsel %vm4665, %v4639, %v3732
    %v4705 = vsel %vm4665, %v4640, %v3734
    %v4706 = vsel %vm4665, %v4641, %v3736
    %v4707 = vsel %vm4665, %v4642, %v3738
    %v4708 = vsel %vm4665, %v4643, %v3740
    %v4709 = vsel %vm4665, %v4644, %v3742
    %v4710 = vsel %vm4665, %v4645, %v3744
    %v4711 = vsel %vm4665, %v4646, %v3746
    %v4712 = vsel %vm4665, %v4647, %v3748
    %v4713 = vsel %vm4665, %v4648, %v3750
    %v4714 = vsel %vm4665, %v4649, %v3752
    %v4715 = vsel %vm4665, %v4650, %v3754
    %v4716 = vsel %vm4665, %v4651, %v3756
    %v4717 = vsel %vm4665, %v4652, %v3758
    %v4718 = vsel %vm4665, %v4653, %v3760
    %v4719 = vsel %vm4665, %v4654, %v3762
    %v4720 = vsel %vm4665, %v4655, %v3764
    %v4721 = vsel %vm4665, %v4656, %v3766
    %v4722 = vsel %vm4665, %v4657, %v3768
    %v4723 = vsel %vm4665, %v4658, %v3770
    %v4724 = vsel %vm4665, %v4659, %v3772
    %v4725 = vsel %vm4665, %v4660, %v3774
    %v4726 = vsel %vm4665, %v4661, %v3776
    %v4727 = vsel %vm4665, %v4662, %v3778
    %v4728 = vsel %vm4665, %v4663, %v3780
    %v4729 = vsel %vm4665, %v4664, %v3782
    %v4730 = vsel %vm4535, %v2953, %v3934
    %v4731 = vsel %vm4535, %v2955, %v3936
    %v4732 = vsel %vm4535, %v2958, %v3938
    %v4733 = vsel %vm4535, %v2960, %v3940
    %v4734 = vsel %vm4535, %v2963, %v3942
    %v4735 = vsel %vm4535, %v2965, %v3944
    %v4736 = vsel %vm4535, %v2968, %v3946
    %v4737 = vsel %vm4535, %v2970, %v3948
    %v4738 = vsel %vm4535, %v2973, %v3950
    %v4739 = vsel %vm4535, %v2975, %v3952
    %v4740 = vsel %vm4535, %v2978, %v3954
    %v4741 = vsel %vm4535, %v2980, %v3956
    %v4742 = vsel %vm4535, %v2983, %v3958
    %v4743 = vsel %vm4535, %v2985, %v3960
    %v4744 = vsel %vm4535, %v2988, %v3962
    %v4745 = vsel %vm4535, %v2990, %v3964
    %v4746 = vsel %vm4535, %v2993, %v3966
    %v4747 = vsel %vm4535, %v2995, %v3968
    %v4748 = vsel %vm4535, %v2998, %v3970
    %v4749 = vsel %vm4535, %v3000, %v3972
    %v4750 = vsel %vm4535, %v3003, %v3974
    %v4751 = vsel %vm4535, %v3005, %v3976
    %v4752 = vsel %vm4535, %v3008, %v3978
    %v4753 = vsel %vm4535, %v3010, %v3980
    %v4754 = vsel %vm4535, %v3013, %v3982
    %v4755 = vsel %vm4535, %v3015, %v3984
    %v4756 = vsel %vm4535, %v3018, %v3986
    %v4757 = vsel %vm4535, %v3020, %v3988
    %v4758 = vsel %vm4535, %v3023, %v3990
    %v4759 = vsel %vm4535, %v3025, %v3992
    %v4760 = vsel %vm4535, %v3851, %v3994
    %v4761 = vsel %vm4535, %v3853, %v3996
    %v4762 = vsel %vm4535, %v3033, %v3998
    %v4763 = vsel %vm4535, %v3035, %v4000
    %v4764 = vsel %vm4535, %v3038, %v4002
    %v4765 = vsel %vm4535, %v3040, %v4004
    %v4766 = vsel %vm4535, %v3043, %v4006
    %v4767 = vsel %vm4535, %v3045, %v4008
    %v4768 = vsel %vm4535, %v3048, %v4010
    %v4769 = vsel %vm4535, %v3050, %v4012
    %v4770 = vsel %vm4535, %v3053, %v4014
    %v4771 = vsel %vm4535, %v3055, %v4016
    %v4772 = vsel %vm4535, %v3058, %v4018
    %v4773 = vsel %vm4535, %v3060, %v4020
    %v4774 = vsel %vm4535, %v3063, %v4022
    %v4775 = vsel %vm4535, %v3065, %v4024
    %v4776 = vsel %vm4535, %v3068, %v4026
    %v4777 = vsel %vm4535, %v3070, %v4028
    %v4778 = vsel %vm4535, %v3073, %v4030
    %v4779 = vsel %vm4535, %v3075, %v4032
    %v4780 = vsel %vm4535, %v3078, %v4034
    %v4781 = vsel %vm4535, %v3080, %v4036
    %v4782 = vsel %vm4535, %v3083, %v4038
    %v4783 = vsel %vm4535, %v3085, %v4040
    %v4784 = vsel %vm4535, %v3088, %v4042
    %v4785 = vsel %vm4535, %v3090, %v4044
    %v4786 = vsel %vm4535, %v3093, %v4046
    %v4787 = vsel %vm4535, %v3095, %v4048
    %v4788 = vsel %vm4535, %v3098, %v4050
    %v4789 = vsel %vm4535, %v3100, %v4052
    %v4790 = vsel %vm4535, %v3103, %v4054
    %v4791 = vsel %vm4535, %v3105, %v4056
    %v4792 = vsel %vm4535, %v3856, %v4058
    %v4793 = vsel %vm4535, %v3858, %v4060
    %v4794 = vsel %vm4600, %v4730, %v4130
    %v4795 = vsel %vm4600, %v4731, %v4132
    %v4796 = vsel %vm4600, %v4732, %v4134
    %v4797 = vsel %vm4600, %v4733, %v4136
    %v4798 = vsel %vm4600, %v4734, %v4138
    %v4799 = vsel %vm4600, %v4735, %v4140
    %v4800 = vsel %vm4600, %v4736, %v4142
    %v4801 = vsel %vm4600, %v4737, %v4144
    %v4802 = vsel %vm4600, %v4738, %v4146
    %v4803 = vsel %vm4600, %v4739, %v4148
    %v4804 = vsel %vm4600, %v4740, %v4150
    %v4805 = vsel %vm4600, %v4741, %v4152
    %v4806 = vsel %vm4600, %v4742, %v4154
    %v4807 = vsel %vm4600, %v4743, %v4156
    %v4808 = vsel %vm4600, %v4744, %v4158
    %v4809 = vsel %vm4600, %v4745, %v4160
    %v4810 = vsel %vm4600, %v4746, %v4162
    %v4811 = vsel %vm4600, %v4747, %v4164
    %v4812 = vsel %vm4600, %v4748, %v4166
    %v4813 = vsel %vm4600, %v4749, %v4168
    %v4814 = vsel %vm4600, %v4750, %v4170
    %v4815 = vsel %vm4600, %v4751, %v4172
    %v4816 = vsel %vm4600, %v4752, %v4174
    %v4817 = vsel %vm4600, %v4753, %v4176
    %v4818 = vsel %vm4600, %v4754, %v4178
    %v4819 = vsel %vm4600, %v4755, %v4180
    %v4820 = vsel %vm4600, %v4756, %v4182
    %v4821 = vsel %vm4600, %v4757, %v4184
    %v4822 = vsel %vm4600, %v4758, %v4186
    %v4823 = vsel %vm4600, %v4759, %v4188
    %v4824 = vsel %vm4600, %v4760, %v4190
    %v4825 = vsel %vm4600, %v4761, %v4192
    %v4826 = vsel %vm4600, %v4762, %v4194
    %v4827 = vsel %vm4600, %v4763, %v4196
    %v4828 = vsel %vm4600, %v4764, %v4198
    %v4829 = vsel %vm4600, %v4765, %v4200
    %v4830 = vsel %vm4600, %v4766, %v4202
    %v4831 = vsel %vm4600, %v4767, %v4204
    %v4832 = vsel %vm4600, %v4768, %v4206
    %v4833 = vsel %vm4600, %v4769, %v4208
    %v4834 = vsel %vm4600, %v4770, %v4210
    %v4835 = vsel %vm4600, %v4771, %v4212
    %v4836 = vsel %vm4600, %v4772, %v4214
    %v4837 = vsel %vm4600, %v4773, %v4216
    %v4838 = vsel %vm4600, %v4774, %v4218
    %v4839 = vsel %vm4600, %v4775, %v4220
    %v4840 = vsel %vm4600, %v4776, %v4222
    %v4841 = vsel %vm4600, %v4777, %v4224
    %v4842 = vsel %vm4600, %v4778, %v4226
    %v4843 = vsel %vm4600, %v4779, %v4228
    %v4844 = vsel %vm4600, %v4780, %v4230
    %v4845 = vsel %vm4600, %v4781, %v4232
    %v4846 = vsel %vm4600, %v4782, %v4234
    %v4847 = vsel %vm4600, %v4783, %v4236
    %v4848 = vsel %vm4600, %v4784, %v4238
    %v4849 = vsel %vm4600, %v4785, %v4240
    %v4850 = vsel %vm4600, %v4786, %v4242
    %v4851 = vsel %vm4600, %v4787, %v4244
    %v4852 = vsel %vm4600, %v4788, %v4246
    %v4853 = vsel %vm4600, %v4789, %v4248
    %v4854 = vsel %vm4600, %v4790, %v4250
    %v4855 = vsel %vm4600, %v4791, %v4252
    %v4856 = vsel %vm4600, %v4792, %v4254
    %v4857 = vsel %vm4600, %v4793, %v4256
    %v4858 = vsel %vm4665, %v4794, %v4334
    %v4859 = vsel %vm4665, %v4795, %v4336
    %v4860 = vsel %vm4665, %v4796, %v4338
    %v4861 = vsel %vm4665, %v4797, %v4340
    %v4862 = vsel %vm4665, %v4798, %v4342
    %v4863 = vsel %vm4665, %v4799, %v4344
    %v4864 = vsel %vm4665, %v4800, %v4346
    %v4865 = vsel %vm4665, %v4801, %v4348
    %v4866 = vsel %vm4665, %v4802, %v4350
    %v4867 = vsel %vm4665, %v4803, %v4352
    %v4868 = vsel %vm4665, %v4804, %v4354
    %v4869 = vsel %vm4665, %v4805, %v4356
    %v4870 = vsel %vm4665, %v4806, %v4358
    %v4871 = vsel %vm4665, %v4807, %v4360
    %v4872 = vsel %vm4665, %v4808, %v4362
    %v4873 = vsel %vm4665, %v4809, %v4364
    %v4874 = vsel %vm4665, %v4810, %v4366
    %v4875 = vsel %vm4665, %v4811, %v4368
    %v4876 = vsel %vm4665, %v4812, %v4370
    %v4877 = vsel %vm4665, %v4813, %v4372
    %v4878 = vsel %vm4665, %v4814, %v4374
    %v4879 = vsel %vm4665, %v4815, %v4376
    %v4880 = vsel %vm4665, %v4816, %v4378
    %v4881 = vsel %vm4665, %v4817, %v4380
    %v4882 = vsel %vm4665, %v4818, %v4382
    %v4883 = vsel %vm4665, %v4819, %v4384
    %v4884 = vsel %vm4665, %v4820, %v4386
    %v4885 = vsel %vm4665, %v4821, %v4388
    %v4886 = vsel %vm4665, %v4822, %v4390
    %v4887 = vsel %vm4665, %v4823, %v4392
    %v4888 = vsel %vm4665, %v4824, %v4394
    %v4889 = vsel %vm4665, %v4825, %v4396
    %v4890 = vsel %vm4665, %v4826, %v4398
    %v4891 = vsel %vm4665, %v4827, %v4400
    %v4892 = vsel %vm4665, %v4828, %v4402
    %v4893 = vsel %vm4665, %v4829, %v4404
    %v4894 = vsel %vm4665, %v4830, %v4406
    %v4895 = vsel %vm4665, %v4831, %v4408
    %v4896 = vsel %vm4665, %v4832, %v4410
    %v4897 = vsel %vm4665, %v4833, %v4412
    %v4898 = vsel %vm4665, %v4834, %v4414
    %v4899 = vsel %vm4665, %v4835, %v4416
    %v4900 = vsel %vm4665, %v4836, %v4418
    %v4901 = vsel %vm4665, %v4837, %v4420
    %v4902 = vsel %vm4665, %v4838, %v4422
    %v4903 = vsel %vm4665, %v4839, %v4424
    %v4904 = vsel %vm4665, %v4840, %v4426
    %v4905 = vsel %vm4665, %v4841, %v4428
    %v4906 = vsel %vm4665, %v4842, %v4430
    %v4907 = vsel %vm4665, %v4843, %v4432
    %v4908 = vsel %vm4665, %v4844, %v4434
    %v4909 = vsel %vm4665, %v4845, %v4436
    %v4910 = vsel %vm4665, %v4846, %v4438
    %v4911 = vsel %vm4665, %v4847, %v4440
    %v4912 = vsel %vm4665, %v4848, %v4442
    %v4913 = vsel %vm4665, %v4849, %v4444
    %v4914 = vsel %vm4665, %v4850, %v4446
    %v4915 = vsel %vm4665, %v4851, %v4448
    %v4916 = vsel %vm4665, %v4852, %v4450
    %v4917 = vsel %vm4665, %v4853, %v4452
    %v4918 = vsel %vm4665, %v4854, %v4454
    %v4919 = vsel %vm4665, %v4855, %v4456
    %v4920 = vsel %vm4665, %v4856, %v4458
    %v4921 = vsel %vm4665, %v4857, %v4460
    %v4922 = vld [vmem:[%s2] sm:$0xff]
    %v4923 = vld [vmem:[%s2 + $0x8] sm:$0xff]
    %v4924 = vld [vmem:[%s2 + $0x10] sm:$0xff]
    %v4925 = vld [vmem:[%s2 + $0x18] sm:$0xff]
    %v4926 = vld [vmem:[%s2 + $0x20] sm:$0xff]
    %v4927 = vld [vmem:[%s2 + $0x28] sm:$0xff]
    %v4928 = vld [vmem:[%s2 + $0x30] sm:$0xff]
    %v4929 = vld [vmem:[%s2 + $0x38] sm:$0xff]
    %v4930 = vld [vmem:[%s2 + $0x40] sm:$0xff]
    %v4931 = vld [vmem:[%s2 + $0x48] sm:$0xff]
    %v4932 = vld [vmem:[%s2 + $0x50] sm:$0xff]
    %v4933 = vld [vmem:[%s2 + $0x58] sm:$0xff]
    %v4934 = vld [vmem:[%s2 + $0x60] sm:$0xff]
    %v4935 = vld [vmem:[%s2 + $0x68] sm:$0xff]
    %v4936 = vld [vmem:[%s2 + $0x70] sm:$0xff]
    %v4937 = vld [vmem:[%s2 + $0x78] sm:$0xff]
    %v4938 = vld [vmem:[%s2 + $0x80] sm:$0xff]
    %v4939 = vld [vmem:[%s2 + $0x88] sm:$0xff]
    %v4940 = vld [vmem:[%s2 + $0x90] sm:$0xff]
    %v4941 = vld [vmem:[%s2 + $0x98] sm:$0xff]
    %v4942 = vld [vmem:[%s2 + $0xa0] sm:$0xff]
    %v4943 = vld [vmem:[%s2 + $0xa8] sm:$0xff]
    %v4944 = vld [vmem:[%s2 + $0xb0] sm:$0xff]
    %v4945 = vld [vmem:[%s2 + $0xb8] sm:$0xff]
    %v4946 = vld [vmem:[%s2 + $0xc0] sm:$0xff]
    %v4947 = vld [vmem:[%s2 + $0xc8] sm:$0xff]
    %v4948 = vld [vmem:[%s2 + $0xd0] sm:$0xff]
    %v4949 = vld [vmem:[%s2 + $0xd8] sm:$0xff]
    %v4950 = vld [vmem:[%s2 + $0xe0] sm:$0xff]
    %v4951 = vld [vmem:[%s2 + $0xe8] sm:$0xff]
    %v4952 = vld [vmem:[%s2 + $0xf0] sm:$0xff]
    %v4953 = vld [vmem:[%s2 + $0xf8] sm:$0xff]
    %v4954 = vld [vmem:[%s2 + $0x100] sm:$0xff]
    %v4955 = vld [vmem:[%s2 + $0x108] sm:$0xff]
    %v4956 = vld [vmem:[%s2 + $0x110] sm:$0xff]
    %v4957 = vld [vmem:[%s2 + $0x118] sm:$0xff]
    %v4958 = vld [vmem:[%s3] sm:$0x1]
    %v4960 = vlaneseq
    %v4961 = vshrl.u32 %v4960, 7
    %v4962 = vsub.s32 0, %v4961
    %v4963 = vrot.slane %v4958, %v4962
    %v4965 = vsel %vm4535, %v3311, 0
    %v4967 = vsel %vm4535, %v3313, 0
    %v4969 = vsel %vm4535, %v3316, 0
    %v4971 = vsel %vm4535, %v3318, 0
    %v4973 = vsel %vm4535, %v3321, 0
    %v4975 = vsel %vm4535, %v3323, 0
    %v4977 = vsel %vm4535, %v3326, 0
    %v4979 = vsel %vm4535, %v3328, 0
    %v4981 = vsel %vm4535, %v3331, 0
    %v4983 = vsel %vm4535, %v3333, 0
    %v4985 = vsel %vm4535, %v3336, 0
    %v4987 = vsel %vm4535, %v3338, 0
    %v4989 = vsel %vm4535, %v3341, 0
    %v4991 = vsel %vm4535, %v3343, 0
    %v4993 = vsel %vm4535, %v3346, 0
    %v4995 = vsel %vm4535, %v3348, 0
    %v4997 = vsel %vm4535, %v3351, 0
    %v4999 = vsel %vm4535, %v3353, 0
    %v5001 = vsel %vm4535, %v3356, 0
    %v5003 = vsel %vm4535, %v3358, 0
    %v5005 = vsel %vm4535, %v3361, 0
    %v5007 = vsel %vm4535, %v3363, 0
    %v5009 = vsel %vm4535, %v3366, 0
    %v5011 = vsel %vm4535, %v3368, 0
    %v5013 = vsel %vm4535, %v3371, 0
    %v5015 = vsel %vm4535, %v3373, 0
    %v5017 = vsel %vm4535, %v3376, 0
    %v5019 = vsel %vm4535, %v3378, 0
    %v5021 = vsel %vm4535, %v3925, 0
    %v5023 = vsel %vm4535, %v3927, 0
    %v5025 = vsel %vm4535, %v4527, 0
    %v5027 = vsel %vm4535, %v4529, 0
    %v5029 = vsel %vm4535, %v3391, 0
    %v5031 = vsel %vm4535, %v3393, 0
    %v5033 = vsel %vm4535, %v3396, 0
    %v5035 = vsel %vm4535, %v3398, 0
    %v5037 = vsel %vm4535, %v3401, 0
    %v5039 = vsel %vm4535, %v3403, 0
    %v5041 = vsel %vm4535, %v3406, 0
    %v5043 = vsel %vm4535, %v3408, 0
    %v5045 = vsel %vm4535, %v3411, 0
    %v5047 = vsel %vm4535, %v3413, 0
    %v5049 = vsel %vm4535, %v3416, 0
    %v5051 = vsel %vm4535, %v3418, 0
    %v5053 = vsel %vm4535, %v3421, 0
    %v5055 = vsel %vm4535, %v3423, 0
    %v5057 = vsel %vm4535, %v3426, 0
    %v5059 = vsel %vm4535, %v3428, 0
    %v5061 = vsel %vm4535, %v3431, 0
    %v5063 = vsel %vm4535, %v3433, 0
    %v5065 = vsel %vm4535, %v3436, 0
    %v5067 = vsel %vm4535, %v3438, 0
    %v5069 = vsel %vm4535, %v3441, 0
    %v5071 = vsel %vm4535, %v3443, 0
    %v5073 = vsel %vm4535, %v3446, 0
    %v5075 = vsel %vm4535, %v3448, 0
    %v5077 = vsel %vm4535, %v3451, 0
    %v5079 = vsel %vm4535, %v3453, 0
    %v5081 = vsel %vm4535, %v3456, 0
    %v5083 = vsel %vm4535, %v3458, 0
    %v5085 = vsel %vm4535, %v3930, 0
    %v5087 = vsel %vm4535, %v3932, 0
    %v5089 = vsel %vm4535, %v4532, 0
    %v5091 = vsel %vm4535, %v4534, 0
    %5093 = vmatprep.subr.mxu0 0.0
    %5094 = vmatpush1.msra.mxu0 %v4937
    %5095 = vmatprep.subr.mxu0 0.0
    %5096 = vmatpush1.msra.mxu0 %v4936
    %5097 = vmatprep.subr.mxu0 0.0
    %5098 = vmatpush1.msra.mxu0 %v4935
    %5099 = vmatprep.subr.mxu0 0.0
    %5100 = vmatpush1.msra.mxu0 %v4934
    %5101 = vmatprep.subr.mxu0 0.0
    %5102 = vmatpush1.msra.mxu0 %v4933
    %5103 = vmatprep.subr.mxu0 0.0
    %5104 = vmatpush1.msra.mxu0 %v4932
    %5105 = vmatprep.subr.mxu0 0.0
    %5106 = vmatpush1.msra.mxu0 %v4931
    %5107 = vmatprep.subr.mxu0 0.0
    %5108 = vmatpush1.msra.mxu0 %v4930
    %5109 = vmatprep.subr.mxu0 0.0
    %5110 = vmatpush1.msra.mxu0 %v4929
    %5111 = vmatprep.subr.mxu0 0.0
    %5112 = vmatpush1.msra.mxu0 %v4928
    %5113 = vmatprep.subr.mxu0 0.0
    %5114 = vmatpush1.msra.mxu0 %v4927
    %5115 = vmatprep.subr.mxu0 0.0
    %5116 = vmatpush1.msra.mxu0 %v4926
    %5117 = vmatprep.subr.mxu0 0.0
    %5118 = vmatpush1.msra.mxu0 %v4925
    %5119 = vmatprep.subr.mxu0 0.0
    %5120 = vmatpush1.msra.mxu0 %v4924
    %5121 = vmatprep.subr.mxu0 0.0
    %5122 = vmatpush1.msra.mxu0 %v4923
    %5123 = vmatprep.subr.mxu0 0.0
    %5124 = vmatpush1.msra.mxu0 %v4922
    %5125 = vmatprep.subr.mxu0 0.0
    %5126 = vmatpush2.msra.mxu0 %v4953
    %5127 = vmatprep.subr.mxu0 0.0
    %5128 = vmatpush2.msra.mxu0 %v4952
    %5129 = vmatprep.subr.mxu0 0.0
    %5130 = vmatpush2.msra.mxu0 %v4951
    %5131 = vmatprep.subr.mxu0 0.0
    %5132 = vmatpush2.msra.mxu0 %v4950
    %5133 = vmatprep.subr.mxu0 0.0
    %5134 = vmatpush2.msra.mxu0 %v4949
    %5135 = vmatprep.subr.mxu0 0.0
    %5136 = vmatpush2.msra.mxu0 %v4948
    %5137 = vmatprep.subr.mxu0 0.0
    %5138 = vmatpush2.msra.mxu0 %v4947
    %5139 = vmatprep.subr.mxu0 0.0
    %5140 = vmatpush2.msra.mxu0 %v4946
    %5141 = vmatprep.subr.mxu0 0.0
    %5142 = vmatpush2.msra.mxu0 %v4945
    %5143 = vmatprep.subr.mxu0 0.0
    %5144 = vmatpush2.msra.mxu0 %v4944
    %5145 = vmatprep.subr.mxu0 0.0
    %5146 = vmatpush2.msra.mxu0 %v4943
    %5147 = vmatprep.subr.mxu0 0.0
    %5148 = vmatpush2.msra.mxu0 %v4942
    %5149 = vmatprep.subr.mxu0 0.0
    %5150 = vmatpush2.msra.mxu0 %v4941
    %5151 = vmatprep.subr.mxu0 0.0
    %5152 = vmatpush2.msra.mxu0 %v4940
    %5153 = vmatprep.subr.mxu0 0.0
    %5154 = vmatpush2.msra.mxu0 %v4939
    %5155 = vmatprep.subr.mxu0 0.0
    %5156 = vmatpush2.msra.mxu0 %v4938
    %5157 = vmatprep.mubr.f32.mxu0 %v4858
    %5158 = vmatmul.mubr.f32.gmra.mxu0 %v4666
    %v5159 = vpop.f32.mrf.mxu0
    %v5160 = vadd.f32 %v4963, %v5159
    %v5161 = vpop.f32.mrf.mxu0
    %5162 = vmatprep.mubr.f32.mxu0 %v4859
    %5163 = vmatmul.mubr.f32.gmra.mxu0 %v4667
    %v5164 = vpop.f32.mrf.mxu0
    %v5165 = vadd.f32 %v4963, %v5164
    %v5166 = vpop.f32.mrf.mxu0
    %5167 = vmatprep.mubr.f32.mxu0 %v4860
    %5168 = vmatmul.mubr.f32.gmra.mxu0 %v4668
    %v5169 = vpop.f32.mrf.mxu0
    %v5170 = vadd.f32 %v4963, %v5169
    %v5171 = vpop.f32.mrf.mxu0
    %5172 = vmatprep.mubr.f32.mxu0 %v4861
    %5173 = vmatmul.mubr.f32.gmra.mxu0 %v4669
    %v5174 = vpop.f32.mrf.mxu0
    %v5175 = vadd.f32 %v4963, %v5174
    %v5176 = vpop.f32.mrf.mxu0
    %5177 = vmatprep.mubr.f32.mxu0 %v4862
    %5178 = vmatmul.mubr.f32.gmra.mxu0 %v4670
    %v5179 = vpop.f32.mrf.mxu0
    %v5180 = vadd.f32 %v4963, %v5179
    %v5181 = vpop.f32.mrf.mxu0
    %5182 = vmatprep.mubr.f32.mxu0 %v4863
    %5183 = vmatmul.mubr.f32.gmra.mxu0 %v4671
    %v5184 = vpop.f32.mrf.mxu0
    %v5185 = vadd.f32 %v4963, %v5184
    %v5186 = vpop.f32.mrf.mxu0
    %5187 = vmatprep.mubr.f32.mxu0 %v4864
    %5188 = vmatmul.mubr.f32.gmra.mxu0 %v4672
    %v5189 = vpop.f32.mrf.mxu0
    %v5190 = vadd.f32 %v4963, %v5189
    %v5191 = vpop.f32.mrf.mxu0
    %5192 = vmatprep.mubr.f32.mxu0 %v4865
    %5193 = vmatmul.mubr.f32.gmra.mxu0 %v4673
    %v5194 = vpop.f32.mrf.mxu0
    %v5195 = vadd.f32 %v4963, %v5194
    %v5196 = vpop.f32.mrf.mxu0
    %5197 = vmatprep.mubr.f32.mxu0 %v4866
    %5198 = vmatmul.mubr.f32.gmra.mxu0 %v4674
    %v5199 = vpop.f32.mrf.mxu0
    %v5200 = vadd.f32 %v4963, %v5199
    %v5201 = vpop.f32.mrf.mxu0
    %5202 = vmatprep.mubr.f32.mxu0 %v4867
    %5203 = vmatmul.mubr.f32.gmra.mxu0 %v4675
    %v5204 = vpop.f32.mrf.mxu0
    %v5205 = vadd.f32 %v4963, %v5204
    %v5206 = vpop.f32.mrf.mxu0
    %5207 = vmatprep.mubr.f32.mxu0 %v4868
    %5208 = vmatmul.mubr.f32.gmra.mxu0 %v4676
    %v5209 = vpop.f32.mrf.mxu0
    %v5210 = vadd.f32 %v4963, %v5209
    %v5211 = vpop.f32.mrf.mxu0
    %5212 = vmatprep.mubr.f32.mxu0 %v4869
    %5213 = vmatmul.mubr.f32.gmra.mxu0 %v4677
    %v5214 = vpop.f32.mrf.mxu0
    %v5215 = vadd.f32 %v4963, %v5214
    %v5216 = vpop.f32.mrf.mxu0
    %5217 = vmatprep.mubr.f32.mxu0 %v4870
    %5218 = vmatmul.mubr.f32.gmra.mxu0 %v4678
    %v5219 = vpop.f32.mrf.mxu0
    %v5220 = vadd.f32 %v4963, %v5219
    %v5221 = vpop.f32.mrf.mxu0
    %5222 = vmatprep.mubr.f32.mxu0 %v4871
    %5223 = vmatmul.mubr.f32.gmra.mxu0 %v4679
    %v5224 = vpop.f32.mrf.mxu0
    %v5225 = vadd.f32 %v4963, %v5224
    %v5226 = vpop.f32.mrf.mxu0
    %5227 = vmatprep.mubr.f32.mxu0 %v4872
    %5228 = vmatmul.mubr.f32.gmra.mxu0 %v4680
    %v5229 = vpop.f32.mrf.mxu0
    %v5230 = vadd.f32 %v4963, %v5229
    %v5231 = vpop.f32.mrf.mxu0
    %5232 = vmatprep.mubr.f32.mxu0 %v4873
    %5233 = vmatmul.mubr.f32.gmra.mxu0 %v4681
    %v5234 = vpop.f32.mrf.mxu0
    %v5235 = vadd.f32 %v4963, %v5234
    %v5236 = vpop.f32.mrf.mxu0
    %5237 = vmatprep.mubr.f32.mxu0 %v4874
    %5238 = vmatmul.mubr.f32.gmra.mxu0 %v4682
    %v5239 = vpop.f32.mrf.mxu0
    %v5240 = vadd.f32 %v4963, %v5239
    %v5241 = vpop.f32.mrf.mxu0
    %5242 = vmatprep.mubr.f32.mxu0 %v4875
    %5243 = vmatmul.mubr.f32.gmra.mxu0 %v4683
    %v5244 = vpop.f32.mrf.mxu0
    %v5245 = vadd.f32 %v4963, %v5244
    %v5246 = vpop.f32.mrf.mxu0
    %5247 = vmatprep.mubr.f32.mxu0 %v4876
    %5248 = vmatmul.mubr.f32.gmra.mxu0 %v4684
    %v5249 = vpop.f32.mrf.mxu0
    %v5250 = vadd.f32 %v4963, %v5249
    %v5251 = vpop.f32.mrf.mxu0
    %5252 = vmatprep.mubr.f32.mxu0 %v4877
    %5253 = vmatmul.mubr.f32.gmra.mxu0 %v4685
    %v5254 = vpop.f32.mrf.mxu0
    %v5255 = vadd.f32 %v4963, %v5254
    %v5256 = vpop.f32.mrf.mxu0
    %5257 = vmatprep.mubr.f32.mxu0 %v4878
    %5258 = vmatmul.mubr.f32.gmra.mxu0 %v4686
    %v5259 = vpop.f32.mrf.mxu0
    %v5260 = vadd.f32 %v4963, %v5259
    %v5261 = vpop.f32.mrf.mxu0
    %5262 = vmatprep.mubr.f32.mxu0 %v4879
    %5263 = vmatmul.mubr.f32.gmra.mxu0 %v4687
    %v5264 = vpop.f32.mrf.mxu0
    %v5265 = vadd.f32 %v4963, %v5264
    %v5266 = vpop.f32.mrf.mxu0
    %5267 = vmatprep.mubr.f32.mxu0 %v4880
    %5268 = vmatmul.mubr.f32.gmra.mxu0 %v4688
    %v5269 = vpop.f32.mrf.mxu0
    %v5270 = vadd.f32 %v4963, %v5269
    %v5271 = vpop.f32.mrf.mxu0
    %5272 = vmatprep.mubr.f32.mxu0 %v4881
    %5273 = vmatmul.mubr.f32.gmra.mxu0 %v4689
    %v5274 = vpop.f32.mrf.mxu0
    %v5275 = vadd.f32 %v4963, %v5274
    %v5276 = vpop.f32.mrf.mxu0
    %5277 = vmatprep.mubr.f32.mxu0 %v4882
    %5278 = vmatmul.mubr.f32.gmra.mxu0 %v4690
    %v5279 = vpop.f32.mrf.mxu0
    %v5280 = vadd.f32 %v4963, %v5279
    %v5281 = vpop.f32.mrf.mxu0
    %5282 = vmatprep.mubr.f32.mxu0 %v4883
    %5283 = vmatmul.mubr.f32.gmra.mxu0 %v4691
    %v5284 = vpop.f32.mrf.mxu0
    %v5285 = vadd.f32 %v4963, %v5284
    %v5286 = vpop.f32.mrf.mxu0
    %5287 = vmatprep.mubr.f32.mxu0 %v4884
    %5288 = vmatmul.mubr.f32.gmra.mxu0 %v4692
    %v5289 = vpop.f32.mrf.mxu0
    %v5290 = vadd.f32 %v4963, %v5289
    %v5291 = vpop.f32.mrf.mxu0
    %5292 = vmatprep.mubr.f32.mxu0 %v4885
    %5293 = vmatmul.mubr.f32.gmra.mxu0 %v4693
    %v5294 = vpop.f32.mrf.mxu0
    %v5295 = vadd.f32 %v4963, %v5294
    %v5296 = vpop.f32.mrf.mxu0
    %5297 = vmatprep.mubr.f32.mxu0 %v4886
    %5298 = vmatmul.mubr.f32.gmra.mxu0 %v4694
    %v5299 = vpop.f32.mrf.mxu0
    %v5300 = vadd.f32 %v4963, %v5299
    %v5301 = vpop.f32.mrf.mxu0
    %5302 = vmatprep.mubr.f32.mxu0 %v4887
    %5303 = vmatmul.mubr.f32.gmra.mxu0 %v4695
    %v5304 = vpop.f32.mrf.mxu0
    %v5305 = vadd.f32 %v4963, %v5304
    %v5306 = vpop.f32.mrf.mxu0
    %5307 = vmatprep.mubr.f32.mxu0 %v4888
    %5308 = vmatmul.mubr.f32.gmra.mxu0 %v4696
    %v5309 = vpop.f32.mrf.mxu0
    %v5310 = vadd.f32 %v4963, %v5309
    %v5311 = vpop.f32.mrf.mxu0
    %5312 = vmatprep.mubr.f32.mxu0 %v4889
    %5313 = vmatmul.mubr.f32.gmra.mxu0 %v4697
    %v5314 = vpop.f32.mrf.mxu0
    %v5315 = vadd.f32 %v4963, %v5314
    %v5316 = vpop.f32.mrf.mxu0
    %5317 = vmatprep.mubr.f32.mxu0 %v4890
    %5318 = vmatmul.mubr.f32.gmra.mxu0 %v4698
    %v5319 = vpop.f32.mrf.mxu0
    %v5320 = vadd.f32 %v4963, %v5319
    %v5321 = vpop.f32.mrf.mxu0
    %5322 = vmatprep.mubr.f32.mxu0 %v4891
    %5323 = vmatmul.mubr.f32.gmra.mxu0 %v4699
    %v5324 = vpop.f32.mrf.mxu0
    %v5325 = vadd.f32 %v4963, %v5324
    %v5326 = vpop.f32.mrf.mxu0
    %5327 = vmatprep.mubr.f32.mxu0 %v4892
    %5328 = vmatmul.mubr.f32.gmra.mxu0 %v4700
    %v5329 = vpop.f32.mrf.mxu0
    %v5330 = vadd.f32 %v4963, %v5329
    %v5331 = vpop.f32.mrf.mxu0
    %5332 = vmatprep.mubr.f32.mxu0 %v4893
    %5333 = vmatmul.mubr.f32.gmra.mxu0 %v4701
    %v5334 = vpop.f32.mrf.mxu0
    %v5335 = vadd.f32 %v4963, %v5334
    %v5336 = vpop.f32.mrf.mxu0
    %5337 = vmatprep.mubr.f32.mxu0 %v4894
    %5338 = vmatmul.mubr.f32.gmra.mxu0 %v4702
    %v5339 = vpop.f32.mrf.mxu0
    %v5340 = vadd.f32 %v4963, %v5339
    %v5341 = vpop.f32.mrf.mxu0
    %5342 = vmatprep.mubr.f32.mxu0 %v4895
    %5343 = vmatmul.mubr.f32.gmra.mxu0 %v4703
    %v5344 = vpop.f32.mrf.mxu0
    %v5345 = vadd.f32 %v4963, %v5344
    %v5346 = vpop.f32.mrf.mxu0
    %5347 = vmatprep.mubr.f32.mxu0 %v4896
    %5348 = vmatmul.mubr.f32.gmra.mxu0 %v4704
    %v5349 = vpop.f32.mrf.mxu0
    %v5350 = vadd.f32 %v4963, %v5349
    %v5351 = vpop.f32.mrf.mxu0
    %5352 = vmatprep.mubr.f32.mxu0 %v4897
    %5353 = vmatmul.mubr.f32.gmra.mxu0 %v4705
    %v5354 = vpop.f32.mrf.mxu0
    %v5355 = vadd.f32 %v4963, %v5354
    %v5356 = vpop.f32.mrf.mxu0
    %5357 = vmatprep.mubr.f32.mxu0 %v4898
    %5358 = vmatmul.mubr.f32.gmra.mxu0 %v4706
    %v5359 = vpop.f32.mrf.mxu0
    %v5360 = vadd.f32 %v4963, %v5359
    %v5361 = vpop.f32.mrf.mxu0
    %5362 = vmatprep.mubr.f32.mxu0 %v4899
    %5363 = vmatmul.mubr.f32.gmra.mxu0 %v4707
    %v5364 = vpop.f32.mrf.mxu0
    %v5365 = vadd.f32 %v4963, %v5364
    %v5366 = vpop.f32.mrf.mxu0
    %5367 = vmatprep.mubr.f32.mxu0 %v4900
    %5368 = vmatmul.mubr.f32.gmra.mxu0 %v4708
    %v5369 = vpop.f32.mrf.mxu0
    %v5370 = vadd.f32 %v4963, %v5369
    %v5371 = vpop.f32.mrf.mxu0
    %5372 = vmatprep.mubr.f32.mxu0 %v4901
    %5373 = vmatmul.mubr.f32.gmra.mxu0 %v4709
    %v5374 = vpop.f32.mrf.mxu0
    %v5375 = vadd.f32 %v4963, %v5374
    %v5376 = vpop.f32.mrf.mxu0
    %5377 = vmatprep.mubr.f32.mxu0 %v4902
    %5378 = vmatmul.mubr.f32.gmra.mxu0 %v4710
    %v5379 = vpop.f32.mrf.mxu0
    %v5380 = vadd.f32 %v4963, %v5379
    %v5381 = vpop.f32.mrf.mxu0
    %5382 = vmatprep.mubr.f32.mxu0 %v4903
    %5383 = vmatmul.mubr.f32.gmra.mxu0 %v4711
    %v5384 = vpop.f32.mrf.mxu0
    %v5385 = vadd.f32 %v4963, %v5384
    %v5386 = vpop.f32.mrf.mxu0
    %5387 = vmatprep.mubr.f32.mxu0 %v4904
    %5388 = vmatmul.mubr.f32.gmra.mxu0 %v4712
    %v5389 = vpop.f32.mrf.mxu0
    %v5390 = vadd.f32 %v4963, %v5389
    %v5391 = vpop.f32.mrf.mxu0
    %5392 = vmatprep.mubr.f32.mxu0 %v4905
    %5393 = vmatmul.mubr.f32.gmra.mxu0 %v4713
    %v5394 = vpop.f32.mrf.mxu0
    %v5395 = vadd.f32 %v4963, %v5394
    %v5396 = vpop.f32.mrf.mxu0
    %5397 = vmatprep.mubr.f32.mxu0 %v4906
    %5398 = vmatmul.mubr.f32.gmra.mxu0 %v4714
    %v5399 = vpop.f32.mrf.mxu0
    %v5400 = vadd.f32 %v4963, %v5399
    %v5401 = vpop.f32.mrf.mxu0
    %5402 = vmatprep.mubr.f32.mxu0 %v4907
    %5403 = vmatmul.mubr.f32.gmra.mxu0 %v4715
    %v5404 = vpop.f32.mrf.mxu0
    %v5405 = vadd.f32 %v4963, %v5404
    %v5406 = vpop.f32.mrf.mxu0
    %5407 = vmatprep.mubr.f32.mxu0 %v4908
    %5408 = vmatmul.mubr.f32.gmra.mxu0 %v4716
    %v5409 = vpop.f32.mrf.mxu0
    %v5410 = vadd.f32 %v4963, %v5409
    %v5411 = vpop.f32.mrf.mxu0
    %5412 = vmatprep.mubr.f32.mxu0 %v4909
    %5413 = vmatmul.mubr.f32.gmra.mxu0 %v4717
    %v5414 = vpop.f32.mrf.mxu0
    %v5415 = vadd.f32 %v4963, %v5414
    %v5416 = vpop.f32.mrf.mxu0
    %5417 = vmatprep.mubr.f32.mxu0 %v4910
    %5418 = vmatmul.mubr.f32.gmra.mxu0 %v4718
    %v5419 = vpop.f32.mrf.mxu0
    %v5420 = vadd.f32 %v4963, %v5419
    %v5421 = vpop.f32.mrf.mxu0
    %5422 = vmatprep.mubr.f32.mxu0 %v4911
    %5423 = vmatmul.mubr.f32.gmra.mxu0 %v4719
    %v5424 = vpop.f32.mrf.mxu0
    %v5425 = vadd.f32 %v4963, %v5424
    %v5426 = vpop.f32.mrf.mxu0
    %5427 = vmatprep.mubr.f32.mxu0 %v4912
    %5428 = vmatmul.mubr.f32.gmra.mxu0 %v4720
    %v5429 = vpop.f32.mrf.mxu0
    %v5430 = vadd.f32 %v4963, %v5429
    %v5431 = vpop.f32.mrf.mxu0
    %5432 = vmatprep.mubr.f32.mxu0 %v4913
    %5433 = vmatmul.mubr.f32.gmra.mxu0 %v4721
    %v5434 = vpop.f32.mrf.mxu0
    %v5435 = vadd.f32 %v4963, %v5434
    %v5436 = vpop.f32.mrf.mxu0
    %5437 = vmatprep.mubr.f32.mxu0 %v4914
    %5438 = vmatmul.mubr.f32.gmra.mxu0 %v4722
    %v5439 = vpop.f32.mrf.mxu0
    %v5440 = vadd.f32 %v4963, %v5439
    %v5441 = vpop.f32.mrf.mxu0
    %5442 = vmatprep.mubr.f32.mxu0 %v4915
    %5443 = vmatmul.mubr.f32.gmra.mxu0 %v4723
    %v5444 = vpop.f32.mrf.mxu0
    %v5445 = vadd.f32 %v4963, %v5444
    %v5446 = vpop.f32.mrf.mxu0
    %5447 = vmatprep.mubr.f32.mxu0 %v4916
    %5448 = vmatmul.mubr.f32.gmra.mxu0 %v4724
    %v5449 = vpop.f32.mrf.mxu0
    %v5450 = vadd.f32 %v4963, %v5449
    %v5451 = vpop.f32.mrf.mxu0
    %5452 = vmatprep.mubr.f32.mxu0 %v4917
    %5453 = vmatmul.mubr.f32.gmra.mxu0 %v4725
    %v5454 = vpop.f32.mrf.mxu0
    %v5455 = vadd.f32 %v4963, %v5454
    %v5456 = vpop.f32.mrf.mxu0
    %5457 = vmatprep.mubr.f32.mxu0 %v4918
    %5458 = vmatmul.mubr.f32.gmra.mxu0 %v4726
    %v5459 = vpop.f32.mrf.mxu0
    %v5460 = vadd.f32 %v4963, %v5459
    %v5461 = vpop.f32.mrf.mxu0
    %5462 = vmatprep.mubr.f32.mxu0 %v4919
    %5463 = vmatmul.mubr.f32.gmra.mxu0 %v4727
    %v5464 = vpop.f32.mrf.mxu0
    %v5465 = vadd.f32 %v4963, %v5464
    %v5466 = vpop.f32.mrf.mxu0
    %5467 = vmatprep.mubr.f32.mxu0 %v4920
    %5468 = vmatmul.mubr.f32.gmra.mxu0 %v4728
    %v5469 = vpop.f32.mrf.mxu0
    %v5470 = vadd.f32 %v4963, %v5469
    %v5471 = vpop.f32.mrf.mxu0
    %5472 = vmatprep.mubr.f32.mxu0 %v4921
    %5473 = vmatmul.mubr.f32.gmra.mxu0 %v4729
    %v5474 = vpop.f32.mrf.mxu0
    %v5475 = vadd.f32 %v4963, %v5474
    %v5476 = vpop.f32.mrf.mxu0
    %5477 = vdwg.mxu0
    %5478 = vmatprep.subr.mxu0 0.0
    %5479 = vmatpush1.msra.mxu0 0.0
    %5480 = vmatprep.subr.mxu0 0.0
    %5481 = vmatpush1.msra.mxu0 0.0
    %5482 = vmatprep.subr.mxu0 0.0
    %5483 = vmatpush1.msra.mxu0 0.0
    %5484 = vmatprep.subr.mxu0 0.0
    %5485 = vmatpush1.msra.mxu0 0.0
    %5486 = vmatprep.subr.mxu0 0.0
    %5487 = vmatpush1.msra.mxu0 0.0
    %5488 = vmatprep.subr.mxu0 0.0
    %5489 = vmatpush1.msra.mxu0 0.0
    %5490 = vmatprep.subr.mxu0 0.0
    %5491 = vmatpush1.msra.mxu0 0.0
    %5492 = vmatprep.subr.mxu0 0.0
    %5493 = vmatpush1.msra.mxu0 0.0
    %5494 = vmatprep.subr.mxu0 0.0
    %5495 = vmatpush1.msra.mxu0 0.0
    %5496 = vmatprep.subr.mxu0 0.0
    %5497 = vmatpush1.msra.mxu0 0.0
    %5498 = vmatprep.subr.mxu0 0.0
    %5499 = vmatpush1.msra.mxu0 0.0
    %5500 = vmatprep.subr.mxu0 0.0
    %5501 = vmatpush1.msra.mxu0 0.0
    %5502 = vmatprep.subr.mxu0 0.0
    %5503 = vmatpush1.msra.mxu0 %v4957
    %5504 = vmatprep.subr.mxu0 0.0
    %5505 = vmatpush1.msra.mxu0 %v4956
    %5506 = vmatprep.subr.mxu0 0.0
    %5507 = vmatpush1.msra.mxu0 %v4955
    %5508 = vmatprep.subr.mxu0 0.0
    %5509 = vmatpush1.msra.mxu0 %v4954
    %5510 = vmatprep.subr.mxu0 0.0
    %5511 = vmatpush2.msra.mxu0 0.0
    %5512 = vmatprep.subr.mxu0 0.0
    %5513 = vmatpush2.msra.mxu0 0.0
    %5514 = vmatprep.subr.mxu0 0.0
    %5515 = vmatpush2.msra.mxu0 0.0
    %5516 = vmatprep.subr.mxu0 0.0
    %5517 = vmatpush2.msra.mxu0 0.0
    %5518 = vmatprep.subr.mxu0 0.0
    %5519 = vmatpush2.msra.mxu0 0.0
    %5520 = vmatprep.subr.mxu0 0.0
    %5521 = vmatpush2.msra.mxu0 0.0
    %5522 = vmatprep.subr.mxu0 0.0
    %5523 = vmatpush2.msra.mxu0 0.0
    %5524 = vmatprep.subr.mxu0 0.0
    %5525 = vmatpush2.msra.mxu0 0.0
    %5526 = vmatprep.subr.mxu0 0.0
    %5527 = vmatpush2.msra.mxu0 0.0
    %5528 = vmatprep.subr.mxu0 0.0
    %5529 = vmatpush2.msra.mxu0 0.0
    %5530 = vmatprep.subr.mxu0 0.0
    %5531 = vmatpush2.msra.mxu0 0.0
    %5532 = vmatprep.subr.mxu0 0.0
    %5533 = vmatpush2.msra.mxu0 0.0
    %5534 = vmatprep.subr.mxu0 0.0
    %5535 = vmatpush2.msra.mxu0 0.0
    %5536 = vmatprep.subr.mxu0 0.0
    %5537 = vmatpush2.msra.mxu0 0.0
    %5538 = vmatprep.subr.mxu0 0.0
    %5539 = vmatpush2.msra.mxu0 0.0
    %5540 = vmatprep.subr.mxu0 0.0
    %5541 = vmatpush2.msra.mxu0 0.0
    %5542 = vmatprep.mubr.f32.mxu0 0.0
    %5543 = vmatmul.mubr.f32.gmra.mxu0 %v4965
    %v5544 = vpop.f32.mrf.mxu0
    %v5545 = vadd.f32 %v5160, %v5544
    %v5546 = vpop.f32.mrf.mxu0
    %5547 = vmatprep.mubr.f32.mxu0 0.0
    %5548 = vmatmul.mubr.f32.gmra.mxu0 %v4967
    %v5549 = vpop.f32.mrf.mxu0
    %v5550 = vadd.f32 %v5165, %v5549
    %v5551 = vpop.f32.mrf.mxu0
    %5552 = vmatprep.mubr.f32.mxu0 0.0
    %5553 = vmatmul.mubr.f32.gmra.mxu0 %v4969
    %v5554 = vpop.f32.mrf.mxu0
    %v5555 = vadd.f32 %v5170, %v5554
    %v5556 = vpop.f32.mrf.mxu0
    %5557 = vmatprep.mubr.f32.mxu0 0.0
    %5558 = vmatmul.mubr.f32.gmra.mxu0 %v4971
    %v5559 = vpop.f32.mrf.mxu0
    %v5560 = vadd.f32 %v5175, %v5559
    %v5561 = vpop.f32.mrf.mxu0
    %5562 = vmatprep.mubr.f32.mxu0 0.0
    %5563 = vmatmul.mubr.f32.gmra.mxu0 %v4973
    %v5564 = vpop.f32.mrf.mxu0
    %v5565 = vadd.f32 %v5180, %v5564
    %v5566 = vpop.f32.mrf.mxu0
    %5567 = vmatprep.mubr.f32.mxu0 0.0
    %5568 = vmatmul.mubr.f32.gmra.mxu0 %v4975
    %v5569 = vpop.f32.mrf.mxu0
    %v5570 = vadd.f32 %v5185, %v5569
    %v5571 = vpop.f32.mrf.mxu0
    %5572 = vmatprep.mubr.f32.mxu0 0.0
    %5573 = vmatmul.mubr.f32.gmra.mxu0 %v4977
    %v5574 = vpop.f32.mrf.mxu0
    %v5575 = vadd.f32 %v5190, %v5574
    %v5576 = vpop.f32.mrf.mxu0
    %5577 = vmatprep.mubr.f32.mxu0 0.0
    %5578 = vmatmul.mubr.f32.gmra.mxu0 %v4979
    %v5579 = vpop.f32.mrf.mxu0
    %v5580 = vadd.f32 %v5195, %v5579
    %v5581 = vpop.f32.mrf.mxu0
    %5582 = vmatprep.mubr.f32.mxu0 0.0
    %5583 = vmatmul.mubr.f32.gmra.mxu0 %v4981
    %v5584 = vpop.f32.mrf.mxu0
    %v5585 = vadd.f32 %v5200, %v5584
    %v5586 = vpop.f32.mrf.mxu0
    %5587 = vmatprep.mubr.f32.mxu0 0.0
    %5588 = vmatmul.mubr.f32.gmra.mxu0 %v4983
    %v5589 = vpop.f32.mrf.mxu0
    %v5590 = vadd.f32 %v5205, %v5589
    %v5591 = vpop.f32.mrf.mxu0
    %5592 = vmatprep.mubr.f32.mxu0 0.0
    %5593 = vmatmul.mubr.f32.gmra.mxu0 %v4985
    %v5594 = vpop.f32.mrf.mxu0
    %v5595 = vadd.f32 %v5210, %v5594
    %v5596 = vpop.f32.mrf.mxu0
    %5597 = vmatprep.mubr.f32.mxu0 0.0
    %5598 = vmatmul.mubr.f32.gmra.mxu0 %v4987
    %v5599 = vpop.f32.mrf.mxu0
    %v5600 = vadd.f32 %v5215, %v5599
    %v5601 = vpop.f32.mrf.mxu0
    %5602 = vmatprep.mubr.f32.mxu0 0.0
    %5603 = vmatmul.mubr.f32.gmra.mxu0 %v4989
    %v5604 = vpop.f32.mrf.mxu0
    %v5605 = vadd.f32 %v5220, %v5604
    %v5606 = vpop.f32.mrf.mxu0
    %5607 = vmatprep.mubr.f32.mxu0 0.0
    %5608 = vmatmul.mubr.f32.gmra.mxu0 %v4991
    %v5609 = vpop.f32.mrf.mxu0
    %v5610 = vadd.f32 %v5225, %v5609
    %v5611 = vpop.f32.mrf.mxu0
    %5612 = vmatprep.mubr.f32.mxu0 0.0
    %5613 = vmatmul.mubr.f32.gmra.mxu0 %v4993
    %v5614 = vpop.f32.mrf.mxu0
    %v5615 = vadd.f32 %v5230, %v5614
    %v5616 = vpop.f32.mrf.mxu0
    %5617 = vmatprep.mubr.f32.mxu0 0.0
    %5618 = vmatmul.mubr.f32.gmra.mxu0 %v4995
    %v5619 = vpop.f32.mrf.mxu0
    %v5620 = vadd.f32 %v5235, %v5619
    %v5621 = vpop.f32.mrf.mxu0
    %5622 = vmatprep.mubr.f32.mxu0 0.0
    %5623 = vmatmul.mubr.f32.gmra.mxu0 %v4997
    %v5624 = vpop.f32.mrf.mxu0
    %v5625 = vadd.f32 %v5240, %v5624
    %v5626 = vpop.f32.mrf.mxu0
    %5627 = vmatprep.mubr.f32.mxu0 0.0
    %5628 = vmatmul.mubr.f32.gmra.mxu0 %v4999
    %v5629 = vpop.f32.mrf.mxu0
    %v5630 = vadd.f32 %v5245, %v5629
    %v5631 = vpop.f32.mrf.mxu0
    %5632 = vmatprep.mubr.f32.mxu0 0.0
    %5633 = vmatmul.mubr.f32.gmra.mxu0 %v5001
    %v5634 = vpop.f32.mrf.mxu0
    %v5635 = vadd.f32 %v5250, %v5634
    %v5636 = vpop.f32.mrf.mxu0
    %5637 = vmatprep.mubr.f32.mxu0 0.0
    %5638 = vmatmul.mubr.f32.gmra.mxu0 %v5003
    %v5639 = vpop.f32.mrf.mxu0
    %v5640 = vadd.f32 %v5255, %v5639
    %v5641 = vpop.f32.mrf.mxu0
    %5642 = vmatprep.mubr.f32.mxu0 0.0
    %5643 = vmatmul.mubr.f32.gmra.mxu0 %v5005
    %v5644 = vpop.f32.mrf.mxu0
    %v5645 = vadd.f32 %v5260, %v5644
    %v5646 = vpop.f32.mrf.mxu0
    %5647 = vmatprep.mubr.f32.mxu0 0.0
    %5648 = vmatmul.mubr.f32.gmra.mxu0 %v5007
    %v5649 = vpop.f32.mrf.mxu0
    %v5650 = vadd.f32 %v5265, %v5649
    %v5651 = vpop.f32.mrf.mxu0
    %5652 = vmatprep.mubr.f32.mxu0 0.0
    %5653 = vmatmul.mubr.f32.gmra.mxu0 %v5009
    %v5654 = vpop.f32.mrf.mxu0
    %v5655 = vadd.f32 %v5270, %v5654
    %v5656 = vpop.f32.mrf.mxu0
    %5657 = vmatprep.mubr.f32.mxu0 0.0
    %5658 = vmatmul.mubr.f32.gmra.mxu0 %v5011
    %v5659 = vpop.f32.mrf.mxu0
    %v5660 = vadd.f32 %v5275, %v5659
    %v5661 = vpop.f32.mrf.mxu0
    %5662 = vmatprep.mubr.f32.mxu0 0.0
    %5663 = vmatmul.mubr.f32.gmra.mxu0 %v5013
    %v5664 = vpop.f32.mrf.mxu0
    %v5665 = vadd.f32 %v5280, %v5664
    %v5666 = vpop.f32.mrf.mxu0
    %5667 = vmatprep.mubr.f32.mxu0 0.0
    %5668 = vmatmul.mubr.f32.gmra.mxu0 %v5015
    %v5669 = vpop.f32.mrf.mxu0
    %v5670 = vadd.f32 %v5285, %v5669
    %v5671 = vpop.f32.mrf.mxu0
    %5672 = vmatprep.mubr.f32.mxu0 0.0
    %5673 = vmatmul.mubr.f32.gmra.mxu0 %v5017
    %v5674 = vpop.f32.mrf.mxu0
    %v5675 = vadd.f32 %v5290, %v5674
    %v5676 = vpop.f32.mrf.mxu0
    %5677 = vmatprep.mubr.f32.mxu0 0.0
    %5678 = vmatmul.mubr.f32.gmra.mxu0 %v5019
    %v5679 = vpop.f32.mrf.mxu0
    %v5680 = vadd.f32 %v5295, %v5679
    %v5681 = vpop.f32.mrf.mxu0
    %5682 = vmatprep.mubr.f32.mxu0 0.0
    %5683 = vmatmul.mubr.f32.gmra.mxu0 %v5021
    %v5684 = vpop.f32.mrf.mxu0
    %v5685 = vadd.f32 %v5300, %v5684
    %v5686 = vpop.f32.mrf.mxu0
    %5687 = vmatprep.mubr.f32.mxu0 0.0
    %5688 = vmatmul.mubr.f32.gmra.mxu0 %v5023
    %v5689 = vpop.f32.mrf.mxu0
    %v5690 = vadd.f32 %v5305, %v5689
    %v5691 = vpop.f32.mrf.mxu0
    %5692 = vmatprep.mubr.f32.mxu0 0.0
    %5693 = vmatmul.mubr.f32.gmra.mxu0 %v5025
    %v5694 = vpop.f32.mrf.mxu0
    %v5695 = vadd.f32 %v5310, %v5694
    %v5696 = vpop.f32.mrf.mxu0
    %5697 = vmatprep.mubr.f32.mxu0 0.0
    %5698 = vmatmul.mubr.f32.gmra.mxu0 %v5027
    %v5699 = vpop.f32.mrf.mxu0
    %v5700 = vadd.f32 %v5315, %v5699
    %v5701 = vpop.f32.mrf.mxu0
    %5702 = vmatprep.mubr.f32.mxu0 0.0
    %5703 = vmatmul.mubr.f32.gmra.mxu0 %v5029
    %v5704 = vpop.f32.mrf.mxu0
    %v5705 = vadd.f32 %v5320, %v5704
    %v5706 = vpop.f32.mrf.mxu0
    %5707 = vmatprep.mubr.f32.mxu0 0.0
    %5708 = vmatmul.mubr.f32.gmra.mxu0 %v5031
    %v5709 = vpop.f32.mrf.mxu0
    %v5710 = vadd.f32 %v5325, %v5709
    %v5711 = vpop.f32.mrf.mxu0
    %5712 = vmatprep.mubr.f32.mxu0 0.0
    %5713 = vmatmul.mubr.f32.gmra.mxu0 %v5033
    %v5714 = vpop.f32.mrf.mxu0
    %v5715 = vadd.f32 %v5330, %v5714
    %v5716 = vpop.f32.mrf.mxu0
    %5717 = vmatprep.mubr.f32.mxu0 0.0
    %5718 = vmatmul.mubr.f32.gmra.mxu0 %v5035
    %v5719 = vpop.f32.mrf.mxu0
    %v5720 = vadd.f32 %v5335, %v5719
    %v5721 = vpop.f32.mrf.mxu0
    %5722 = vmatprep.mubr.f32.mxu0 0.0
    %5723 = vmatmul.mubr.f32.gmra.mxu0 %v5037
    %v5724 = vpop.f32.mrf.mxu0
    %v5725 = vadd.f32 %v5340, %v5724
    %v5726 = vpop.f32.mrf.mxu0
    %5727 = vmatprep.mubr.f32.mxu0 0.0
    %5728 = vmatmul.mubr.f32.gmra.mxu0 %v5039
    %v5729 = vpop.f32.mrf.mxu0
    %v5730 = vadd.f32 %v5345, %v5729
    %v5731 = vpop.f32.mrf.mxu0
    %5732 = vmatprep.mubr.f32.mxu0 0.0
    %5733 = vmatmul.mubr.f32.gmra.mxu0 %v5041
    %v5734 = vpop.f32.mrf.mxu0
    %v5735 = vadd.f32 %v5350, %v5734
    %v5736 = vpop.f32.mrf.mxu0
    %5737 = vmatprep.mubr.f32.mxu0 0.0
    %5738 = vmatmul.mubr.f32.gmra.mxu0 %v5043
    %v5739 = vpop.f32.mrf.mxu0
    %v5740 = vadd.f32 %v5355, %v5739
    %v5741 = vpop.f32.mrf.mxu0
    %5742 = vmatprep.mubr.f32.mxu0 0.0
    %5743 = vmatmul.mubr.f32.gmra.mxu0 %v5045
    %v5744 = vpop.f32.mrf.mxu0
    %v5745 = vadd.f32 %v5360, %v5744
    %v5746 = vpop.f32.mrf.mxu0
    %5747 = vmatprep.mubr.f32.mxu0 0.0
    %5748 = vmatmul.mubr.f32.gmra.mxu0 %v5047
    %v5749 = vpop.f32.mrf.mxu0
    %v5750 = vadd.f32 %v5365, %v5749
    %v5751 = vpop.f32.mrf.mxu0
    %5752 = vmatprep.mubr.f32.mxu0 0.0
    %5753 = vmatmul.mubr.f32.gmra.mxu0 %v5049
    %v5754 = vpop.f32.mrf.mxu0
    %v5755 = vadd.f32 %v5370, %v5754
    %v5756 = vpop.f32.mrf.mxu0
    %5757 = vmatprep.mubr.f32.mxu0 0.0
    %5758 = vmatmul.mubr.f32.gmra.mxu0 %v5051
    %v5759 = vpop.f32.mrf.mxu0
    %v5760 = vadd.f32 %v5375, %v5759
    %v5761 = vpop.f32.mrf.mxu0
    %5762 = vmatprep.mubr.f32.mxu0 0.0
    %5763 = vmatmul.mubr.f32.gmra.mxu0 %v5053
    %v5764 = vpop.f32.mrf.mxu0
    %v5765 = vadd.f32 %v5380, %v5764
    %v5766 = vpop.f32.mrf.mxu0
    %5767 = vmatprep.mubr.f32.mxu0 0.0
    %5768 = vmatmul.mubr.f32.gmra.mxu0 %v5055
    %v5769 = vpop.f32.mrf.mxu0
    %v5770 = vadd.f32 %v5385, %v5769
    %v5771 = vpop.f32.mrf.mxu0
    %5772 = vmatprep.mubr.f32.mxu0 0.0
    %5773 = vmatmul.mubr.f32.gmra.mxu0 %v5057
    %v5774 = vpop.f32.mrf.mxu0
    %v5775 = vadd.f32 %v5390, %v5774
    %v5776 = vpop.f32.mrf.mxu0
    %5777 = vmatprep.mubr.f32.mxu0 0.0
    %5778 = vmatmul.mubr.f32.gmra.mxu0 %v5059
    %v5779 = vpop.f32.mrf.mxu0
    %v5780 = vadd.f32 %v5395, %v5779
    %v5781 = vpop.f32.mrf.mxu0
    %5782 = vmatprep.mubr.f32.mxu0 0.0
    %5783 = vmatmul.mubr.f32.gmra.mxu0 %v5061
    %v5784 = vpop.f32.mrf.mxu0
    %v5785 = vadd.f32 %v5400, %v5784
    %v5786 = vpop.f32.mrf.mxu0
    %5787 = vmatprep.mubr.f32.mxu0 0.0
    %5788 = vmatmul.mubr.f32.gmra.mxu0 %v5063
    %v5789 = vpop.f32.mrf.mxu0
    %v5790 = vadd.f32 %v5405, %v5789
    %v5791 = vpop.f32.mrf.mxu0
    %5792 = vmatprep.mubr.f32.mxu0 0.0
    %5793 = vmatmul.mubr.f32.gmra.mxu0 %v5065
    %v5794 = vpop.f32.mrf.mxu0
    %v5795 = vadd.f32 %v5410, %v5794
    %v5796 = vpop.f32.mrf.mxu0
    %5797 = vmatprep.mubr.f32.mxu0 0.0
    %5798 = vmatmul.mubr.f32.gmra.mxu0 %v5067
    %v5799 = vpop.f32.mrf.mxu0
    %v5800 = vadd.f32 %v5415, %v5799
    %v5801 = vpop.f32.mrf.mxu0
    %5802 = vmatprep.mubr.f32.mxu0 0.0
    %5803 = vmatmul.mubr.f32.gmra.mxu0 %v5069
    %v5804 = vpop.f32.mrf.mxu0
    %v5805 = vadd.f32 %v5420, %v5804
    %v5806 = vpop.f32.mrf.mxu0
    %5807 = vmatprep.mubr.f32.mxu0 0.0
    %5808 = vmatmul.mubr.f32.gmra.mxu0 %v5071
    %v5809 = vpop.f32.mrf.mxu0
    %v5810 = vadd.f32 %v5425, %v5809
    %v5811 = vpop.f32.mrf.mxu0
    %5812 = vmatprep.mubr.f32.mxu0 0.0
    %5813 = vmatmul.mubr.f32.gmra.mxu0 %v5073
    %v5814 = vpop.f32.mrf.mxu0
    %v5815 = vadd.f32 %v5430, %v5814
    %v5816 = vpop.f32.mrf.mxu0
    %5817 = vmatprep.mubr.f32.mxu0 0.0
    %5818 = vmatmul.mubr.f32.gmra.mxu0 %v5075
    %v5819 = vpop.f32.mrf.mxu0
    %v5820 = vadd.f32 %v5435, %v5819
    %v5821 = vpop.f32.mrf.mxu0
    %5822 = vmatprep.mubr.f32.mxu0 0.0
    %5823 = vmatmul.mubr.f32.gmra.mxu0 %v5077
    %v5824 = vpop.f32.mrf.mxu0
    %v5825 = vadd.f32 %v5440, %v5824
    %v5826 = vpop.f32.mrf.mxu0
    %5827 = vmatprep.mubr.f32.mxu0 0.0
    %5828 = vmatmul.mubr.f32.gmra.mxu0 %v5079
    %v5829 = vpop.f32.mrf.mxu0
    %v5830 = vadd.f32 %v5445, %v5829
    %v5831 = vpop.f32.mrf.mxu0
    %5832 = vmatprep.mubr.f32.mxu0 0.0
    %5833 = vmatmul.mubr.f32.gmra.mxu0 %v5081
    %v5834 = vpop.f32.mrf.mxu0
    %v5835 = vadd.f32 %v5450, %v5834
    %v5836 = vpop.f32.mrf.mxu0
    %5837 = vmatprep.mubr.f32.mxu0 0.0
    %5838 = vmatmul.mubr.f32.gmra.mxu0 %v5083
    %v5839 = vpop.f32.mrf.mxu0
    %v5840 = vadd.f32 %v5455, %v5839
    %v5841 = vpop.f32.mrf.mxu0
    %5842 = vmatprep.mubr.f32.mxu0 0.0
    %5843 = vmatmul.mubr.f32.gmra.mxu0 %v5085
    %v5844 = vpop.f32.mrf.mxu0
    %v5845 = vadd.f32 %v5460, %v5844
    %v5846 = vpop.f32.mrf.mxu0
    %5847 = vmatprep.mubr.f32.mxu0 0.0
    %5848 = vmatmul.mubr.f32.gmra.mxu0 %v5087
    %v5849 = vpop.f32.mrf.mxu0
    %v5850 = vadd.f32 %v5465, %v5849
    %v5851 = vpop.f32.mrf.mxu0
    %5852 = vmatprep.mubr.f32.mxu0 0.0
    %5853 = vmatmul.mubr.f32.gmra.mxu0 %v5089
    %v5854 = vpop.f32.mrf.mxu0
    %v5855 = vadd.f32 %v5470, %v5854
    %v5856 = vpop.f32.mrf.mxu0
    %5857 = vmatprep.mubr.f32.mxu0 0.0
    %5858 = vmatmul.mubr.f32.gmra.mxu0 %v5091
    %v5859 = vpop.f32.mrf.mxu0
    %v5860 = vadd.f32 %v5475, %v5859
    %v5861 = vpop.f32.mrf.mxu0
    %5862 = vdwg.mxu0
    %v5863 = vmax.f32 %v5545, 0.0
    %v5864 = vmax.f32 %v5550, 0.0
    %v5865 = vmax.f32 %v5555, 0.0
    %v5866 = vmax.f32 %v5560, 0.0
    %v5867 = vmax.f32 %v5565, 0.0
    %v5868 = vmax.f32 %v5570, 0.0
    %v5869 = vmax.f32 %v5575, 0.0
    %v5870 = vmax.f32 %v5580, 0.0
    %v5871 = vmax.f32 %v5585, 0.0
    %v5872 = vmax.f32 %v5590, 0.0
    %v5873 = vmax.f32 %v5595, 0.0
    %v5874 = vmax.f32 %v5600, 0.0
    %v5875 = vmax.f32 %v5605, 0.0
    %v5876 = vmax.f32 %v5610, 0.0
    %v5877 = vmax.f32 %v5615, 0.0
    %v5878 = vmax.f32 %v5620, 0.0
    %v5879 = vmax.f32 %v5625, 0.0
    %v5880 = vmax.f32 %v5630, 0.0
    %v5881 = vmax.f32 %v5635, 0.0
    %v5882 = vmax.f32 %v5640, 0.0
    %v5883 = vmax.f32 %v5645, 0.0
    %v5884 = vmax.f32 %v5650, 0.0
    %v5885 = vmax.f32 %v5655, 0.0
    %v5886 = vmax.f32 %v5660, 0.0
    %v5887 = vmax.f32 %v5665, 0.0
    %v5888 = vmax.f32 %v5670, 0.0
    %v5889 = vmax.f32 %v5675, 0.0
    %v5890 = vmax.f32 %v5680, 0.0
    %v5891 = vmax.f32 %v5685, 0.0
    %v5892 = vmax.f32 %v5690, 0.0
    %v5893 = vmax.f32 %v5695, 0.0
    %v5894 = vmax.f32 %v5700, 0.0
    %v5895 = vmax.f32 %v5705, 0.0
    %v5896 = vmax.f32 %v5710, 0.0
    %v5897 = vmax.f32 %v5715, 0.0
    %v5898 = vmax.f32 %v5720, 0.0
    %v5899 = vmax.f32 %v5725, 0.0
    %v5900 = vmax.f32 %v5730, 0.0
    %v5901 = vmax.f32 %v5735, 0.0
    %v5902 = vmax.f32 %v5740, 0.0
    %v5903 = vmax.f32 %v5745, 0.0
    %v5904 = vmax.f32 %v5750, 0.0
    %v5905 = vmax.f32 %v5755, 0.0
    %v5906 = vmax.f32 %v5760, 0.0
    %v5907 = vmax.f32 %v5765, 0.0
    %v5908 = vmax.f32 %v5770, 0.0
    %v5909 = vmax.f32 %v5775, 0.0
    %v5910 = vmax.f32 %v5780, 0.0
    %v5911 = vmax.f32 %v5785, 0.0
    %v5912 = vmax.f32 %v5790, 0.0
    %v5913 = vmax.f32 %v5795, 0.0
    %v5914 = vmax.f32 %v5800, 0.0
    %v5915 = vmax.f32 %v5805, 0.0
    %v5916 = vmax.f32 %v5810, 0.0
    %v5917 = vmax.f32 %v5815, 0.0
    %v5918 = vmax.f32 %v5820, 0.0
    %v5919 = vmax.f32 %v5825, 0.0
    %v5920 = vmax.f32 %v5830, 0.0
    %v5921 = vmax.f32 %v5835, 0.0
    %v5922 = vmax.f32 %v5840, 0.0
    %v5923 = vmax.f32 %v5845, 0.0
    %v5924 = vmax.f32 %v5850, 0.0
    %v5925 = vmax.f32 %v5855, 0.0
    %v5926 = vmax.f32 %v5860, 0.0
    %v5927 = vsel %vm4600, %v5863, 0.0
    %v5928 = vsel %vm4600, %v5864, 0.0
    %v5929 = vadd.f32 %v5927, %v5928
    %v5930 = vsel %vm4600, %v5865, 0.0
    %v5931 = vadd.f32 %v5929, %v5930
    %v5932 = vsel %vm4600, %v5866, 0.0
    %v5933 = vadd.f32 %v5931, %v5932
    %v5934 = vsel %vm4600, %v5867, 0.0
    %v5935 = vadd.f32 %v5933, %v5934
    %v5936 = vsel %vm4600, %v5868, 0.0
    %v5937 = vadd.f32 %v5935, %v5936
    %v5938 = vsel %vm4600, %v5869, 0.0
    %v5939 = vadd.f32 %v5937, %v5938
    %v5940 = vsel %vm4600, %v5870, 0.0
    %v5941 = vadd.f32 %v5939, %v5940
    %v5942 = vsel %vm4600, %v5871, 0.0
    %v5943 = vadd.f32 %v5941, %v5942
    %v5944 = vsel %vm4600, %v5872, 0.0
    %v5945 = vadd.f32 %v5943, %v5944
    %v5946 = vsel %vm4600, %v5873, 0.0
    %v5947 = vadd.f32 %v5945, %v5946
    %v5948 = vsel %vm4600, %v5874, 0.0
    %v5949 = vadd.f32 %v5947, %v5948
    %v5950 = vsel %vm4600, %v5875, 0.0
    %v5951 = vadd.f32 %v5949, %v5950
    %v5952 = vsel %vm4600, %v5876, 0.0
    %v5953 = vadd.f32 %v5951, %v5952
    %v5954 = vsel %vm4600, %v5877, 0.0
    %v5955 = vadd.f32 %v5953, %v5954
    %v5956 = vsel %vm4600, %v5878, 0.0
    %v5957 = vadd.f32 %v5955, %v5956
    %v5958 = vsel %vm4600, %v5879, 0.0
    %v5959 = vadd.f32 %v5957, %v5958
    %v5960 = vsel %vm4600, %v5880, 0.0
    %v5961 = vadd.f32 %v5959, %v5960
    %v5962 = vsel %vm4600, %v5881, 0.0
    %v5963 = vadd.f32 %v5961, %v5962
    %v5964 = vsel %vm4600, %v5882, 0.0
    %v5965 = vadd.f32 %v5963, %v5964
    %v5966 = vsel %vm4600, %v5883, 0.0
    %v5967 = vadd.f32 %v5965, %v5966
    %v5968 = vsel %vm4600, %v5884, 0.0
    %v5969 = vadd.f32 %v5967, %v5968
    %v5970 = vsel %vm4600, %v5885, 0.0
    %v5971 = vadd.f32 %v5969, %v5970
    %v5972 = vsel %vm4600, %v5886, 0.0
    %v5973 = vadd.f32 %v5971, %v5972
    %v5974 = vsel %vm4600, %v5887, 0.0
    %v5975 = vadd.f32 %v5973, %v5974
    %v5976 = vsel %vm4600, %v5888, 0.0
    %v5977 = vadd.f32 %v5975, %v5976
    %v5978 = vsel %vm4600, %v5889, 0.0
    %v5979 = vadd.f32 %v5977, %v5978
    %v5980 = vsel %vm4600, %v5890, 0.0
    %v5981 = vadd.f32 %v5979, %v5980
    %v5982 = vsel %vm4600, %v5891, 0.0
    %v5983 = vadd.f32 %v5981, %v5982
    %v5984 = vsel %vm4600, %v5892, 0.0
    %v5985 = vadd.f32 %v5983, %v5984
    %v5986 = vsel %vm4600, %v5893, 0.0
    %v5987 = vadd.f32 %v5985, %v5986
    %v5988 = vsel %vm4600, %v5894, 0.0
    %v5989 = vadd.f32 %v5987, %v5988
    %v5990 = vrot.slane %v5989, 4
    %v5991 = vadd.f32 %v5989, %v5990
    %v5992 = vrot.slane %v5991, 2
    %v5993 = vadd.f32 %v5991, %v5992
    %v5994 = vrot.slane %v5993, 1
    %v5995 = vadd.f32 %v5993, %v5994
    %v5996 = vsel %vm4600, %v5895, 0.0
    %v5997 = vsel %vm4600, %v5896, 0.0
    %v5998 = vadd.f32 %v5996, %v5997
    %v5999 = vsel %vm4600, %v5897, 0.0
    %v6000 = vadd.f32 %v5998, %v5999
    %v6001 = vsel %vm4600, %v5898, 0.0
    %v6002 = vadd.f32 %v6000, %v6001
    %v6003 = vsel %vm4600, %v5899, 0.0
    %v6004 = vadd.f32 %v6002, %v6003
    %v6005 = vsel %vm4600, %v5900, 0.0
    %v6006 = vadd.f32 %v6004, %v6005
    %v6007 = vsel %vm4600, %v5901, 0.0
    %v6008 = vadd.f32 %v6006, %v6007
    %v6009 = vsel %vm4600, %v5902, 0.0
    %v6010 = vadd.f32 %v6008, %v6009
    %v6011 = vsel %vm4600, %v5903, 0.0
    %v6012 = vadd.f32 %v6010, %v6011
    %v6013 = vsel %vm4600, %v5904, 0.0
    %v6014 = vadd.f32 %v6012, %v6013
    %v6015 = vsel %vm4600, %v5905, 0.0
    %v6016 = vadd.f32 %v6014, %v6015
    %v6017 = vsel %vm4600, %v5906, 0.0
    %v6018 = vadd.f32 %v6016, %v6017
    %v6019 = vsel %vm4600, %v5907, 0.0
    %v6020 = vadd.f32 %v6018, %v6019
    %v6021 = vsel %vm4600, %v5908, 0.0
    %v6022 = vadd.f32 %v6020, %v6021
    %v6023 = vsel %vm4600, %v5909, 0.0
    %v6024 = vadd.f32 %v6022, %v6023
    %v6025 = vsel %vm4600, %v5910, 0.0
    %v6026 = vadd.f32 %v6024, %v6025
    %v6027 = vsel %vm4600, %v5911, 0.0
    %v6028 = vadd.f32 %v6026, %v6027
    %v6029 = vsel %vm4600, %v5912, 0.0
    %v6030 = vadd.f32 %v6028, %v6029
    %v6031 = vsel %vm4600, %v5913, 0.0
    %v6032 = vadd.f32 %v6030, %v6031
    %v6033 = vsel %vm4600, %v5914, 0.0
    %v6034 = vadd.f32 %v6032, %v6033
    %v6035 = vsel %vm4600, %v5915, 0.0
    %v6036 = vadd.f32 %v6034, %v6035
    %v6037 = vsel %vm4600, %v5916, 0.0
    %v6038 = vadd.f32 %v6036, %v6037
    %v6039 = vsel %vm4600, %v5917, 0.0
    %v6040 = vadd.f32 %v6038, %v6039
    %v6041 = vsel %vm4600, %v5918, 0.0
    %v6042 = vadd.f32 %v6040, %v6041
    %v6043 = vsel %vm4600, %v5919, 0.0
    %v6044 = vadd.f32 %v6042, %v6043
    %v6045 = vsel %vm4600, %v5920, 0.0
    %v6046 = vadd.f32 %v6044, %v6045
    %v6047 = vsel %vm4600, %v5921, 0.0
    %v6048 = vadd.f32 %v6046, %v6047
    %v6049 = vsel %vm4600, %v5922, 0.0
    %v6050 = vadd.f32 %v6048, %v6049
    %v6051 = vsel %vm4600, %v5923, 0.0
    %v6052 = vadd.f32 %v6050, %v6051
    %v6053 = vsel %vm4600, %v5924, 0.0
    %v6054 = vadd.f32 %v6052, %v6053
    %v6055 = vsel %vm4600, %v5925, 0.0
    %v6056 = vadd.f32 %v6054, %v6055
    %v6057 = vsel %vm4600, %v5926, 0.0
    %v6058 = vadd.f32 %v6056, %v6057
    %v6059 = vrot.slane %v6058, 4
    %v6060 = vadd.f32 %v6058, %v6059
    %v6061 = vrot.slane %v6060, 2
    %v6062 = vadd.f32 %v6060, %v6061
    %v6063 = vrot.slane %v6062, 1
    %v6064 = vadd.f32 %v6062, %v6063
    %v6065 = vmul.f32 %v5995, 0.00390625
    %v6066 = vmul.f32 %v6064, 0.00390625
    %v6067 = vld [vmem:[%s4] sm:$0xff]
    %v6068 = vld [vmem:[%s4 + $0x8] sm:$0xff]
    %v6069 = vld [vmem:[%s4 + $0x10] sm:$0xff]
    %v6070 = vld [vmem:[%s4 + $0x18] sm:$0xff]
    %v6071 = vld [vmem:[%s4 + $0x20] sm:$0xff]
    %v6072 = vld [vmem:[%s4 + $0x28] sm:$0xff]
    %v6073 = vld [vmem:[%s4 + $0x30] sm:$0xff]
    %v6074 = vld [vmem:[%s4 + $0x38] sm:$0xff]
    %v6075 = vld [vmem:[%s5] sm:$0x1]
    %v6077 = vlaneseq
    %v6078 = vshrl.u32 %v6077, 7
    %v6079 = vsub.s32 0, %v6078
    %v6080 = vrot.slane %v6075, %v6079
    %vm6084 = vcmask 1041409
    %v6085 = vsel %vm6084, %v6066, %v6065
    %v6086 = vsel %vm4600, %v6085, 0
    %6088 = vmatprep.subr.mxu0 0.0
    %6089 = vmatpush1.msra.mxu0 0.0
    %6090 = vmatprep.subr.mxu0 0.0
    %6091 = vmatpush1.msra.mxu0 0.0
    %6092 = vmatprep.subr.mxu0 0.0
    %6093 = vmatpush1.msra.mxu0 0.0
    %6094 = vmatprep.subr.mxu0 0.0
    %6095 = vmatpush1.msra.mxu0 0.0
    %6096 = vmatprep.subr.mxu0 0.0
    %6097 = vmatpush1.msra.mxu0 0.0
    %6098 = vmatprep.subr.mxu0 0.0
    %6099 = vmatpush1.msra.mxu0 0.0
    %6100 = vmatprep.subr.mxu0 0.0
    %6101 = vmatpush1.msra.mxu0 0.0
    %6102 = vmatprep.subr.mxu0 0.0
    %6103 = vmatpush1.msra.mxu0 0.0
    %6104 = vmatprep.subr.mxu0 0.0
    %6105 = vmatpush1.msra.mxu0 %v6074
    %6106 = vmatprep.subr.mxu0 0.0
    %6107 = vmatpush1.msra.mxu0 %v6073
    %6108 = vmatprep.subr.mxu0 0.0
    %6109 = vmatpush1.msra.mxu0 %v6072
    %6110 = vmatprep.subr.mxu0 0.0
    %6111 = vmatpush1.msra.mxu0 %v6071
    %6112 = vmatprep.subr.mxu0 0.0
    %6113 = vmatpush1.msra.mxu0 %v6070
    %6114 = vmatprep.subr.mxu0 0.0
    %6115 = vmatpush1.msra.mxu0 %v6069
    %6116 = vmatprep.subr.mxu0 0.0
    %6117 = vmatpush1.msra.mxu0 %v6068
    %6118 = vmatprep.subr.mxu0 0.0
    %6119 = vmatpush1.msra.mxu0 %v6067
    %6120 = vmatprep.subr.mxu0 0.0
    %6121 = vmatpush2.msra.mxu0 0.0
    %6122 = vmatprep.subr.mxu0 0.0
    %6123 = vmatpush2.msra.mxu0 0.0
    %6124 = vmatprep.subr.mxu0 0.0
    %6125 = vmatpush2.msra.mxu0 0.0
    %6126 = vmatprep.subr.mxu0 0.0
    %6127 = vmatpush2.msra.mxu0 0.0
    %6128 = vmatprep.subr.mxu0 0.0
    %6129 = vmatpush2.msra.mxu0 0.0
    %6130 = vmatprep.subr.mxu0 0.0
    %6131 = vmatpush2.msra.mxu0 0.0
    %6132 = vmatprep.subr.mxu0 0.0
    %6133 = vmatpush2.msra.mxu0 0.0
    %6134 = vmatprep.subr.mxu0 0.0
    %6135 = vmatpush2.msra.mxu0 0.0
    %6136 = vmatprep.subr.mxu0 0.0
    %6137 = vmatpush2.msra.mxu0 0.0
    %6138 = vmatprep.subr.mxu0 0.0
    %6139 = vmatpush2.msra.mxu0 0.0
    %6140 = vmatprep.subr.mxu0 0.0
    %6141 = vmatpush2.msra.mxu0 0.0
    %6142 = vmatprep.subr.mxu0 0.0
    %6143 = vmatpush2.msra.mxu0 0.0
    %6144 = vmatprep.subr.mxu0 0.0
    %6145 = vmatpush2.msra.mxu0 0.0
    %6146 = vmatprep.subr.mxu0 0.0
    %6147 = vmatpush2.msra.mxu0 0.0
    %6148 = vmatprep.subr.mxu0 0.0
    %6149 = vmatpush2.msra.mxu0 0.0
    %6150 = vmatprep.subr.mxu0 0.0
    %6151 = vmatpush2.msra.mxu0 0.0
    %6152 = vmatprep.mubr.f32.mxu0 0.0
    %6153 = vmatmul.mubr.f32.gmra.mxu0 %v6086
    %v6154 = vpop.f32.mrf.mxu0
    %v6155 = vadd.f32 %v6080, %v6154
    %v6156 = vpop.f32.mrf.mxu0
    %6157 = vdwg.mxu0
    %6158 = vst [vmem:[#allocation2] sm:$0x3] %v6155
    // Predicated region
    $region26: #{cnn_forward.1} parent=1 // pred_check
      _
    $region27: #{cnn_forward.1} parent=1 // pred_check_branch
      %6160 = sbr.rel (0) target = $region29
    $region28: #{cnn_forward.1} parent=1 // pred_region
      %s6162 = ssub.s32 32, 32
      %6163 = vsyncadd [#allocation3], %s6162
      %s6165 = sshll.u32 [#allocation2], 4
      %s6166 = int_to_ptr.vmem [resolvable:$true] %s6165
      %6168 = dma.vmem_to_hbm [thread:$0]  %s6166, 32, %s6, [#allocation3]
    $region29: #{cnn_forward.1} parent=1 // pred_fallthru
      _
    // Predicated region
    $region30: #{cnn_forward.1} parent=1 // pred_check
      _
    $region31: #{cnn_forward.1} parent=1 // pred_check_branch
      %6170 = sbr.rel (0) target = $region33
    $region32: #{cnn_forward.1} parent=1 // pred_region
      %6171 = dma.done [#allocation3], 32
    $region33: #{cnn_forward.1} parent=1 // pred_fallthru
      _
    %6172 = vsyncpa [#allocation3], 1

</llo_original>
